<compile_context>
chip_gen: v6e
topology: v6e:2x2x1
jax: 0.10.0
libtpu: 0.0.40
codegen_flags: <defaults>
</compile_context>

<pallas_src>
import jax
import jax.numpy as jnp
from jax.experimental import pallas as pl
from jax.experimental.pallas import tpu as pltpu


def _round_up(x, m):
    return ((x + m - 1) // m) * m


def _make_fused_kernel(H, W, Cin, Cout, CP, stack_num):
    Ho, Wo = H // 2, W // 2
    M = Ho * Wo

    def kernel(*refs):
        x_ref = refs[0]                         # (H, W, Cin)        f32
        o_ref = refs[1 + 2 * stack_num]         # (M, CP)            f32
        pad_ref = refs[2 + 2 * stack_num]       # (Ho+2, Wo+2, CP)   bf16
        col_ref = refs[3 + 2 * stack_num]       # (Ho, Wo, 9*CP)     bf16
        skip_ref = refs[4 + 2 * stack_num]      # (M, CP)            f32

        # ---- 2x2 stride-2 max pool, entirely in VMEM (f32 on the VPU) -------
        p00 = x_ref[pl.ds(0, Ho, 2), pl.ds(0, Wo, 2), :]
        p01 = x_ref[pl.ds(0, Ho, 2), pl.ds(1, Wo, 2), :]
        p10 = x_ref[pl.ds(1, Ho, 2), pl.ds(0, Wo, 2), :]
        p11 = x_ref[pl.ds(1, Ho, 2), pl.ds(1, Wo, 2), :]
        pooled = jnp.maximum(jnp.maximum(p00, p01),
                             jnp.maximum(p10, p11))          # (Ho, Wo, Cin) f32

        # ---- residual skip: channel-zero-pad to CP in registers, stash it ---
        pooled2d = pooled.reshape(M, Cin)
        if CP > Cin:
            skip = jnp.concatenate(
                [pooled2d, jnp.zeros((M, CP - Cin), jnp.float32)], axis=-1)
        else:
            skip = pooled2d
        skip_ref[...] = skip        # one lane-dense f32 store; reloaded at the end

        # ---- zero ONLY the 1-pixel halo of the padded conv-input buffer -----
        # (the interior, all CP lanes, is fully rewritten by every conv below)
        zrow = jnp.zeros((1, Wo + 2, CP), jnp.bfloat16)
        pad_ref[0:1, :, :] = zrow
        pad_ref[Ho + 1:Ho + 2, :, :] = zrow
        zcol = jnp.zeros((Ho + 2, 1, CP), jnp.bfloat16)
        pad_ref[:, 0:1, :] = zcol
        pad_ref[:, Wo + 1:Wo + 2, :] = zcol

        # ---- conv stack: 3x3 SAME conv + bias + ReLU, one im2col dot each ---
        def conv3x3_relu(inp_bf16, w_ref, b_ref):
            # inp_bf16: (Ho, Wo, CP) bf16, channels beyond the real cin are 0.
            pad_ref[1:Ho + 1, 1:Wo + 1, :] = inp_bf16        # lane-dense write
            for t in range(9):                               # 9 lane-aligned copies
                dy, dx = t // 3, t % 3
                col_ref[:, :, t * CP:(t + 1) * CP] = (
                    pad_ref[dy:dy + Ho, dx:dx + Wo, :])
            im2col = col_ref[...].reshape(M, 9 * CP)         # bf16, no astype
            acc = jnp.dot(im2col, w_ref[...],
                          preferred_element_type=jnp.float32)   # (M, CP) f32
            return jnp.maximum(acc + b_ref[...], 0.0)           # f32

        # conv-0 input: pooled, already channel-padded to CP (reuse `skip`)
        y_in = skip.astype(jnp.bfloat16).reshape(Ho, Wo, CP)
        y = None
        for s in range(stack_num):
            w_ref, b_ref = refs[1 + 2 * s], refs[2 + 2 * s]
            y = conv3x3_relu(y_in, w_ref, b_ref)                 # (M, CP) f32
            if s + 1 < stack_num:
                # columns >= Cout are exactly 0 (zero weight cols + zero bias,
                # ReLU(0)=0) so y is already correctly padded for the next conv.
                y_in = y.astype(jnp.bfloat16).reshape(Ho, Wo, CP)

        # ---- residual add (channel-zero-padded pooled input) + final ReLU ---
        o_ref[...] = jnp.maximum(y + skip_ref[...], 0.0).astype(o_ref.dtype)

    return kernel


def unet_left_with_res_forward(x_nchw, params):
    """UNETLeftWithRes forward.

    x_nchw : (N, channel_in, H, W) float32 (NCHW, like the torch module).
    params : list of stack_num (w, b) pairs, w: (3,3,conv_in,channel_out) HWIO,
             b: (channel_out,).
    returns: (N, channel_out, H//2, W//2) float32.
    """
    N, Cin, H, W = x_nchw.shape
    Cout = params[0][0].shape[-1]
    stack_num = len(params)
    Ho, Wo = H // 2, W // 2
    M = Ho * Wo
    CP = _round_up(max(Cin, Cout), 128)         # lane-aligned channel block

    # Single boundary relayout NCHW -> NHWC (channels on the lane dim).
    # TODO(synk): fold away by keeping the surrounding model NHWC end-to-end.
    x = jnp.transpose(x_nchw, (0, 2, 3, 1))

    operands = [x]
    in_specs = [pl.BlockSpec((None, H, W, Cin), lambda n: (n, 0, 0, 0))]
    for (w, b) in params:
        ci = w.shape[2]
        # im2col weight layout, channel blocks zero-padded to CP on both the
        # input (rows) and output (cols) side -> lane-aligned K and N on the MXU.
        w_p = jnp.zeros((3, 3, CP, CP), jnp.bfloat16)
        w_p = w_p.at[:, :, :ci, :Cout].set(w.astype(jnp.bfloat16))
        w_p = w_p.reshape(9 * CP, CP)
        b_p = jnp.zeros((1, CP), jnp.float32)
        b_p = b_p.at[:, :Cout].set(b.astype(jnp.float32).reshape(1, Cout))
        operands.append(w_p)
        operands.append(b_p)
        in_specs.append(pl.BlockSpec((9 * CP, CP), lambda n: (0, 0)))
        in_specs.append(pl.BlockSpec((1, CP), lambda n: (0, 0)))

    out = pl.pallas_call(
        _make_fused_kernel(H, W, Cin, Cout, CP, stack_num),
        out_shape=jax.ShapeDtypeStruct((N, M, CP), jnp.float32),
        grid=(N,),
        in_specs=in_specs,
        out_specs=pl.BlockSpec((None, M, CP), lambda n: (n, 0, 0)),
        scratch_shapes=[
            pltpu.VMEM((Ho + 2, Wo + 2, CP), jnp.bfloat16),  # zero-halo conv input
            pltpu.VMEM((Ho, Wo, 9 * CP), jnp.bfloat16),      # lane-aligned im2col
            pltpu.VMEM((M, CP), jnp.float32),                # residual skip stash
        ],
        compiler_params=pltpu.CompilerParams(
            dimension_semantics=("parallel",),   # batch axis -> both TCs on v7x
            vmem_limit_bytes=48 * 1024 * 1024),  # generous; actual use ~1 MiB
    )(*operands)

    out = out[:, :, :Cout].reshape(N, Ho, Wo, Cout)
    return jnp.transpose(out, (0, 3, 1, 2))      # NHWC -> NCHW (tiny)


# ----------------------- params & pure-JAX reference ------------------------

def init_params(key, channel_in, channel_out, stack_num=2):
    """Res_CONV_stack weights: stack_num 3x3 convs (first maps the pooled
    input's channels -> channel_out, the rest channel_out -> channel_out)."""
    params = []
    cin = channel_in
    for _ in range(stack_num):
        key, kw, kb = jax.random.split(key, 3)
        w = jax.random.normal(kw, (3, 3, cin, channel_out), jnp.float32)
        w = w / jnp.sqrt(float(9 * cin))
        b = 0.01 * jax.random.normal(kb, (channel_out,), jnp.float32)
        params.append((w, b))
        cin = channel_out
    return params


def reference_forward(x_nchw, params):
    """Pure-JAX (XLA) reference of the same forward, all in f32."""
    cout = params[0][0].shape[-1]
    x = jnp.transpose(x_nchw, (0, 2, 3, 1))                       # NHWC
    pooled = jax.lax.reduce_window(x, -jnp.inf, jax.lax.max,
                                   (1, 2, 2, 1), (1, 2, 2, 1), "VALID")
    skip = jnp.pad(pooled, ((0, 0), (0, 0), (0, 0),
                            (0, cout - pooled.shape[-1])))
    y = pooled
    for w, b in params:
        y = jax.lax.conv_general_dilated(
            y, w, window_strides=(1, 1), padding="SAME",
            dimension_numbers=("NHWC", "HWIO", "NHWC"))
        y = jnp.maximum(y + b.reshape(1, 1, 1, -1), 0.0)
    y = jnp.maximum(y + skip, 0.0)
    return jnp.transpose(y, (0, 3, 1, 2))


# ---------------------------------- main -------------------------------------

if __name__ == "__main__":
    key = jax.random.PRNGKey(0)
    kx, kp = jax.random.split(key)

    channel_in, channel_out, stack_num = 4, 8, 2
    x = jax.random.normal(kx, (2, channel_in, 16, 16), jnp.float32)   # NCHW
    params = init_params(kp, channel_in, channel_out, stack_num)

    run = jax.jit(unet_left_with_res_forward)
    out = jax.block_until_ready(run(x, params))
    assert out.shape == (2, channel_out, 8, 8), out.shape

    ref = jax.block_until_ready(reference_forward(x, params))
    err = float(jnp.max(jnp.abs(out - ref)))
    # bf16 matmul operands with f32 accumulation -> a few 1e-2 of slack.
    assert err < 5e-2, f"max abs error vs reference: {err}"

    print("KERNEL_OK")
</pallas_src>

<mosaic_0001>
module attributes {stable_mosaic.version = 11 : i64} {
  func.func @kernel(%arg0: i32, %arg1: memref<1x16x16x4xf32, #tpu.memory_space<vmem>>, %arg2: memref<1152x128xbf16, #tpu.memory_space<vmem>>, %arg3: memref<1x128xf32, #tpu.memory_space<vmem>>, %arg4: memref<1152x128xbf16, #tpu.memory_space<vmem>>, %arg5: memref<1x128xf32, #tpu.memory_space<vmem>>, %arg6: memref<1x64x128xf32, #tpu.memory_space<vmem>>, %arg7: memref<10x10x128xbf16, #tpu.memory_space<vmem>>, %arg8: memref<8x8x1152xbf16, #tpu.memory_space<vmem>>, %arg9: memref<64x128xf32, #tpu.memory_space<vmem>>) attributes {dimension_semantics = [#tpu.dimension_semantics<parallel>], iteration_bounds = array<i64: 2>, scalar_prefetch = 0 : i64, scratch_operands = 3 : i64, tpu.core_type = #tpu.core_type<tc>, window_params = [{transform_indices = @transform_0, window_bounds = array<i64: 1, 16, 16, 4>}, {pipeline_mode = #tpu.pipeline_mode<synchronous>, transform_indices = @transform_1, window_bounds = array<i64: 1152, 128>}, {pipeline_mode = #tpu.pipeline_mode<synchronous>, transform_indices = @transform_2, window_bounds = array<i64: 1, 128>}, {pipeline_mode = #tpu.pipeline_mode<synchronous>, transform_indices = @transform_3, window_bounds = array<i64: 1152, 128>}, {pipeline_mode = #tpu.pipeline_mode<synchronous>, transform_indices = @transform_4, window_bounds = array<i64: 1, 128>}, {transform_indices = @transform_5, window_bounds = array<i64: 1, 64, 128>}]} {
    %c0 = arith.constant 0 : index
    %c0_0 = arith.constant 0 : index
    %c0_1 = arith.constant 0 : index
    %c0_2 = arith.constant 0 : index
    %0 = tpu.strided_load %arg1[%c0, %c0_0, %c0_1, %c0_2] {strides = array<i32: 1, 2, 2, 1>} : memref<1x16x16x4xf32, #tpu.memory_space<vmem>>, vector<1x8x8x4xf32>
    %1 = vector.shape_cast %0 : vector<1x8x8x4xf32> to vector<8x8x4xf32>
    %c0_3 = arith.constant 0 : index
    %c0_4 = arith.constant 0 : index
    %c1 = arith.constant 1 : index
    %c0_5 = arith.constant 0 : index
    %2 = tpu.strided_load %arg1[%c0_3, %c0_4, %c1, %c0_5] {strides = array<i32: 1, 2, 2, 1>} : memref<1x16x16x4xf32, #tpu.memory_space<vmem>>, vector<1x8x8x4xf32>
    %3 = vector.shape_cast %2 : vector<1x8x8x4xf32> to vector<8x8x4xf32>
    %c0_6 = arith.constant 0 : index
    %c1_7 = arith.constant 1 : index
    %c0_8 = arith.constant 0 : index
    %c0_9 = arith.constant 0 : index
    %4 = tpu.strided_load %arg1[%c0_6, %c1_7, %c0_8, %c0_9] {strides = array<i32: 1, 2, 2, 1>} : memref<1x16x16x4xf32, #tpu.memory_space<vmem>>, vector<1x8x8x4xf32>
    %5 = vector.shape_cast %4 : vector<1x8x8x4xf32> to vector<8x8x4xf32>
    %c0_10 = arith.constant 0 : index
    %c1_11 = arith.constant 1 : index
    %c1_12 = arith.constant 1 : index
    %c0_13 = arith.constant 0 : index
    %6 = tpu.strided_load %arg1[%c0_10, %c1_11, %c1_12, %c0_13] {strides = array<i32: 1, 2, 2, 1>} : memref<1x16x16x4xf32, #tpu.memory_space<vmem>>, vector<1x8x8x4xf32>
    %7 = vector.shape_cast %6 : vector<1x8x8x4xf32> to vector<8x8x4xf32>
    %8 = arith.maximumf %1, %3 : vector<8x8x4xf32>
    %9 = arith.maximumf %5, %7 : vector<8x8x4xf32>
    %10 = arith.maximumf %8, %9 : vector<8x8x4xf32>
    %11 = vector.shape_cast %10 : vector<8x8x4xf32> to vector<64x4xf32>
    %cst = arith.constant 0.000000e+00 : f32
    %12 = vector.broadcast %cst : f32 to vector<64x124xf32>
    %13 = tpu.concatenate %11, %12 in 1 : vector<64x4xf32>, vector<64x124xf32> -> vector<64x128xf32>
    %c0_14 = arith.constant 0 : index
    %c0_15 = arith.constant 0 : index
    %14 = vector.load %arg9[%c0_14, %c0_15] : memref<64x128xf32, #tpu.memory_space<vmem>>, vector<64x128xf32>
    tpu.vector_store %arg9[%c0_14, %c0_15], %13 {strides = array<i32>} : memref<64x128xf32, #tpu.memory_space<vmem>>, vector<64x128xf32>,
    %cst_16 = arith.constant 0.000000e+00 : bf16
    %15 = vector.broadcast %cst_16 : bf16 to vector<1x10x128xbf16>
    %c0_17 = arith.constant 0 : index
    %c0_18 = arith.constant 0 : index
    %c0_19 = arith.constant 0 : index
    %16 = vector.load %arg7[%c0_17, %c0_18, %c0_19] : memref<10x10x128xbf16, #tpu.memory_space<vmem>>, vector<1x10x128xbf16>
    tpu.vector_store %arg7[%c0_17, %c0_18, %c0_19], %15 {strides = array<i32>} : memref<10x10x128xbf16, #tpu.memory_space<vmem>>, vector<1x10x128xbf16>,
    %c9 = arith.constant 9 : index
    %c0_20 = arith.constant 0 : index
    %c0_21 = arith.constant 0 : index
    %17 = vector.load %arg7[%c9, %c0_20, %c0_21] : memref<10x10x128xbf16, #tpu.memory_space<vmem>>, vector<1x10x128xbf16>
    tpu.vector_store %arg7[%c9, %c0_20, %c0_21], %15 {strides = array<i32>} : memref<10x10x128xbf16, #tpu.memory_space<vmem>>, vector<1x10x128xbf16>,
    %cst_22 = arith.constant 0.000000e+00 : bf16
    %18 = vector.broadcast %cst_22 : bf16 to vector<10x1x128xbf16>
    %c0_23 = arith.constant 0 : index
    %c0_24 = arith.constant 0 : index
    %c0_25 = arith.constant 0 : index
    %19 = vector.load %arg7[%c0_23, %c0_24, %c0_25] : memref<10x10x128xbf16, #tpu.memory_space<vmem>>, vector<10x1x128xbf16>
    tpu.vector_store %arg7[%c0_23, %c0_24, %c0_25], %18 {strides = array<i32>} : memref<10x10x128xbf16, #tpu.memory_space<vmem>>, vector<10x1x128xbf16>,
    %c0_26 = arith.constant 0 : index
    %c9_27 = arith.constant 9 : index
    %c0_28 = arith.constant 0 : index
    %20 = vector.load %arg7[%c0_26, %c9_27, %c0_28] : memref<10x10x128xbf16, #tpu.memory_space<vmem>>, vector<10x1x128xbf16>
    tpu.vector_store %arg7[%c0_26, %c9_27, %c0_28], %18 {strides = array<i32>} : memref<10x10x128xbf16, #tpu.memory_space<vmem>>, vector<10x1x128xbf16>,
    %21 = arith.truncf %13 : vector<64x128xf32> to vector<64x128xbf16>
    %22 = vector.shape_cast %21 : vector<64x128xbf16> to vector<8x8x128xbf16>
    %c1_29 = arith.constant 1 : index
    %c1_30 = arith.constant 1 : index
    %c0_31 = arith.constant 0 : index
    %23 = vector.load %arg7[%c1_29, %c1_30, %c0_31] : memref<10x10x128xbf16, #tpu.memory_space<vmem>>, vector<8x8x128xbf16>
    tpu.vector_store %arg7[%c1_29, %c1_30, %c0_31], %22 {strides = array<i32>} : memref<10x10x128xbf16, #tpu.memory_space<vmem>>, vector<8x8x128xbf16>,
    %c0_32 = arith.constant 0 : index
    %c0_33 = arith.constant 0 : index
    %c0_34 = arith.constant 0 : index
    %24 = vector.load %arg7[%c0_32, %c0_33, %c0_34] : memref<10x10x128xbf16, #tpu.memory_space<vmem>>, vector<8x8x128xbf16>
    %c0_35 = arith.constant 0 : index
    %c0_36 = arith.constant 0 : index
    %c0_37 = arith.constant 0 : index
    %25 = vector.load %arg8[%c0_35, %c0_36, %c0_37] : memref<8x8x1152xbf16, #tpu.memory_space<vmem>>, vector<8x8x128xbf16>
    tpu.vector_store %arg8[%c0_35, %c0_36, %c0_37], %24 {strides = array<i32>} : memref<8x8x1152xbf16, #tpu.memory_space<vmem>>, vector<8x8x128xbf16>,
    %c0_38 = arith.constant 0 : index
    %c1_39 = arith.constant 1 : index
    %c0_40 = arith.constant 0 : index
    %26 = vector.load %arg7[%c0_38, %c1_39, %c0_40] : memref<10x10x128xbf16, #tpu.memory_space<vmem>>, vector<8x8x128xbf16>
    %c0_41 = arith.constant 0 : index
    %c0_42 = arith.constant 0 : index
    %c128 = arith.constant 128 : index
    %27 = vector.load %arg8[%c0_41, %c0_42, %c128] : memref<8x8x1152xbf16, #tpu.memory_space<vmem>>, vector<8x8x128xbf16>
    tpu.vector_store %arg8[%c0_41, %c0_42, %c128], %26 {strides = array<i32>} : memref<8x8x1152xbf16, #tpu.memory_space<vmem>>, vector<8x8x128xbf16>,
    %c0_43 = arith.constant 0 : index
    %c2 = arith.constant 2 : index
    %c0_44 = arith.constant 0 : index
    %28 = vector.load %arg7[%c0_43, %c2, %c0_44] : memref<10x10x128xbf16, #tpu.memory_space<vmem>>, vector<8x8x128xbf16>
    %c0_45 = arith.constant 0 : index
    %c0_46 = arith.constant 0 : index
    %c256 = arith.constant 256 : index
    %29 = vector.load %arg8[%c0_45, %c0_46, %c256] : memref<8x8x1152xbf16, #tpu.memory_space<vmem>>, vector<8x8x128xbf16>
    tpu.vector_store %arg8[%c0_45, %c0_46, %c256], %28 {strides = array<i32>} : memref<8x8x1152xbf16, #tpu.memory_space<vmem>>, vector<8x8x128xbf16>,
    %c1_47 = arith.constant 1 : index
    %c0_48 = arith.constant 0 : index
    %c0_49 = arith.constant 0 : index
    %30 = vector.load %arg7[%c1_47, %c0_48, %c0_49] : memref<10x10x128xbf16, #tpu.memory_space<vmem>>, vector<8x8x128xbf16>
    %c0_50 = arith.constant 0 : index
    %c0_51 = arith.constant 0 : index
    %c384 = arith.constant 384 : index
    %31 = vector.load %arg8[%c0_50, %c0_51, %c384] : memref<8x8x1152xbf16, #tpu.memory_space<vmem>>, vector<8x8x128xbf16>
    tpu.vector_store %arg8[%c0_50, %c0_51, %c384], %30 {strides = array<i32>} : memref<8x8x1152xbf16, #tpu.memory_space<vmem>>, vector<8x8x128xbf16>,
    %c1_52 = arith.constant 1 : index
    %c1_53 = arith.constant 1 : index
    %c0_54 = arith.constant 0 : index
    %32 = vector.load %arg7[%c1_52, %c1_53, %c0_54] : memref<10x10x128xbf16, #tpu.memory_space<vmem>>, vector<8x8x128xbf16>
    %c0_55 = arith.constant 0 : index
    %c0_56 = arith.constant 0 : index
    %c512 = arith.constant 512 : index
    %33 = vector.load %arg8[%c0_55, %c0_56, %c512] : memref<8x8x1152xbf16, #tpu.memory_space<vmem>>, vector<8x8x128xbf16>
    tpu.vector_store %arg8[%c0_55, %c0_56, %c512], %32 {strides = array<i32>} : memref<8x8x1152xbf16, #tpu.memory_space<vmem>>, vector<8x8x128xbf16>,
    %c1_57 = arith.constant 1 : index
    %c2_58 = arith.constant 2 : index
    %c0_59 = arith.constant 0 : index
    %34 = vector.load %arg7[%c1_57, %c2_58, %c0_59] : memref<10x10x128xbf16, #tpu.memory_space<vmem>>, vector<8x8x128xbf16>
    %c0_60 = arith.constant 0 : index
    %c0_61 = arith.constant 0 : index
    %c640 = arith.constant 640 : index
    %35 = vector.load %arg8[%c0_60, %c0_61, %c640] : memref<8x8x1152xbf16, #tpu.memory_space<vmem>>, vector<8x8x128xbf16>
    tpu.vector_store %arg8[%c0_60, %c0_61, %c640], %34 {strides = array<i32>} : memref<8x8x1152xbf16, #tpu.memory_space<vmem>>, vector<8x8x128xbf16>,
    %c2_62 = arith.constant 2 : index
    %c0_63 = arith.constant 0 : index
    %c0_64 = arith.constant 0 : index
    %36 = vector.load %arg7[%c2_62, %c0_63, %c0_64] : memref<10x10x128xbf16, #tpu.memory_space<vmem>>, vector<8x8x128xbf16>
    %c0_65 = arith.constant 0 : index
    %c0_66 = arith.constant 0 : index
    %c768 = arith.constant 768 : index
    %37 = vector.load %arg8[%c0_65, %c0_66, %c768] : memref<8x8x1152xbf16, #tpu.memory_space<vmem>>, vector<8x8x128xbf16>
    tpu.vector_store %arg8[%c0_65, %c0_66, %c768], %36 {strides = array<i32>} : memref<8x8x1152xbf16, #tpu.memory_space<vmem>>, vector<8x8x128xbf16>,
    %c2_67 = arith.constant 2 : index
    %c1_68 = arith.constant 1 : index
    %c0_69 = arith.constant 0 : index
    %38 = vector.load %arg7[%c2_67, %c1_68, %c0_69] : memref<10x10x128xbf16, #tpu.memory_space<vmem>>, vector<8x8x128xbf16>
    %c0_70 = arith.constant 0 : index
    %c0_71 = arith.constant 0 : index
    %c896 = arith.constant 896 : index
    %39 = vector.load %arg8[%c0_70, %c0_71, %c896] : memref<8x8x1152xbf16, #tpu.memory_space<vmem>>, vector<8x8x128xbf16>
    tpu.vector_store %arg8[%c0_70, %c0_71, %c896], %38 {strides = array<i32>} : memref<8x8x1152xbf16, #tpu.memory_space<vmem>>, vector<8x8x128xbf16>,
    %c2_72 = arith.constant 2 : index
    %c2_73 = arith.constant 2 : index
    %c0_74 = arith.constant 0 : index
    %40 = vector.load %arg7[%c2_72, %c2_73, %c0_74] : memref<10x10x128xbf16, #tpu.memory_space<vmem>>, vector<8x8x128xbf16>
    %c0_75 = arith.constant 0 : index
    %c0_76 = arith.constant 0 : index
    %c1024 = arith.constant 1024 : index
    %41 = vector.load %arg8[%c0_75, %c0_76, %c1024] : memref<8x8x1152xbf16, #tpu.memory_space<vmem>>, vector<8x8x128xbf16>
    tpu.vector_store %arg8[%c0_75, %c0_76, %c1024], %40 {strides = array<i32>} : memref<8x8x1152xbf16, #tpu.memory_space<vmem>>, vector<8x8x128xbf16>,
    %c0_77 = arith.constant 0 : index
    %c0_78 = arith.constant 0 : index
    %c0_79 = arith.constant 0 : index
    %42 = vector.load %arg8[%c0_77, %c0_78, %c0_79] : memref<8x8x1152xbf16, #tpu.memory_space<vmem>>, vector<8x8x1152xbf16>
    %43 = vector.shape_cast %42 : vector<8x8x1152xbf16> to vector<64x1152xbf16>
    %c0_80 = arith.constant 0 : index
    %c0_81 = arith.constant 0 : index
    %44 = vector.load %arg2[%c0_80, %c0_81] : memref<1152x128xbf16, #tpu.memory_space<vmem>>, vector<1152x128xbf16>
    %cst_82 = arith.constant dense<0.000000e+00> : vector<64x128xf32>
    %45 = tpu.matmul %43, %44, %cst_82 {dimension_numbers = #tpu.dot_dimension_numbers<[1], [0], [0], [1], [0, 0, 1, 1], [], []>} : vector<64x1152xbf16>, vector<1152x128xbf16>, vector<64x128xf32> -> vector<64x128xf32>
    %c0_83 = arith.constant 0 : index
    %c0_84 = arith.constant 0 : index
    %46 = vector.load %arg3[%c0_83, %c0_84] : memref<1x128xf32, #tpu.memory_space<vmem>>, vector<1x128xf32>
    %47 = vector.broadcast %46 : vector<1x128xf32> to vector<64x128xf32>
    %48 = arith.addf %45, %47 : vector<64x128xf32>
    %cst_85 = arith.constant 0.000000e+00 : f32
    %49 = vector.broadcast %cst_85 : f32 to vector<64x128xf32>
    %50 = arith.maximumf %48, %49 : vector<64x128xf32>
    %51 = arith.truncf %50 : vector<64x128xf32> to vector<64x128xbf16>
    %52 = vector.shape_cast %51 : vector<64x128xbf16> to vector<8x8x128xbf16>
    %c1_86 = arith.constant 1 : index
    %c1_87 = arith.constant 1 : index
    %c0_88 = arith.constant 0 : index
    %53 = vector.load %arg7[%c1_86, %c1_87, %c0_88] : memref<10x10x128xbf16, #tpu.memory_space<vmem>>, vector<8x8x128xbf16>
    tpu.vector_store %arg7[%c1_86, %c1_87, %c0_88], %52 {strides = array<i32>} : memref<10x10x128xbf16, #tpu.memory_space<vmem>>, vector<8x8x128xbf16>,
    %c0_89 = arith.constant 0 : index
    %c0_90 = arith.constant 0 : index
    %c0_91 = arith.constant 0 : index
    %54 = vector.load %arg7[%c0_89, %c0_90, %c0_91] : memref<10x10x128xbf16, #tpu.memory_space<vmem>>, vector<8x8x128xbf16>
    %c0_92 = arith.constant 0 : index
    %c0_93 = arith.constant 0 : index
    %c0_94 = arith.constant 0 : index
    %55 = vector.load %arg8[%c0_92, %c0_93, %c0_94] : memref<8x8x1152xbf16, #tpu.memory_space<vmem>>, vector<8x8x128xbf16>
    tpu.vector_store %arg8[%c0_92, %c0_93, %c0_94], %54 {strides = array<i32>} : memref<8x8x1152xbf16, #tpu.memory_space<vmem>>, vector<8x8x128xbf16>,
    %c0_95 = arith.constant 0 : index
    %c1_96 = arith.constant 1 : index
    %c0_97 = arith.constant 0 : index
    %56 = vector.load %arg7[%c0_95, %c1_96, %c0_97] : memref<10x10x128xbf16, #tpu.memory_space<vmem>>, vector<8x8x128xbf16>
    %c0_98 = arith.constant 0 : index
    %c0_99 = arith.constant 0 : index
    %c128_100 = arith.constant 128 : index
    %57 = vector.load %arg8[%c0_98, %c0_99, %c128_100] : memref<8x8x1152xbf16, #tpu.memory_space<vmem>>, vector<8x8x128xbf16>
    tpu.vector_store %arg8[%c0_98, %c0_99, %c128_100], %56 {strides = array<i32>} : memref<8x8x1152xbf16, #tpu.memory_space<vmem>>, vector<8x8x128xbf16>,
    %c0_101 = arith.constant 0 : index
    %c2_102 = arith.constant 2 : index
    %c0_103 = arith.constant 0 : index
    %58 = vector.load %arg7[%c0_101, %c2_102, %c0_103] : memref<10x10x128xbf16, #tpu.memory_space<vmem>>, vector<8x8x128xbf16>
    %c0_104 = arith.constant 0 : index
    %c0_105 = arith.constant 0 : index
    %c256_106 = arith.constant 256 : index
    %59 = vector.load %arg8[%c0_104, %c0_105, %c256_106] : memref<8x8x1152xbf16, #tpu.memory_space<vmem>>, vector<8x8x128xbf16>
    tpu.vector_store %arg8[%c0_104, %c0_105, %c256_106], %58 {strides = array<i32>} : memref<8x8x1152xbf16, #tpu.memory_space<vmem>>, vector<8x8x128xbf16>,
    %c1_107 = arith.constant 1 : index
    %c0_108 = arith.constant 0 : index
    %c0_109 = arith.constant 0 : index
    %60 = vector.load %arg7[%c1_107, %c0_108, %c0_109] : memref<10x10x128xbf16, #tpu.memory_space<vmem>>, vector<8x8x128xbf16>
    %c0_110 = arith.constant 0 : index
    %c0_111 = arith.constant 0 : index
    %c384_112 = arith.constant 384 : index
    %61 = vector.load %arg8[%c0_110, %c0_111, %c384_112] : memref<8x8x1152xbf16, #tpu.memory_space<vmem>>, vector<8x8x128xbf16>
    tpu.vector_store %arg8[%c0_110, %c0_111, %c384_112], %60 {strides = array<i32>} : memref<8x8x1152xbf16, #tpu.memory_space<vmem>>, vector<8x8x128xbf16>,
    %c1_113 = arith.constant 1 : index
    %c1_114 = arith.constant 1 : index
    %c0_115 = arith.constant 0 : index
    %62 = vector.load %arg7[%c1_113, %c1_114, %c0_115] : memref<10x10x128xbf16, #tpu.memory_space<vmem>>, vector<8x8x128xbf16>
    %c0_116 = arith.constant 0 : index
    %c0_117 = arith.constant 0 : index
    %c512_118 = arith.constant 512 : index
    %63 = vector.load %arg8[%c0_116, %c0_117, %c512_118] : memref<8x8x1152xbf16, #tpu.memory_space<vmem>>, vector<8x8x128xbf16>
    tpu.vector_store %arg8[%c0_116, %c0_117, %c512_118], %62 {strides = array<i32>} : memref<8x8x1152xbf16, #tpu.memory_space<vmem>>, vector<8x8x128xbf16>,
    %c1_119 = arith.constant 1 : index
    %c2_120 = arith.constant 2 : index
    %c0_121 = arith.constant 0 : index
    %64 = vector.load %arg7[%c1_119, %c2_120, %c0_121] : memref<10x10x128xbf16, #tpu.memory_space<vmem>>, vector<8x8x128xbf16>
    %c0_122 = arith.constant 0 : index
    %c0_123 = arith.constant 0 : index
    %c640_124 = arith.constant 640 : index
    %65 = vector.load %arg8[%c0_122, %c0_123, %c640_124] : memref<8x8x1152xbf16, #tpu.memory_space<vmem>>, vector<8x8x128xbf16>
    tpu.vector_store %arg8[%c0_122, %c0_123, %c640_124], %64 {strides = array<i32>} : memref<8x8x1152xbf16, #tpu.memory_space<vmem>>, vector<8x8x128xbf16>,
    %c2_125 = arith.constant 2 : index
    %c0_126 = arith.constant 0 : index
    %c0_127 = arith.constant 0 : index
    %66 = vector.load %arg7[%c2_125, %c0_126, %c0_127] : memref<10x10x128xbf16, #tpu.memory_space<vmem>>, vector<8x8x128xbf16>
    %c0_128 = arith.constant 0 : index
    %c0_129 = arith.constant 0 : index
    %c768_130 = arith.constant 768 : index
    %67 = vector.load %arg8[%c0_128, %c0_129, %c768_130] : memref<8x8x1152xbf16, #tpu.memory_space<vmem>>, vector<8x8x128xbf16>
    tpu.vector_store %arg8[%c0_128, %c0_129, %c768_130], %66 {strides = array<i32>} : memref<8x8x1152xbf16, #tpu.memory_space<vmem>>, vector<8x8x128xbf16>,
    %c2_131 = arith.constant 2 : index
    %c1_132 = arith.constant 1 : index
    %c0_133 = arith.constant 0 : index
    %68 = vector.load %arg7[%c2_131, %c1_132, %c0_133] : memref<10x10x128xbf16, #tpu.memory_space<vmem>>, vector<8x8x128xbf16>
    %c0_134 = arith.constant 0 : index
    %c0_135 = arith.constant 0 : index
    %c896_136 = arith.constant 896 : index
    %69 = vector.load %arg8[%c0_134, %c0_135, %c896_136] : memref<8x8x1152xbf16, #tpu.memory_space<vmem>>, vector<8x8x128xbf16>
    tpu.vector_store %arg8[%c0_134, %c0_135, %c896_136], %68 {strides = array<i32>} : memref<8x8x1152xbf16, #tpu.memory_space<vmem>>, vector<8x8x128xbf16>,
    %c2_137 = arith.constant 2 : index
    %c2_138 = arith.constant 2 : index
    %c0_139 = arith.constant 0 : index
    %70 = vector.load %arg7[%c2_137, %c2_138, %c0_139] : memref<10x10x128xbf16, #tpu.memory_space<vmem>>, vector<8x8x128xbf16>
    %c0_140 = arith.constant 0 : index
    %c0_141 = arith.constant 0 : index
    %c1024_142 = arith.constant 1024 : index
    %71 = vector.load %arg8[%c0_140, %c0_141, %c1024_142] : memref<8x8x1152xbf16, #tpu.memory_space<vmem>>, vector<8x8x128xbf16>
    tpu.vector_store %arg8[%c0_140, %c0_141, %c1024_142], %70 {strides = array<i32>} : memref<8x8x1152xbf16, #tpu.memory_space<vmem>>, vector<8x8x128xbf16>,
    %c0_143 = arith.constant 0 : index
    %c0_144 = arith.constant 0 : index
    %c0_145 = arith.constant 0 : index
    %72 = vector.load %arg8[%c0_143, %c0_144, %c0_145] : memref<8x8x1152xbf16, #tpu.memory_space<vmem>>, vector<8x8x1152xbf16>
    %73 = vector.shape_cast %72 : vector<8x8x1152xbf16> to vector<64x1152xbf16>
    %c0_146 = arith.constant 0 : index
    %c0_147 = arith.constant 0 : index
    %74 = vector.load %arg4[%c0_146, %c0_147] : memref<1152x128xbf16, #tpu.memory_space<vmem>>, vector<1152x128xbf16>
    %cst_148 = arith.constant dense<0.000000e+00> : vector<64x128xf32>
    %75 = tpu.matmul %73, %74, %cst_148 {dimension_numbers = #tpu.dot_dimension_numbers<[1], [0], [0], [1], [0, 0, 1, 1], [], []>} : vector<64x1152xbf16>, vector<1152x128xbf16>, vector<64x128xf32> -> vector<64x128xf32>
    %c0_149 = arith.constant 0 : index
    %c0_150 = arith.constant 0 : index
    %76 = vector.load %arg5[%c0_149, %c0_150] : memref<1x128xf32, #tpu.memory_space<vmem>>, vector<1x128xf32>
    %77 = vector.broadcast %76 : vector<1x128xf32> to vector<64x128xf32>
    %78 = arith.addf %75, %77 : vector<64x128xf32>
    %cst_151 = arith.constant 0.000000e+00 : f32
    %79 = vector.broadcast %cst_151 : f32 to vector<64x128xf32>
    %80 = arith.maximumf %78, %79 : vector<64x128xf32>
    %c0_152 = arith.constant 0 : index
    %c0_153 = arith.constant 0 : index
    %81 = vector.load %arg9[%c0_152, %c0_153] : memref<64x128xf32, #tpu.memory_space<vmem>>, vector<64x128xf32>
    %82 = arith.addf %80, %81 : vector<64x128xf32>
    %cst_154 = arith.constant 0.000000e+00 : f32
    %83 = vector.broadcast %cst_154 : f32 to vector<64x128xf32>
    %84 = arith.maximumf %82, %83 : vector<64x128xf32>
    %c0_155 = arith.constant 0 : index
    %c0_156 = arith.constant 0 : index
    %c0_157 = arith.constant 0 : index
    %85 = vector.load %arg6[%c0_155, %c0_156, %c0_157] : memref<1x64x128xf32, #tpu.memory_space<vmem>>, vector<1x64x128xf32>
    %86 = vector.shape_cast %85 : vector<1x64x128xf32> to vector<64x128xf32>
    %87 = vector.shape_cast %84 : vector<64x128xf32> to vector<1x64x128xf32>
    tpu.vector_store %arg6[%c0_155, %c0_156, %c0_157], %87 {strides = array<i32>} : memref<1x64x128xf32, #tpu.memory_space<vmem>>, vector<1x64x128xf32>,
    return
  }
  func.func @transform_0(%arg0: i32) -> (i32, i32, i32, i32) {
    %c0_i32 = arith.constant 0 : i32
    %c0_i32_0 = arith.constant 0 : i32
    %c0_i32_1 = arith.constant 0 : i32
    %c0_i32_2 = arith.constant 0 : i32
    return %arg0, %c0_i32, %c0_i32_0, %c0_i32_1 : i32, i32, i32, i32
  }
  func.func @transform_1(%arg0: i32) -> (i32, i32) {
    %c0_i32 = arith.constant 0 : i32
    %c0_i32_0 = arith.constant 0 : i32
    %c0_i32_1 = arith.constant 0 : i32
    return %c0_i32, %c0_i32_0 : i32, i32
  }
  func.func @transform_2(%arg0: i32) -> (i32, i32) {
    %c0_i32 = arith.constant 0 : i32
    %c0_i32_0 = arith.constant 0 : i32
    %c0_i32_1 = arith.constant 0 : i32
    return %c0_i32, %c0_i32_0 : i32, i32
  }
  func.func @transform_3(%arg0: i32) -> (i32, i32) {
    %c0_i32 = arith.constant 0 : i32
    %c0_i32_0 = arith.constant 0 : i32
    %c0_i32_1 = arith.constant 0 : i32
    return %c0_i32, %c0_i32_0 : i32, i32
  }
  func.func @transform_4(%arg0: i32) -> (i32, i32) {
    %c0_i32 = arith.constant 0 : i32
    %c0_i32_0 = arith.constant 0 : i32
    %c0_i32_1 = arith.constant 0 : i32
    return %c0_i32, %c0_i32_0 : i32, i32
  }
  func.func @transform_5(%arg0: i32) -> (i32, i32, i32) {
    %c0_i32 = arith.constant 0 : i32
    %c0_i32_0 = arith.constant 0 : i32
    %c0_i32_1 = arith.constant 0 : i32
    return %arg0, %c0_i32, %c0_i32_0 : i32, i32, i32
  }
}

</mosaic_0001>

<llo_original>
// kernel: unet_left_with_res_forward.1
$region0: #{unet_left_with_res_forward.1}
  #allocation0 [shape = 'u32[]', space=smem, size = 0x4, offset = 0x4, fixed_abs, tag = 'smem constant byte address 0x4 - core index']
  #allocation1 [shape = 'u32[144,128]{1,0:T(1,128)}', space=vmem, size = 0x12000, scoped, tag = 'internal scratch']
  #allocation2 [shape = 'bf16[10,10,128]{2,1,0:T(8,128)(2,1)}', space=vmem, size = 0xa000, scoped, tag = 'scratch operand']
  #allocation3 [shape = 'bf16[8,8,1152]{2,1,0:T(8,128)(2,1)}', space=vmem, size = 0x24000, scoped, tag = 'scratch operand']
  #allocation4 [shape = 'f32[64,128]{1,0:T(8,128)}', space=vmem, size = 0x8000, scoped, tag = 'scratch operand']
  %s0 = inlined_call_operand.vmem [shape: f32[2,16,16,4], index: 0, kind: input, shape index: {}]
  %s1 = inlined_call_operand.vmem [shape: bf16[1152,128], index: 1, kind: input, shape index: {}]
  %s2 = inlined_call_operand.vmem [shape: f32[1,128], index: 2, kind: input, shape index: {}]
  %s3 = inlined_call_operand.vmem [shape: bf16[1152,128], index: 3, kind: input, shape index: {}]
  %s4 = inlined_call_operand.vmem [shape: f32[1,128], index: 4, kind: input, shape index: {}]
  %s5 = inlined_call_operand.vmem [shape: f32[2,64,128], index: 5, kind: output, shape index: {}]
  %s6 = sld [smem:[#allocation0]]
  $region53: #{unet_left_with_res_forward.1} parent=0
    _
  %s8 = ssub.s32 1, %s6
  %s9 = scalar_select 0, %s8, %s6
  loop: start=0, step=1, limit=4
  $region2: #{unet_left_with_res_forward.1} parent=0 // loop_pre_header
    _
  $region3: #{unet_left_with_res_forward.1} parent=0 // loop_header
    %s11 = sphi 0, %s15
    %p12 = scmp.ge.s32.totalorder %s11, 4
    %s21 = sphi 0, %s23
    %s24 = sphi 0, %s21
    %s25 = sphi 0, %s24
    %s41 = sphi 0, %s25
    %s45 = sphi 0, %s45
    %s47 = sphi 0, %s45
    %s48 = sphi 0, %s47
    %s62 = sphi 0, %s48
    %s66 = sphi 0, %s66
    %s68 = sphi 0, %s66
    %s69 = sphi 0, %s68
    %s83 = sphi 0, %s69
    %s87 = sphi 0, %s87
    %s89 = sphi 0, %s87
    %s90 = sphi 0, %s89
    %s104 = sphi 0, %s90
    %s108 = sphi 0, %s108
    %s110 = sphi 0, %s108
    %s111 = sphi 0, %s110
    %s125 = sphi 0, %s111
    %s131 = sphi 0, %s133
    %s134 = sphi 0, %s131
    %s135 = sphi 0, %s134
    %s151 = sphi 0, %s135
  $region4: #{unet_left_with_res_forward.1} parent=0 // loop_header_branch
    %14 = sbr.rel (%p12) target = $region8
  $region5: #{unet_left_with_res_forward.1} parent=0 // loop_body
    %s16 = ssub.s32 %s11, 1
    %s17 = ssub.s32 %s11, 2
    %s18 = sadd.s32 %s11, 1
    %s19 = ssub.s32 %s11, %s18
    %p20 = scmp.eq.s32.totalorder %s19, 0
    %s22 = sadd.s32 %s21, 1
    %s23 = scalar_select %p20, %s21, %s22
    %p26 = pneg %p20
    %p27 = scmp.eq.s32.totalorder %s11, 1
    %p28 = por %p26, %p27
    %p29 = scmp.ne.s32.totalorder %s21, %s24
    %p30 = scmp.eq.s32.totalorder %s11, 0
    %p31 = por %p29, %p30
    %p32 = scmp.ne.s32.totalorder %s21, %s24
    %p33 = scmp.eq.s32.totalorder %s16, 1
    %p34 = por %p32, %p33
    %p35 = scmp.ne.s32.totalorder %s24, %s25
    %p36 = scmp.eq.s32.totalorder %s16, 0
    %p37 = por %p35, %p36
    %p38 = scmp.ne.s32.totalorder %s24, %s25
    %p39 = scmp.eq.s32.totalorder %s17, 1
    %p40 = por %p38, %p39
    %p42 = scmp.ne.s32.totalorder %s25, %s41
    %p43 = scmp.eq.s32.totalorder %s17, 0
    %p44 = por %p42, %p43
    %s46 = sadd.s32 %s45, 1
    %p49 = scmp.eq.s32.totalorder %s11, 1
    %p50 = scmp.ne.s32.totalorder %s45, %s47
    %p51 = scmp.eq.s32.totalorder %s11, 0
    %p52 = por %p50, %p51
    %p53 = scmp.ne.s32.totalorder %s45, %s47
    %p54 = scmp.eq.s32.totalorder %s16, 1
    %p55 = por %p53, %p54
    %p56 = scmp.ne.s32.totalorder %s47, %s48
    %p57 = scmp.eq.s32.totalorder %s16, 0
    %p58 = por %p56, %p57
    %p59 = scmp.ne.s32.totalorder %s47, %s48
    %p60 = scmp.eq.s32.totalorder %s17, 1
    %p61 = por %p59, %p60
    %p63 = scmp.ne.s32.totalorder %s48, %s62
    %p64 = scmp.eq.s32.totalorder %s17, 0
    %p65 = por %p63, %p64
    %s67 = sadd.s32 %s66, 1
    %p70 = scmp.eq.s32.totalorder %s11, 1
    %p71 = scmp.ne.s32.totalorder %s66, %s68
    %p72 = scmp.eq.s32.totalorder %s11, 0
    %p73 = por %p71, %p72
    %p74 = scmp.ne.s32.totalorder %s66, %s68
    %p75 = scmp.eq.s32.totalorder %s16, 1
    %p76 = por %p74, %p75
    %p77 = scmp.ne.s32.totalorder %s68, %s69
    %p78 = scmp.eq.s32.totalorder %s16, 0
    %p79 = por %p77, %p78
    %p80 = scmp.ne.s32.totalorder %s68, %s69
    %p81 = scmp.eq.s32.totalorder %s17, 1
    %p82 = por %p80, %p81
    %p84 = scmp.ne.s32.totalorder %s69, %s83
    %p85 = scmp.eq.s32.totalorder %s17, 0
    %p86 = por %p84, %p85
    %s88 = sadd.s32 %s87, 1
    %p91 = scmp.eq.s32.totalorder %s11, 1
    %p92 = scmp.ne.s32.totalorder %s87, %s89
    %p93 = scmp.eq.s32.totalorder %s11, 0
    %p94 = por %p92, %p93
    %p95 = scmp.ne.s32.totalorder %s87, %s89
    %p96 = scmp.eq.s32.totalorder %s16, 1
    %p97 = por %p95, %p96
    %p98 = scmp.ne.s32.totalorder %s89, %s90
    %p99 = scmp.eq.s32.totalorder %s16, 0
    %p100 = por %p98, %p99
    %p101 = scmp.ne.s32.totalorder %s89, %s90
    %p102 = scmp.eq.s32.totalorder %s17, 1
    %p103 = por %p101, %p102
    %p105 = scmp.ne.s32.totalorder %s90, %s104
    %p106 = scmp.eq.s32.totalorder %s17, 0
    %p107 = por %p105, %p106
    %s109 = sadd.s32 %s108, 1
    %p112 = scmp.eq.s32.totalorder %s11, 1
    %p113 = scmp.ne.s32.totalorder %s108, %s110
    %p114 = scmp.eq.s32.totalorder %s11, 0
    %p115 = por %p113, %p114
    %p116 = scmp.ne.s32.totalorder %s108, %s110
    %p117 = scmp.eq.s32.totalorder %s16, 1
    %p118 = por %p116, %p117
    %p119 = scmp.ne.s32.totalorder %s110, %s111
    %p120 = scmp.eq.s32.totalorder %s16, 0
    %p121 = por %p119, %p120
    %p122 = scmp.ne.s32.totalorder %s110, %s111
    %p123 = scmp.eq.s32.totalorder %s17, 1
    %p124 = por %p122, %p123
    %p126 = scmp.ne.s32.totalorder %s111, %s125
    %p127 = scmp.eq.s32.totalorder %s17, 0
    %p128 = por %p126, %p127
    %s129 = ssub.s32 %s11, %s18
    %p130 = scmp.eq.s32.totalorder %s129, 0
    %s132 = sadd.s32 %s131, 1
    %s133 = scalar_select %p130, %s131, %s132
    %p136 = pneg %p130
    %p137 = scmp.eq.s32.totalorder %s11, 1
    %p138 = por %p136, %p137
    %p139 = scmp.ne.s32.totalorder %s131, %s134
    %p140 = scmp.eq.s32.totalorder %s11, 0
    %p141 = por %p139, %p140
    %p142 = scmp.ne.s32.totalorder %s131, %s134
    %p143 = scmp.eq.s32.totalorder %s16, 1
    %p144 = por %p142, %p143
    %p145 = scmp.ne.s32.totalorder %s134, %s135
    %p146 = scmp.eq.s32.totalorder %s16, 0
    %p147 = por %p145, %p146
    %p148 = scmp.ne.s32.totalorder %s134, %s135
    %p149 = scmp.eq.s32.totalorder %s17, 1
    %p150 = por %p148, %p149
    %p152 = scmp.ne.s32.totalorder %s135, %s151
    %p153 = scmp.eq.s32.totalorder %s17, 0
    %p154 = por %p152, %p153
    %p155 = scmp.le.s32.totalorder 1, %s11
    %p156 = scmp.lt.s32.totalorder %s11, 3
    %p157 = pnand %p155, %p156
    %p158 = pneg %p157
    // Predicated region
    $region9: #{unet_left_with_res_forward.1} parent=5 // pred_check
      _
    $region10: #{unet_left_with_res_forward.1} parent=5 // pred_check_branch
      %160 = sbr.rel (%p157) target = $region12
    $region11: #{unet_left_with_res_forward.1} parent=5 // pred_region
      %s161 = ssub.s32 %s11, 1
      // Predicated region
      $region13: #{unet_left_with_res_forward.1} parent=11 // pred_check
        %p162 = pneg %p58
      $region14: #{unet_left_with_res_forward.1} parent=11 // pred_check_branch
        %164 = sbr.rel (%p162) target = $region16
      $region15: #{unet_left_with_res_forward.1} parent=11 // pred_region
        _
      $region16: #{unet_left_with_res_forward.1} parent=11 // pred_fallthru
        _
      // Predicated region
      $region17: #{unet_left_with_res_forward.1} parent=11 // pred_check
        %p165 = pneg %p79
      $region18: #{unet_left_with_res_forward.1} parent=11 // pred_check_branch
        %167 = sbr.rel (%p165) target = $region20
      $region19: #{unet_left_with_res_forward.1} parent=11 // pred_region
        _
      $region20: #{unet_left_with_res_forward.1} parent=11 // pred_fallthru
        _
      // Predicated region
      $region21: #{unet_left_with_res_forward.1} parent=11 // pred_check
        %p168 = pneg %p100
      $region22: #{unet_left_with_res_forward.1} parent=11 // pred_check_branch
        %170 = sbr.rel (%p168) target = $region24
      $region23: #{unet_left_with_res_forward.1} parent=11 // pred_region
        _
      $region24: #{unet_left_with_res_forward.1} parent=11 // pred_fallthru
        _
      // Predicated region
      $region25: #{unet_left_with_res_forward.1} parent=11 // pred_check
        %p171 = pneg %p121
      $region26: #{unet_left_with_res_forward.1} parent=11 // pred_check_branch
        %173 = sbr.rel (%p171) target = $region28
      $region27: #{unet_left_with_res_forward.1} parent=11 // pred_region
        _
      $region28: #{unet_left_with_res_forward.1} parent=11 // pred_fallthru
        _
    $region12: #{unet_left_with_res_forward.1} parent=5 // pred_fallthru
      _
    %p174 = scmp.lt.s32.totalorder %s11, 2
    // Predicated region
    $region29: #{unet_left_with_res_forward.1} parent=5 // pred_check
      %p175 = pneg %p174
    $region30: #{unet_left_with_res_forward.1} parent=5 // pred_check_branch
      %177 = sbr.rel (%p175) target = $region32
    $region31: #{unet_left_with_res_forward.1} parent=5 // pred_region
      // Predicated region
      $region33: #{unet_left_with_res_forward.1} parent=31 // pred_check
        %p178 = pneg %p31
      $region34: #{unet_left_with_res_forward.1} parent=31 // pred_check_branch
        %180 = sbr.rel (%p178) target = $region36
      $region35: #{unet_left_with_res_forward.1} parent=31 // pred_region
        %p181 = scmp.lt.s32.totalorder %s11, 1
        %s182 = scalar_select %p181, %s11, 1
        %s183 = smul.addr %s182, 32
        %s184 = smul.addr %s183, 8
        %s185 = scalar_lea.vmem %s0, %s184
      $region36: #{unet_left_with_res_forward.1} parent=31 // pred_fallthru
        _
    $region32: #{unet_left_with_res_forward.1} parent=5 // pred_fallthru
      _
    %p186 = scmp.le.s32.totalorder 1, %s11
    %p187 = scmp.lt.s32.totalorder %s11, 3
    %p188 = pnand %p186, %p187
    %p189 = pneg %p188
    // Predicated region
    $region37: #{unet_left_with_res_forward.1} parent=5 // pred_check
      _
    $region38: #{unet_left_with_res_forward.1} parent=5 // pred_check_branch
      %191 = sbr.rel (%p188) target = $region40
    $region39: #{unet_left_with_res_forward.1} parent=5 // pred_region
      %s192 = ssub.s32 %s11, 1
      %p193 = scmp.lt.s32.totalorder %s16, 1
      %s194 = scalar_select %p193, %s16, 1
      %s195 = smul.addr %s194, 32
      %s196 = smul.addr %s195, 8
      %s197 = scalar_lea.vmem %s0, %s196
      %p198 = pneg %p37
      %p199 = pneg %p34
      %p200 = pneg %p58
      %p201 = pneg %p55
      %p202 = pneg %p79
      %p203 = pneg %p76
      %p204 = pneg %p100
      %p205 = pneg %p97
      %p206 = pneg %p121
      %p207 = pneg %p118
      %p208 = pneg %p147
      %p209 = pneg %p144
      %p210 = scmp.lt.s32.totalorder %s16, 1
      %s211 = scalar_select %p210, %s16, 1
      %s212 = smul.addr %s211, 8
      %s213 = smul.addr %s212, 8
      %s214 = scalar_lea.vmem %s5, %s213
      %p215 = scmp.lt.s32.totalorder %s16, 1
      %s216 = scalar_select %p215, %s16, 1
      %s217 = smul.addr %s216, 32
      %s218 = smul.addr %s217, 8
      %s219 = scalar_lea.vmem %s0, %s218
      %p220 = scmp.lt.s32.totalorder %s16, 1
      %s221 = scalar_select %p220, %s16, 1
      %s222 = smul.addr %s221, 8
      %s223 = smul.addr %s222, 8
      %s224 = scalar_lea.vmem %s5, %s223
      %v226 = vld [vmem:[%s219] ss:$2 sm:$0xff]
      %s227 = scalar_lea.vmem %s219, 32
      %v228 = vld [vmem:[%s227] ss:$2 sm:$0xff]
      %s229 = scalar_lea.vmem %s219, 64
      %v230 = vld [vmem:[%s229] ss:$2 sm:$0xff]
      %s231 = scalar_lea.vmem %s219, 96
      %v232 = vld [vmem:[%s231] ss:$2 sm:$0xff]
      %s233 = scalar_lea.vmem %s219, 128
      %v234 = vld [vmem:[%s233] ss:$2 sm:$0xff]
      %s235 = scalar_lea.vmem %s219, 160
      %v236 = vld [vmem:[%s235] ss:$2 sm:$0xff]
      %s237 = scalar_lea.vmem %s219, 192
      %v238 = vld [vmem:[%s237] ss:$2 sm:$0xff]
      %s239 = scalar_lea.vmem %s219, 224
      %v240 = vld [vmem:[%s239] ss:$2 sm:$0xff]
      %s241 = scalar_lea.vmem %s219, 1
      %v242 = vld [vmem:[%s241] ss:$2 sm:$0xff]
      %s243 = scalar_lea.vmem %s219, 33
      %v244 = vld [vmem:[%s243] ss:$2 sm:$0xff]
      %s245 = scalar_lea.vmem %s219, 65
      %v246 = vld [vmem:[%s245] ss:$2 sm:$0xff]
      %s247 = scalar_lea.vmem %s219, 97
      %v248 = vld [vmem:[%s247] ss:$2 sm:$0xff]
      %s249 = scalar_lea.vmem %s219, 129
      %v250 = vld [vmem:[%s249] ss:$2 sm:$0xff]
      %s251 = scalar_lea.vmem %s219, 161
      %v252 = vld [vmem:[%s251] ss:$2 sm:$0xff]
      %s253 = scalar_lea.vmem %s219, 193
      %v254 = vld [vmem:[%s253] ss:$2 sm:$0xff]
      %s255 = scalar_lea.vmem %s219, 225
      %v256 = vld [vmem:[%s255] ss:$2 sm:$0xff]
      %s257 = scalar_lea.vmem %s219, 16
      %v258 = vld [vmem:[%s257] ss:$2 sm:$0xff]
      %s259 = scalar_lea.vmem %s257, 32
      %v260 = vld [vmem:[%s259] ss:$2 sm:$0xff]
      %s261 = scalar_lea.vmem %s257, 64
      %v262 = vld [vmem:[%s261] ss:$2 sm:$0xff]
      %s263 = scalar_lea.vmem %s257, 96
      %v264 = vld [vmem:[%s263] ss:$2 sm:$0xff]
      %s265 = scalar_lea.vmem %s257, 128
      %v266 = vld [vmem:[%s265] ss:$2 sm:$0xff]
      %s267 = scalar_lea.vmem %s257, 160
      %v268 = vld [vmem:[%s267] ss:$2 sm:$0xff]
      %s269 = scalar_lea.vmem %s257, 192
      %v270 = vld [vmem:[%s269] ss:$2 sm:$0xff]
      %s271 = scalar_lea.vmem %s257, 224
      %v272 = vld [vmem:[%s271] ss:$2 sm:$0xff]
      %s273 = scalar_lea.vmem %s257, 1
      %v274 = vld [vmem:[%s273] ss:$2 sm:$0xff]
      %s275 = scalar_lea.vmem %s257, 33
      %v276 = vld [vmem:[%s275] ss:$2 sm:$0xff]
      %s277 = scalar_lea.vmem %s257, 65
      %v278 = vld [vmem:[%s277] ss:$2 sm:$0xff]
      %s279 = scalar_lea.vmem %s257, 97
      %v280 = vld [vmem:[%s279] ss:$2 sm:$0xff]
      %s281 = scalar_lea.vmem %s257, 129
      %v282 = vld [vmem:[%s281] ss:$2 sm:$0xff]
      %s283 = scalar_lea.vmem %s257, 161
      %v284 = vld [vmem:[%s283] ss:$2 sm:$0xff]
      %s285 = scalar_lea.vmem %s257, 193
      %v286 = vld [vmem:[%s285] ss:$2 sm:$0xff]
      %s287 = scalar_lea.vmem %s257, 225
      %v288 = vld [vmem:[%s287] ss:$2 sm:$0xff]
      %v289 = vmax.f32 %v226, %v242
      %v290 = vmax.f32 %v228, %v244
      %v291 = vmax.f32 %v230, %v246
      %v292 = vmax.f32 %v232, %v248
      %v293 = vmax.f32 %v234, %v250
      %v294 = vmax.f32 %v236, %v252
      %v295 = vmax.f32 %v238, %v254
      %v296 = vmax.f32 %v240, %v256
      %v297 = vmax.f32 %v258, %v274
      %v298 = vmax.f32 %v260, %v276
      %v299 = vmax.f32 %v262, %v278
      %v300 = vmax.f32 %v264, %v280
      %v301 = vmax.f32 %v266, %v282
      %v302 = vmax.f32 %v268, %v284
      %v303 = vmax.f32 %v270, %v286
      %v304 = vmax.f32 %v272, %v288
      %v305 = vmax.f32 %v289, %v297
      %v306 = vmax.f32 %v290, %v298
      %v307 = vmax.f32 %v291, %v299
      %v308 = vmax.f32 %v292, %v300
      %v309 = vmax.f32 %v293, %v301
      %v310 = vmax.f32 %v294, %v302
      %v311 = vmax.f32 %v295, %v303
      %v312 = vmax.f32 %v296, %v304
      %vm313 = vcmask 31744
      %v314 = vsel %vm313, %v305, 0.0
      %v315 = vsel %vm313, %v306, 0.0
      %v316 = vsel %vm313, %v307, 0.0
      %v317 = vsel %vm313, %v308, 0.0
      %v318 = vsel %vm313, %v309, 0.0
      %v319 = vsel %vm313, %v310, 0.0
      %v320 = vsel %vm313, %v311, 0.0
      %v321 = vsel %vm313, %v312, 0.0
      %322 = vst [vmem:[#allocation4] sm:$0xff] %v314
      %323 = vst [vmem:[#allocation4 + $0x8] sm:$0xff] %v315
      %324 = vst [vmem:[#allocation4 + $0x10] sm:$0xff] %v316
      %325 = vst [vmem:[#allocation4 + $0x18] sm:$0xff] %v317
      %326 = vst [vmem:[#allocation4 + $0x20] sm:$0xff] %v318
      %327 = vst [vmem:[#allocation4 + $0x28] sm:$0xff] %v319
      %328 = vst [vmem:[#allocation4 + $0x30] sm:$0xff] %v320
      %329 = vst [vmem:[#allocation4 + $0x38] sm:$0xff] %v321
      %330 = vst [vmem:[#allocation2] sm:$0xf] 0
      %331 = vst [vmem:[#allocation2 + $0x4] sm:$0x1] 0
      %s332 = scalar_lea.vmem [#allocation2], 72
      %333 = vst [vmem:[%s332] sm:$0xf] 0
      %334 = vst [vmem:[%s332 + $0x4] sm:$0x1] 0
      %vm335 = vcmask 1040384
      %vm336 = vsmask.f32 256
      %vm337 = vmand %vm335, %vm336
      %v338 = vld [vmem:[#allocation2] sm:$0x1]
      %v339 = vsel %vm337, 0, %v338
      %340 = vst [vmem:[#allocation2] sm:$0x1] %v339
      %v341 = vld [vmem:[#allocation2 + $0x8] sm:$0x1]
      %v342 = vsel %vm337, 0, %v341
      %343 = vst [vmem:[#allocation2 + $0x8] sm:$0x1] %v342
      %v344 = vld [vmem:[#allocation2 + $0x10] sm:$0x1]
      %v345 = vsel %vm337, 0, %v344
      %346 = vst [vmem:[#allocation2 + $0x10] sm:$0x1] %v345
      %v347 = vld [vmem:[#allocation2 + $0x18] sm:$0x1]
      %v348 = vsel %vm337, 0, %v347
      %349 = vst [vmem:[#allocation2 + $0x18] sm:$0x1] %v348
      %v350 = vld [vmem:[#allocation2 + $0x20] sm:$0x1]
      %v351 = vsel %vm337, 0, %v350
      %352 = vst [vmem:[#allocation2 + $0x20] sm:$0x1] %v351
      %v353 = vld [vmem:[#allocation2 + $0x28] sm:$0x1]
      %v354 = vsel %vm337, 0, %v353
      %355 = vst [vmem:[#allocation2 + $0x28] sm:$0x1] %v354
      %v356 = vld [vmem:[#allocation2 + $0x30] sm:$0x1]
      %v357 = vsel %vm337, 0, %v356
      %358 = vst [vmem:[#allocation2 + $0x30] sm:$0x1] %v357
      %v359 = vld [vmem:[#allocation2 + $0x38] sm:$0x1]
      %v360 = vsel %vm337, 0, %v359
      %361 = vst [vmem:[#allocation2 + $0x38] sm:$0x1] %v360
      %v362 = vld [vmem:[#allocation2 + $0x40] sm:$0x1]
      %v363 = vsel %vm337, 0, %v362
      %364 = vst [vmem:[#allocation2 + $0x40] sm:$0x1] %v363
      %v365 = vld [vmem:[#allocation2 + $0x48] sm:$0x1]
      %v366 = vsel %vm337, 0, %v365
      %367 = vst [vmem:[#allocation2 + $0x48] sm:$0x1] %v366
      %vm368 = vsmask.f32 7938
      %vm369 = vmand %vm335, %vm368
      %v370 = vld [vmem:[#allocation2 + $0x4] sm:$0x1]
      %v371 = vsel %vm369, 0, %v370
      %372 = vst [vmem:[#allocation2 + $0x4] sm:$0x1] %v371
      %v373 = vld [vmem:[#allocation2 + $0xc] sm:$0x1]
      %v374 = vsel %vm369, 0, %v373
      %375 = vst [vmem:[#allocation2 + $0xc] sm:$0x1] %v374
      %v376 = vld [vmem:[#allocation2 + $0x14] sm:$0x1]
      %v377 = vsel %vm369, 0, %v376
      %378 = vst [vmem:[#allocation2 + $0x14] sm:$0x1] %v377
      %v379 = vld [vmem:[#allocation2 + $0x1c] sm:$0x1]
      %v380 = vsel %vm369, 0, %v379
      %381 = vst [vmem:[#allocation2 + $0x1c] sm:$0x1] %v380
      %v382 = vld [vmem:[#allocation2 + $0x24] sm:$0x1]
      %v383 = vsel %vm369, 0, %v382
      %384 = vst [vmem:[#allocation2 + $0x24] sm:$0x1] %v383
      %v385 = vld [vmem:[#allocation2 + $0x2c] sm:$0x1]
      %v386 = vsel %vm369, 0, %v385
      %387 = vst [vmem:[#allocation2 + $0x2c] sm:$0x1] %v386
      %v388 = vld [vmem:[#allocation2 + $0x34] sm:$0x1]
      %v389 = vsel %vm369, 0, %v388
      %390 = vst [vmem:[#allocation2 + $0x34] sm:$0x1] %v389
      %v391 = vld [vmem:[#allocation2 + $0x3c] sm:$0x1]
      %v392 = vsel %vm369, 0, %v391
      %393 = vst [vmem:[#allocation2 + $0x3c] sm:$0x1] %v392
      %v394 = vld [vmem:[#allocation2 + $0x44] sm:$0x1]
      %v395 = vsel %vm369, 0, %v394
      %396 = vst [vmem:[#allocation2 + $0x44] sm:$0x1] %v395
      %v397 = vld [vmem:[#allocation2 + $0x4c] sm:$0x1]
      %v398 = vsel %vm369, 0, %v397
      %399 = vst [vmem:[#allocation2 + $0x4c] sm:$0x1] %v398
      %v400 = vpack.c.bf16 %v315, %v314
      %v401 = vpack.c.bf16 %v317, %v316
      %v402 = vpack.c.bf16 %v319, %v318
      %v403 = vpack.c.bf16 %v321, %v320
      %v408 = vunpack.c.l.b16 %v400
      %v409 = vunpack.c.h.b16 %v400
      %v410 = vunpack.c.l.b16 %v401
      %v411 = vunpack.c.h.b16 %v401
      %v412 = vunpack.c.l.b16 %v402
      %v413 = vunpack.c.h.b16 %v402
      %v414 = vunpack.c.l.b16 %v403
      %v415 = vunpack.c.h.b16 %v403
      %v416 = vpack.c.b16 %v408, %v408
      %v417 = vpack.c.b16 %v409, %v409
      %v418 = vpack.c.b16 %v410, %v410
      %v419 = vpack.c.b16 %v411, %v411
      %v420 = vpack.c.b16 %v412, %v412
      %v421 = vpack.c.b16 %v413, %v413
      %v422 = vpack.c.b16 %v414, %v414
      %v423 = vpack.c.b16 %v415, %v415
      %v425 = vshrl.u32 %v416, 16
      %v427 = vrot.slane %v425, 7
      %v428 = vshll.u32 %v416, 16
      %v430 = vor.u32 %v427, %v428
      %v431 = vrot.slane %v427, 4
      %v433 = vshrl.u32 %v417, 16
      %v435 = vrot.slane %v433, 7
      %v436 = vshll.u32 %v417, 16
      %v438 = vor.u32 %v435, %v436
      %v439 = vrot.slane %v435, 4
      %v441 = vshrl.u32 %v418, 16
      %v443 = vrot.slane %v441, 7
      %v444 = vshll.u32 %v418, 16
      %v446 = vor.u32 %v443, %v444
      %v447 = vrot.slane %v443, 4
      %v449 = vshrl.u32 %v419, 16
      %v451 = vrot.slane %v449, 7
      %v452 = vshll.u32 %v419, 16
      %v454 = vor.u32 %v451, %v452
      %v455 = vrot.slane %v451, 4
      %v457 = vshrl.u32 %v420, 16
      %v459 = vrot.slane %v457, 7
      %v460 = vshll.u32 %v420, 16
      %v462 = vor.u32 %v459, %v460
      %v463 = vrot.slane %v459, 4
      %v465 = vshrl.u32 %v421, 16
      %v467 = vrot.slane %v465, 7
      %v468 = vshll.u32 %v421, 16
      %v470 = vor.u32 %v467, %v468
      %v471 = vrot.slane %v467, 4
      %v473 = vshrl.u32 %v422, 16
      %v475 = vrot.slane %v473, 7
      %v476 = vshll.u32 %v422, 16
      %v478 = vor.u32 %v475, %v476
      %v479 = vrot.slane %v475, 4
      %v481 = vshrl.u32 %v423, 16
      %v483 = vrot.slane %v481, 7
      %v484 = vshll.u32 %v423, 16
      %v486 = vor.u32 %v483, %v484
      %v487 = vrot.slane %v483, 4
      %s504 = scalar_lea.vmem [#allocation2], 8
      %vm505 = vcmask 1043456
      %vm506 = vmand %vm505, %vm368
      %v507 = vld [vmem:[%s504] sm:$0xf]
      %v508 = vsel %vm506, %v430, %v507
      %509 = vst [vmem:[%s504] sm:$0xf] %v508
      %v510 = vld [vmem:[%s504 + $0x4] sm:$0x1]
      %v511 = vsel %vm337, %v431, %v510
      %512 = vst [vmem:[%s504 + $0x4] sm:$0x1] %v511
      %v513 = vld [vmem:[%s504 + $0x8] sm:$0xf]
      %v514 = vsel %vm506, %v438, %v513
      %515 = vst [vmem:[%s504 + $0x8] sm:$0xf] %v514
      %v516 = vld [vmem:[%s504 + $0xc] sm:$0x1]
      %v517 = vsel %vm337, %v439, %v516
      %518 = vst [vmem:[%s504 + $0xc] sm:$0x1] %v517
      %v519 = vld [vmem:[%s504 + $0x10] sm:$0xf]
      %v520 = vsel %vm506, %v446, %v519
      %521 = vst [vmem:[%s504 + $0x10] sm:$0xf] %v520
      %v522 = vld [vmem:[%s504 + $0x14] sm:$0x1]
      %v523 = vsel %vm337, %v447, %v522
      %524 = vst [vmem:[%s504 + $0x14] sm:$0x1] %v523
      %v525 = vld [vmem:[%s504 + $0x18] sm:$0xf]
      %v526 = vsel %vm506, %v454, %v525
      %527 = vst [vmem:[%s504 + $0x18] sm:$0xf] %v526
      %v528 = vld [vmem:[%s504 + $0x1c] sm:$0x1]
      %v529 = vsel %vm337, %v455, %v528
      %530 = vst [vmem:[%s504 + $0x1c] sm:$0x1] %v529
      %v531 = vld [vmem:[%s504 + $0x20] sm:$0xf]
      %v532 = vsel %vm506, %v462, %v531
      %533 = vst [vmem:[%s504 + $0x20] sm:$0xf] %v532
      %v534 = vld [vmem:[%s504 + $0x24] sm:$0x1]
      %v535 = vsel %vm337, %v463, %v534
      %536 = vst [vmem:[%s504 + $0x24] sm:$0x1] %v535
      %v537 = vld [vmem:[%s504 + $0x28] sm:$0xf]
      %v538 = vsel %vm506, %v470, %v537
      %539 = vst [vmem:[%s504 + $0x28] sm:$0xf] %v538
      %v540 = vld [vmem:[%s504 + $0x2c] sm:$0x1]
      %v541 = vsel %vm337, %v471, %v540
      %542 = vst [vmem:[%s504 + $0x2c] sm:$0x1] %v541
      %v543 = vld [vmem:[%s504 + $0x30] sm:$0xf]
      %v544 = vsel %vm506, %v478, %v543
      %545 = vst [vmem:[%s504 + $0x30] sm:$0xf] %v544
      %v546 = vld [vmem:[%s504 + $0x34] sm:$0x1]
      %v547 = vsel %vm337, %v479, %v546
      %548 = vst [vmem:[%s504 + $0x34] sm:$0x1] %v547
      %v549 = vld [vmem:[%s504 + $0x38] sm:$0xf]
      %v550 = vsel %vm506, %v486, %v549
      %551 = vst [vmem:[%s504 + $0x38] sm:$0xf] %v550
      %v552 = vld [vmem:[%s504 + $0x3c] sm:$0x1]
      %v553 = vsel %vm337, %v487, %v552
      %554 = vst [vmem:[%s504 + $0x3c] sm:$0x1] %v553
      %v555 = vld [vmem:[#allocation2] sm:$0xf]
      %v556 = vld [vmem:[#allocation2 + $0x8] sm:$0xf]
      %v557 = vld [vmem:[#allocation2 + $0x10] sm:$0xf]
      %v558 = vld [vmem:[#allocation2 + $0x18] sm:$0xf]
      %v559 = vld [vmem:[#allocation2 + $0x20] sm:$0xf]
      %v560 = vld [vmem:[#allocation2 + $0x28] sm:$0xf]
      %v561 = vld [vmem:[#allocation2 + $0x30] sm:$0xf]
      %v562 = vld [vmem:[#allocation2 + $0x38] sm:$0xf]
      %563 = vst [vmem:[#allocation3] sm:$0xf] %v555
      %564 = vst [vmem:[#allocation3 + $0x24] sm:$0xf] %v556
      %565 = vst [vmem:[#allocation3 + $0x48] sm:$0xf] %v557
      %566 = vst [vmem:[#allocation3 + $0x6c] sm:$0xf] %v558
      %567 = vst [vmem:[#allocation3 + $0x90] sm:$0xf] %v559
      %568 = vst [vmem:[#allocation3 + $0xb4] sm:$0xf] %v560
      %569 = vst [vmem:[#allocation3 + $0xd8] sm:$0xf] %v561
      %570 = vst [vmem:[#allocation3 + $0xfc] sm:$0xf] %v562
      %v571 = vld [vmem:[#allocation2] sm:$0xf]
      %v572 = vld [vmem:[#allocation2 + $0x4] sm:$0x1]
      %v573 = vld [vmem:[#allocation2 + $0x8] sm:$0xf]
      %v574 = vld [vmem:[#allocation2 + $0xc] sm:$0x1]
      %v575 = vld [vmem:[#allocation2 + $0x10] sm:$0xf]
      %v576 = vld [vmem:[#allocation2 + $0x14] sm:$0x1]
      %v577 = vld [vmem:[#allocation2 + $0x18] sm:$0xf]
      %v578 = vld [vmem:[#allocation2 + $0x1c] sm:$0x1]
      %v579 = vld [vmem:[#allocation2 + $0x20] sm:$0xf]
      %v580 = vld [vmem:[#allocation2 + $0x24] sm:$0x1]
      %v581 = vld [vmem:[#allocation2 + $0x28] sm:$0xf]
      %v582 = vld [vmem:[#allocation2 + $0x2c] sm:$0x1]
      %v583 = vld [vmem:[#allocation2 + $0x30] sm:$0xf]
      %v584 = vld [vmem:[#allocation2 + $0x34] sm:$0x1]
      %v585 = vld [vmem:[#allocation2 + $0x38] sm:$0xf]
      %v586 = vld [vmem:[#allocation2 + $0x3c] sm:$0x1]
      %vm587 = vsmask.f32 3328
      %vm588 = vsmask.f32 7440
      %vm589 = vmor %vm587, %vm588
      %v591 = vshrl.u32 %v571, 16
      %v593 = vrot.slane %v591, 4
      %v594 = vshll.u32 %v571, 16
      %v596 = vrot.slane %v594, 5
      %v597 = vor.u32 %v593, %v596
      %v598 = vrot.slane %v597, 4
      %v600 = vshll.u32 %v572, 16
      %v602 = vrot.slane %v600, 5
      %v603 = vsel %vm589, %v598, %v602
      %v605 = vshrl.u32 %v573, 16
      %v607 = vrot.slane %v605, 4
      %v608 = vshll.u32 %v573, 16
      %v610 = vrot.slane %v608, 5
      %v611 = vor.u32 %v607, %v610
      %v612 = vrot.slane %v611, 4
      %v614 = vshll.u32 %v574, 16
      %v616 = vrot.slane %v614, 5
      %v617 = vsel %vm589, %v612, %v616
      %v619 = vshrl.u32 %v575, 16
      %v621 = vrot.slane %v619, 4
      %v622 = vshll.u32 %v575, 16
      %v624 = vrot.slane %v622, 5
      %v625 = vor.u32 %v621, %v624
      %v626 = vrot.slane %v625, 4
      %v628 = vshll.u32 %v576, 16
      %v630 = vrot.slane %v628, 5
      %v631 = vsel %vm589, %v626, %v630
      %v633 = vshrl.u32 %v577, 16
      %v635 = vrot.slane %v633, 4
      %v636 = vshll.u32 %v577, 16
      %v638 = vrot.slane %v636, 5
      %v639 = vor.u32 %v635, %v638
      %v640 = vrot.slane %v639, 4
      %v642 = vshll.u32 %v578, 16
      %v644 = vrot.slane %v642, 5
      %v645 = vsel %vm589, %v640, %v644
      %v647 = vshrl.u32 %v579, 16
      %v649 = vrot.slane %v647, 4
      %v650 = vshll.u32 %v579, 16
      %v652 = vrot.slane %v650, 5
      %v653 = vor.u32 %v649, %v652
      %v654 = vrot.slane %v653, 4
      %v656 = vshll.u32 %v580, 16
      %v658 = vrot.slane %v656, 5
      %v659 = vsel %vm589, %v654, %v658
      %v661 = vshrl.u32 %v581, 16
      %v663 = vrot.slane %v661, 4
      %v664 = vshll.u32 %v581, 16
      %v666 = vrot.slane %v664, 5
      %v667 = vor.u32 %v663, %v666
      %v668 = vrot.slane %v667, 4
      %v670 = vshll.u32 %v582, 16
      %v672 = vrot.slane %v670, 5
      %v673 = vsel %vm589, %v668, %v672
      %v675 = vshrl.u32 %v583, 16
      %v677 = vrot.slane %v675, 4
      %v678 = vshll.u32 %v583, 16
      %v680 = vrot.slane %v678, 5
      %v681 = vor.u32 %v677, %v680
      %v682 = vrot.slane %v681, 4
      %v684 = vshll.u32 %v584, 16
      %v686 = vrot.slane %v684, 5
      %v687 = vsel %vm589, %v682, %v686
      %v689 = vshrl.u32 %v585, 16
      %v691 = vrot.slane %v689, 4
      %v692 = vshll.u32 %v585, 16
      %v694 = vrot.slane %v692, 5
      %v695 = vor.u32 %v691, %v694
      %v696 = vrot.slane %v695, 4
      %v698 = vshll.u32 %v586, 16
      %v700 = vrot.slane %v698, 5
      %v701 = vsel %vm589, %v696, %v700
      %710 = vst [vmem:[#allocation3 + $0x4] sm:$0xf] %v603
      %711 = vst [vmem:[#allocation3 + $0x28] sm:$0xf] %v617
      %712 = vst [vmem:[#allocation3 + $0x4c] sm:$0xf] %v631
      %713 = vst [vmem:[#allocation3 + $0x70] sm:$0xf] %v645
      %714 = vst [vmem:[#allocation3 + $0x94] sm:$0xf] %v659
      %715 = vst [vmem:[#allocation3 + $0xb8] sm:$0xf] %v673
      %716 = vst [vmem:[#allocation3 + $0xdc] sm:$0xf] %v687
      %717 = vst [vmem:[#allocation3 + $0x100] sm:$0xf] %v701
      %v718 = vld [vmem:[#allocation2] sm:$0xe]
      %v719 = vld [vmem:[#allocation2 + $0x4] sm:$0x1]
      %v720 = vld [vmem:[#allocation2 + $0x8] sm:$0xe]
      %v721 = vld [vmem:[#allocation2 + $0xc] sm:$0x1]
      %v722 = vld [vmem:[#allocation2 + $0x10] sm:$0xe]
      %v723 = vld [vmem:[#allocation2 + $0x14] sm:$0x1]
      %v724 = vld [vmem:[#allocation2 + $0x18] sm:$0xe]
      %v725 = vld [vmem:[#allocation2 + $0x1c] sm:$0x1]
      %v726 = vld [vmem:[#allocation2 + $0x20] sm:$0xe]
      %v727 = vld [vmem:[#allocation2 + $0x24] sm:$0x1]
      %v728 = vld [vmem:[#allocation2 + $0x28] sm:$0xe]
      %v729 = vld [vmem:[#allocation2 + $0x2c] sm:$0x1]
      %v730 = vld [vmem:[#allocation2 + $0x30] sm:$0xe]
      %v731 = vld [vmem:[#allocation2 + $0x34] sm:$0x1]
      %v732 = vld [vmem:[#allocation2 + $0x38] sm:$0xe]
      %v733 = vld [vmem:[#allocation2 + $0x3c] sm:$0x1]
      %vm750 = vcmask 1042432
      %vm751 = vcmask 1046532
      %vm752 = vmor %vm750, %vm751
      %v753 = vrot.slane %v718, 5
      %v754 = vrot.slane %v753, 4
      %v755 = vrot.slane %v719, 5
      %v756 = vsel %vm752, %v754, %v755
      %v757 = vrot.slane %v720, 5
      %v758 = vrot.slane %v757, 4
      %v759 = vrot.slane %v721, 5
      %v760 = vsel %vm752, %v758, %v759
      %v761 = vrot.slane %v722, 5
      %v762 = vrot.slane %v761, 4
      %v763 = vrot.slane %v723, 5
      %v764 = vsel %vm752, %v762, %v763
      %v765 = vrot.slane %v724, 5
      %v766 = vrot.slane %v765, 4
      %v767 = vrot.slane %v725, 5
      %v768 = vsel %vm752, %v766, %v767
      %v769 = vrot.slane %v726, 5
      %v770 = vrot.slane %v769, 4
      %v771 = vrot.slane %v727, 5
      %v772 = vsel %vm752, %v770, %v771
      %v773 = vrot.slane %v728, 5
      %v774 = vrot.slane %v773, 4
      %v775 = vrot.slane %v729, 5
      %v776 = vsel %vm752, %v774, %v775
      %v777 = vrot.slane %v730, 5
      %v778 = vrot.slane %v777, 4
      %v779 = vrot.slane %v731, 5
      %v780 = vsel %vm752, %v778, %v779
      %v781 = vrot.slane %v732, 5
      %v782 = vrot.slane %v781, 4
      %v783 = vrot.slane %v733, 5
      %v784 = vsel %vm752, %v782, %v783
      %793 = vst [vmem:[#allocation3 + $0x8] sm:$0xf] %v756
      %794 = vst [vmem:[#allocation3 + $0x2c] sm:$0xf] %v760
      %795 = vst [vmem:[#allocation3 + $0x50] sm:$0xf] %v764
      %796 = vst [vmem:[#allocation3 + $0x74] sm:$0xf] %v768
      %797 = vst [vmem:[#allocation3 + $0x98] sm:$0xf] %v772
      %798 = vst [vmem:[#allocation3 + $0xbc] sm:$0xf] %v776
      %799 = vst [vmem:[#allocation3 + $0xe0] sm:$0xf] %v780
      %800 = vst [vmem:[#allocation3 + $0x104] sm:$0xf] %v784
      %v801 = vld [vmem:[%s504] sm:$0xf]
      %v802 = vld [vmem:[%s504 + $0x8] sm:$0xf]
      %v803 = vld [vmem:[%s504 + $0x10] sm:$0xf]
      %v804 = vld [vmem:[%s504 + $0x18] sm:$0xf]
      %v805 = vld [vmem:[%s504 + $0x20] sm:$0xf]
      %v806 = vld [vmem:[%s504 + $0x28] sm:$0xf]
      %v807 = vld [vmem:[%s504 + $0x30] sm:$0xf]
      %v808 = vld [vmem:[%s504 + $0x38] sm:$0xf]
      %809 = vst [vmem:[#allocation3 + $0xc] sm:$0xf] %v801
      %810 = vst [vmem:[#allocation3 + $0x30] sm:$0xf] %v802
      %811 = vst [vmem:[#allocation3 + $0x54] sm:$0xf] %v803
      %812 = vst [vmem:[#allocation3 + $0x78] sm:$0xf] %v804
      %813 = vst [vmem:[#allocation3 + $0x9c] sm:$0xf] %v805
      %814 = vst [vmem:[#allocation3 + $0xc0] sm:$0xf] %v806
      %815 = vst [vmem:[#allocation3 + $0xe4] sm:$0xf] %v807
      %816 = vst [vmem:[#allocation3 + $0x108] sm:$0xf] %v808
      %v817 = vld [vmem:[%s504] sm:$0xf]
      %v818 = vld [vmem:[%s504 + $0x4] sm:$0x1]
      %v819 = vld [vmem:[%s504 + $0x8] sm:$0xf]
      %v820 = vld [vmem:[%s504 + $0xc] sm:$0x1]
      %v821 = vld [vmem:[%s504 + $0x10] sm:$0xf]
      %v822 = vld [vmem:[%s504 + $0x14] sm:$0x1]
      %v823 = vld [vmem:[%s504 + $0x18] sm:$0xf]
      %v824 = vld [vmem:[%s504 + $0x1c] sm:$0x1]
      %v825 = vld [vmem:[%s504 + $0x20] sm:$0xf]
      %v826 = vld [vmem:[%s504 + $0x24] sm:$0x1]
      %v827 = vld [vmem:[%s504 + $0x28] sm:$0xf]
      %v828 = vld [vmem:[%s504 + $0x2c] sm:$0x1]
      %v829 = vld [vmem:[%s504 + $0x30] sm:$0xf]
      %v830 = vld [vmem:[%s504 + $0x34] sm:$0x1]
      %v831 = vld [vmem:[%s504 + $0x38] sm:$0xf]
      %v832 = vld [vmem:[%s504 + $0x3c] sm:$0x1]
      %v834 = vshrl.u32 %v817, 16
      %v836 = vrot.slane %v834, 4
      %v837 = vshll.u32 %v817, 16
      %v839 = vrot.slane %v837, 5
      %v840 = vor.u32 %v836, %v839
      %v841 = vrot.slane %v840, 4
      %v843 = vshll.u32 %v818, 16
      %v845 = vrot.slane %v843, 5
      %v846 = vsel %vm589, %v841, %v845
      %v848 = vshrl.u32 %v819, 16
      %v850 = vrot.slane %v848, 4
      %v851 = vshll.u32 %v819, 16
      %v853 = vrot.slane %v851, 5
      %v854 = vor.u32 %v850, %v853
      %v855 = vrot.slane %v854, 4
      %v857 = vshll.u32 %v820, 16
      %v859 = vrot.slane %v857, 5
      %v860 = vsel %vm589, %v855, %v859
      %v862 = vshrl.u32 %v821, 16
      %v864 = vrot.slane %v862, 4
      %v865 = vshll.u32 %v821, 16
      %v867 = vrot.slane %v865, 5
      %v868 = vor.u32 %v864, %v867
      %v869 = vrot.slane %v868, 4
      %v871 = vshll.u32 %v822, 16
      %v873 = vrot.slane %v871, 5
      %v874 = vsel %vm589, %v869, %v873
      %v876 = vshrl.u32 %v823, 16
      %v878 = vrot.slane %v876, 4
      %v879 = vshll.u32 %v823, 16
      %v881 = vrot.slane %v879, 5
      %v882 = vor.u32 %v878, %v881
      %v883 = vrot.slane %v882, 4
      %v885 = vshll.u32 %v824, 16
      %v887 = vrot.slane %v885, 5
      %v888 = vsel %vm589, %v883, %v887
      %v890 = vshrl.u32 %v825, 16
      %v892 = vrot.slane %v890, 4
      %v893 = vshll.u32 %v825, 16
      %v895 = vrot.slane %v893, 5
      %v896 = vor.u32 %v892, %v895
      %v897 = vrot.slane %v896, 4
      %v899 = vshll.u32 %v826, 16
      %v901 = vrot.slane %v899, 5
      %v902 = vsel %vm589, %v897, %v901
      %v904 = vshrl.u32 %v827, 16
      %v906 = vrot.slane %v904, 4
      %v907 = vshll.u32 %v827, 16
      %v909 = vrot.slane %v907, 5
      %v910 = vor.u32 %v906, %v909
      %v911 = vrot.slane %v910, 4
      %v913 = vshll.u32 %v828, 16
      %v915 = vrot.slane %v913, 5
      %v916 = vsel %vm589, %v911, %v915
      %v918 = vshrl.u32 %v829, 16
      %v920 = vrot.slane %v918, 4
      %v921 = vshll.u32 %v829, 16
      %v923 = vrot.slane %v921, 5
      %v924 = vor.u32 %v920, %v923
      %v925 = vrot.slane %v924, 4
      %v927 = vshll.u32 %v830, 16
      %v929 = vrot.slane %v927, 5
      %v930 = vsel %vm589, %v925, %v929
      %v932 = vshrl.u32 %v831, 16
      %v934 = vrot.slane %v932, 4
      %v935 = vshll.u32 %v831, 16
      %v937 = vrot.slane %v935, 5
      %v938 = vor.u32 %v934, %v937
      %v939 = vrot.slane %v938, 4
      %v941 = vshll.u32 %v832, 16
      %v943 = vrot.slane %v941, 5
      %v944 = vsel %vm589, %v939, %v943
      %953 = vst [vmem:[#allocation3 + $0x10] sm:$0xf] %v846
      %954 = vst [vmem:[#allocation3 + $0x34] sm:$0xf] %v860
      %955 = vst [vmem:[#allocation3 + $0x58] sm:$0xf] %v874
      %956 = vst [vmem:[#allocation3 + $0x7c] sm:$0xf] %v888
      %957 = vst [vmem:[#allocation3 + $0xa0] sm:$0xf] %v902
      %958 = vst [vmem:[#allocation3 + $0xc4] sm:$0xf] %v916
      %959 = vst [vmem:[#allocation3 + $0xe8] sm:$0xf] %v930
      %960 = vst [vmem:[#allocation3 + $0x10c] sm:$0xf] %v944
      %v961 = vld [vmem:[%s504] sm:$0xe]
      %v962 = vld [vmem:[%s504 + $0x4] sm:$0x1]
      %v963 = vld [vmem:[%s504 + $0x8] sm:$0xe]
      %v964 = vld [vmem:[%s504 + $0xc] sm:$0x1]
      %v965 = vld [vmem:[%s504 + $0x10] sm:$0xe]
      %v966 = vld [vmem:[%s504 + $0x14] sm:$0x1]
      %v967 = vld [vmem:[%s504 + $0x18] sm:$0xe]
      %v968 = vld [vmem:[%s504 + $0x1c] sm:$0x1]
      %v969 = vld [vmem:[%s504 + $0x20] sm:$0xe]
      %v970 = vld [vmem:[%s504 + $0x24] sm:$0x1]
      %v971 = vld [vmem:[%s504 + $0x28] sm:$0xe]
      %v972 = vld [vmem:[%s504 + $0x2c] sm:$0x1]
      %v973 = vld [vmem:[%s504 + $0x30] sm:$0xe]
      %v974 = vld [vmem:[%s504 + $0x34] sm:$0x1]
      %v975 = vld [vmem:[%s504 + $0x38] sm:$0xe]
      %v976 = vld [vmem:[%s504 + $0x3c] sm:$0x1]
      %v993 = vrot.slane %v961, 5
      %v994 = vrot.slane %v993, 4
      %v995 = vrot.slane %v962, 5
      %v996 = vsel %vm752, %v994, %v995
      %v997 = vrot.slane %v963, 5
      %v998 = vrot.slane %v997, 4
      %v999 = vrot.slane %v964, 5
      %v1000 = vsel %vm752, %v998, %v999
      %v1001 = vrot.slane %v965, 5
      %v1002 = vrot.slane %v1001, 4
      %v1003 = vrot.slane %v966, 5
      %v1004 = vsel %vm752, %v1002, %v1003
      %v1005 = vrot.slane %v967, 5
      %v1006 = vrot.slane %v1005, 4
      %v1007 = vrot.slane %v968, 5
      %v1008 = vsel %vm752, %v1006, %v1007
      %v1009 = vrot.slane %v969, 5
      %v1010 = vrot.slane %v1009, 4
      %v1011 = vrot.slane %v970, 5
      %v1012 = vsel %vm752, %v1010, %v1011
      %v1013 = vrot.slane %v971, 5
      %v1014 = vrot.slane %v1013, 4
      %v1015 = vrot.slane %v972, 5
      %v1016 = vsel %vm752, %v1014, %v1015
      %v1017 = vrot.slane %v973, 5
      %v1018 = vrot.slane %v1017, 4
      %v1019 = vrot.slane %v974, 5
      %v1020 = vsel %vm752, %v1018, %v1019
      %v1021 = vrot.slane %v975, 5
      %v1022 = vrot.slane %v1021, 4
      %v1023 = vrot.slane %v976, 5
      %v1024 = vsel %vm752, %v1022, %v1023
      %1033 = vst [vmem:[#allocation3 + $0x14] sm:$0xf] %v996
      %1034 = vst [vmem:[#allocation3 + $0x38] sm:$0xf] %v1000
      %1035 = vst [vmem:[#allocation3 + $0x5c] sm:$0xf] %v1004
      %1036 = vst [vmem:[#allocation3 + $0x80] sm:$0xf] %v1008
      %1037 = vst [vmem:[#allocation3 + $0xa4] sm:$0xf] %v1012
      %1038 = vst [vmem:[#allocation3 + $0xc8] sm:$0xf] %v1016
      %1039 = vst [vmem:[#allocation3 + $0xec] sm:$0xf] %v1020
      %1040 = vst [vmem:[#allocation3 + $0x110] sm:$0xf] %v1024
      %s1041 = scalar_lea.vmem [#allocation2], 16
      %v1042 = vld [vmem:[%s1041] sm:$0xf]
      %v1043 = vld [vmem:[%s1041 + $0x8] sm:$0xf]
      %v1044 = vld [vmem:[%s1041 + $0x10] sm:$0xf]
      %v1045 = vld [vmem:[%s1041 + $0x18] sm:$0xf]
      %v1046 = vld [vmem:[%s1041 + $0x20] sm:$0xf]
      %v1047 = vld [vmem:[%s1041 + $0x28] sm:$0xf]
      %v1048 = vld [vmem:[%s1041 + $0x30] sm:$0xf]
      %v1049 = vld [vmem:[%s1041 + $0x38] sm:$0xf]
      %1050 = vst [vmem:[#allocation3 + $0x18] sm:$0xf] %v1042
      %1051 = vst [vmem:[#allocation3 + $0x3c] sm:$0xf] %v1043
      %1052 = vst [vmem:[#allocation3 + $0x60] sm:$0xf] %v1044
      %1053 = vst [vmem:[#allocation3 + $0x84] sm:$0xf] %v1045
      %1054 = vst [vmem:[#allocation3 + $0xa8] sm:$0xf] %v1046
      %1055 = vst [vmem:[#allocation3 + $0xcc] sm:$0xf] %v1047
      %1056 = vst [vmem:[#allocation3 + $0xf0] sm:$0xf] %v1048
      %1057 = vst [vmem:[#allocation3 + $0x114] sm:$0xf] %v1049
      %v1058 = vld [vmem:[%s1041] sm:$0xf]
      %v1059 = vld [vmem:[%s1041 + $0x4] sm:$0x1]
      %v1060 = vld [vmem:[%s1041 + $0x8] sm:$0xf]
      %v1061 = vld [vmem:[%s1041 + $0xc] sm:$0x1]
      %v1062 = vld [vmem:[%s1041 + $0x10] sm:$0xf]
      %v1063 = vld [vmem:[%s1041 + $0x14] sm:$0x1]
      %v1064 = vld [vmem:[%s1041 + $0x18] sm:$0xf]
      %v1065 = vld [vmem:[%s1041 + $0x1c] sm:$0x1]
      %v1066 = vld [vmem:[%s1041 + $0x20] sm:$0xf]
      %v1067 = vld [vmem:[%s1041 + $0x24] sm:$0x1]
      %v1068 = vld [vmem:[%s1041 + $0x28] sm:$0xf]
      %v1069 = vld [vmem:[%s1041 + $0x2c] sm:$0x1]
      %v1070 = vld [vmem:[%s1041 + $0x30] sm:$0xf]
      %v1071 = vld [vmem:[%s1041 + $0x34] sm:$0x1]
      %v1072 = vld [vmem:[%s1041 + $0x38] sm:$0xf]
      %v1073 = vld [vmem:[%s1041 + $0x3c] sm:$0x1]
      %v1075 = vshrl.u32 %v1058, 16
      %v1077 = vrot.slane %v1075, 4
      %v1078 = vshll.u32 %v1058, 16
      %v1080 = vrot.slane %v1078, 5
      %v1081 = vor.u32 %v1077, %v1080
      %v1082 = vrot.slane %v1081, 4
      %v1084 = vshll.u32 %v1059, 16
      %v1086 = vrot.slane %v1084, 5
      %v1087 = vsel %vm589, %v1082, %v1086
      %v1089 = vshrl.u32 %v1060, 16
      %v1091 = vrot.slane %v1089, 4
      %v1092 = vshll.u32 %v1060, 16
      %v1094 = vrot.slane %v1092, 5
      %v1095 = vor.u32 %v1091, %v1094
      %v1096 = vrot.slane %v1095, 4
      %v1098 = vshll.u32 %v1061, 16
      %v1100 = vrot.slane %v1098, 5
      %v1101 = vsel %vm589, %v1096, %v1100
      %v1103 = vshrl.u32 %v1062, 16
      %v1105 = vrot.slane %v1103, 4
      %v1106 = vshll.u32 %v1062, 16
      %v1108 = vrot.slane %v1106, 5
      %v1109 = vor.u32 %v1105, %v1108
      %v1110 = vrot.slane %v1109, 4
      %v1112 = vshll.u32 %v1063, 16
      %v1114 = vrot.slane %v1112, 5
      %v1115 = vsel %vm589, %v1110, %v1114
      %v1117 = vshrl.u32 %v1064, 16
      %v1119 = vrot.slane %v1117, 4
      %v1120 = vshll.u32 %v1064, 16
      %v1122 = vrot.slane %v1120, 5
      %v1123 = vor.u32 %v1119, %v1122
      %v1124 = vrot.slane %v1123, 4
      %v1126 = vshll.u32 %v1065, 16
      %v1128 = vrot.slane %v1126, 5
      %v1129 = vsel %vm589, %v1124, %v1128
      %v1131 = vshrl.u32 %v1066, 16
      %v1133 = vrot.slane %v1131, 4
      %v1134 = vshll.u32 %v1066, 16
      %v1136 = vrot.slane %v1134, 5
      %v1137 = vor.u32 %v1133, %v1136
      %v1138 = vrot.slane %v1137, 4
      %v1140 = vshll.u32 %v1067, 16
      %v1142 = vrot.slane %v1140, 5
      %v1143 = vsel %vm589, %v1138, %v1142
      %v1145 = vshrl.u32 %v1068, 16
      %v1147 = vrot.slane %v1145, 4
      %v1148 = vshll.u32 %v1068, 16
      %v1150 = vrot.slane %v1148, 5
      %v1151 = vor.u32 %v1147, %v1150
      %v1152 = vrot.slane %v1151, 4
      %v1154 = vshll.u32 %v1069, 16
      %v1156 = vrot.slane %v1154, 5
      %v1157 = vsel %vm589, %v1152, %v1156
      %v1159 = vshrl.u32 %v1070, 16
      %v1161 = vrot.slane %v1159, 4
      %v1162 = vshll.u32 %v1070, 16
      %v1164 = vrot.slane %v1162, 5
      %v1165 = vor.u32 %v1161, %v1164
      %v1166 = vrot.slane %v1165, 4
      %v1168 = vshll.u32 %v1071, 16
      %v1170 = vrot.slane %v1168, 5
      %v1171 = vsel %vm589, %v1166, %v1170
      %v1173 = vshrl.u32 %v1072, 16
      %v1175 = vrot.slane %v1173, 4
      %v1176 = vshll.u32 %v1072, 16
      %v1178 = vrot.slane %v1176, 5
      %v1179 = vor.u32 %v1175, %v1178
      %v1180 = vrot.slane %v1179, 4
      %v1182 = vshll.u32 %v1073, 16
      %v1184 = vrot.slane %v1182, 5
      %v1185 = vsel %vm589, %v1180, %v1184
      %1194 = vst [vmem:[#allocation3 + $0x1c] sm:$0xf] %v1087
      %1195 = vst [vmem:[#allocation3 + $0x40] sm:$0xf] %v1101
      %1196 = vst [vmem:[#allocation3 + $0x64] sm:$0xf] %v1115
      %1197 = vst [vmem:[#allocation3 + $0x88] sm:$0xf] %v1129
      %1198 = vst [vmem:[#allocation3 + $0xac] sm:$0xf] %v1143
      %1199 = vst [vmem:[#allocation3 + $0xd0] sm:$0xf] %v1157
      %1200 = vst [vmem:[#allocation3 + $0xf4] sm:$0xf] %v1171
      %1201 = vst [vmem:[#allocation3 + $0x118] sm:$0xf] %v1185
      %v1202 = vld [vmem:[%s1041] sm:$0xe]
      %v1203 = vld [vmem:[%s1041 + $0x4] sm:$0x1]
      %v1204 = vld [vmem:[%s1041 + $0x8] sm:$0xe]
      %v1205 = vld [vmem:[%s1041 + $0xc] sm:$0x1]
      %v1206 = vld [vmem:[%s1041 + $0x10] sm:$0xe]
      %v1207 = vld [vmem:[%s1041 + $0x14] sm:$0x1]
      %v1208 = vld [vmem:[%s1041 + $0x18] sm:$0xe]
      %v1209 = vld [vmem:[%s1041 + $0x1c] sm:$0x1]
      %v1210 = vld [vmem:[%s1041 + $0x20] sm:$0xe]
      %v1211 = vld [vmem:[%s1041 + $0x24] sm:$0x1]
      %v1212 = vld [vmem:[%s1041 + $0x28] sm:$0xe]
      %v1213 = vld [vmem:[%s1041 + $0x2c] sm:$0x1]
      %v1214 = vld [vmem:[%s1041 + $0x30] sm:$0xe]
      %v1215 = vld [vmem:[%s1041 + $0x34] sm:$0x1]
      %v1216 = vld [vmem:[%s1041 + $0x38] sm:$0xe]
      %v1217 = vld [vmem:[%s1041 + $0x3c] sm:$0x1]
      %v1234 = vrot.slane %v1202, 5
      %v1235 = vrot.slane %v1234, 4
      %v1236 = vrot.slane %v1203, 5
      %v1237 = vsel %vm752, %v1235, %v1236
      %v1238 = vrot.slane %v1204, 5
      %v1239 = vrot.slane %v1238, 4
      %v1240 = vrot.slane %v1205, 5
      %v1241 = vsel %vm752, %v1239, %v1240
      %v1242 = vrot.slane %v1206, 5
      %v1243 = vrot.slane %v1242, 4
      %v1244 = vrot.slane %v1207, 5
      %v1245 = vsel %vm752, %v1243, %v1244
      %v1246 = vrot.slane %v1208, 5
      %v1247 = vrot.slane %v1246, 4
      %v1248 = vrot.slane %v1209, 5
      %v1249 = vsel %vm752, %v1247, %v1248
      %v1250 = vrot.slane %v1210, 5
      %v1251 = vrot.slane %v1250, 4
      %v1252 = vrot.slane %v1211, 5
      %v1253 = vsel %vm752, %v1251, %v1252
      %v1254 = vrot.slane %v1212, 5
      %v1255 = vrot.slane %v1254, 4
      %v1256 = vrot.slane %v1213, 5
      %v1257 = vsel %vm752, %v1255, %v1256
      %v1258 = vrot.slane %v1214, 5
      %v1259 = vrot.slane %v1258, 4
      %v1260 = vrot.slane %v1215, 5
      %v1261 = vsel %vm752, %v1259, %v1260
      %v1262 = vrot.slane %v1216, 5
      %v1263 = vrot.slane %v1262, 4
      %v1264 = vrot.slane %v1217, 5
      %v1265 = vsel %vm752, %v1263, %v1264
      %1274 = vst [vmem:[#allocation3 + $0x20] sm:$0xf] %v1237
      %1275 = vst [vmem:[#allocation3 + $0x44] sm:$0xf] %v1241
      %1276 = vst [vmem:[#allocation3 + $0x68] sm:$0xf] %v1245
      %1277 = vst [vmem:[#allocation3 + $0x8c] sm:$0xf] %v1249
      %1278 = vst [vmem:[#allocation3 + $0xb0] sm:$0xf] %v1253
      %1279 = vst [vmem:[#allocation3 + $0xd4] sm:$0xf] %v1257
      %1280 = vst [vmem:[#allocation3 + $0xf8] sm:$0xf] %v1261
      %1281 = vst [vmem:[#allocation3 + $0x11c] sm:$0xf] %v1265
      %v1282 = vld [vmem:[#allocation3] sm:$0xff]
      %v1283 = vld [vmem:[#allocation3 + $0x8] sm:$0xff]
      %v1284 = vld [vmem:[#allocation3 + $0x10] sm:$0xff]
      %v1285 = vld [vmem:[#allocation3 + $0x18] sm:$0xff]
      %v1286 = vld [vmem:[#allocation3 + $0x20] sm:$0xf]
      %v1287 = vld [vmem:[#allocation3 + $0x24] sm:$0xff]
      %v1288 = vld [vmem:[#allocation3 + $0x2c] sm:$0xff]
      %v1289 = vld [vmem:[#allocation3 + $0x34] sm:$0xff]
      %v1290 = vld [vmem:[#allocation3 + $0x3c] sm:$0xff]
      %v1291 = vld [vmem:[#allocation3 + $0x44] sm:$0xf]
      %v1292 = vld [vmem:[#allocation3 + $0x48] sm:$0xff]
      %v1293 = vld [vmem:[#allocation3 + $0x50] sm:$0xff]
      %v1294 = vld [vmem:[#allocation3 + $0x58] sm:$0xff]
      %v1295 = vld [vmem:[#allocation3 + $0x60] sm:$0xff]
      %v1296 = vld [vmem:[#allocation3 + $0x68] sm:$0xf]
      %v1297 = vld [vmem:[#allocation3 + $0x6c] sm:$0xff]
      %v1298 = vld [vmem:[#allocation3 + $0x74] sm:$0xff]
      %v1299 = vld [vmem:[#allocation3 + $0x7c] sm:$0xff]
      %v1300 = vld [vmem:[#allocation3 + $0x84] sm:$0xff]
      %v1301 = vld [vmem:[#allocation3 + $0x8c] sm:$0xf]
      %v1302 = vld [vmem:[#allocation3 + $0x90] sm:$0xff]
      %v1303 = vld [vmem:[#allocation3 + $0x98] sm:$0xff]
      %v1304 = vld [vmem:[#allocation3 + $0xa0] sm:$0xff]
      %v1305 = vld [vmem:[#allocation3 + $0xa8] sm:$0xff]
      %v1306 = vld [vmem:[#allocation3 + $0xb0] sm:$0xf]
      %v1307 = vld [vmem:[#allocation3 + $0xb4] sm:$0xff]
      %v1308 = vld [vmem:[#allocation3 + $0xbc] sm:$0xff]
      %v1309 = vld [vmem:[#allocation3 + $0xc4] sm:$0xff]
      %v1310 = vld [vmem:[#allocation3 + $0xcc] sm:$0xff]
      %v1311 = vld [vmem:[#allocation3 + $0xd4] sm:$0xf]
      %v1312 = vld [vmem:[#allocation3 + $0xd8] sm:$0xff]
      %v1313 = vld [vmem:[#allocation3 + $0xe0] sm:$0xff]
      %v1314 = vld [vmem:[#allocation3 + $0xe8] sm:$0xff]
      %v1315 = vld [vmem:[#allocation3 + $0xf0] sm:$0xff]
      %v1316 = vld [vmem:[#allocation3 + $0xf8] sm:$0xf]
      %v1317 = vld [vmem:[#allocation3 + $0xfc] sm:$0xff]
      %v1318 = vld [vmem:[#allocation3 + $0x104] sm:$0xff]
      %v1319 = vld [vmem:[#allocation3 + $0x10c] sm:$0xff]
      %v1320 = vld [vmem:[#allocation3 + $0x114] sm:$0xff]
      %v1321 = vld [vmem:[#allocation3 + $0x11c] sm:$0xf]
      %v1322 = vld [vmem:[%s1] sm:$0xf]
      %v1323 = vld [vmem:[%s1 + $0x4] sm:$0xf]
      %v1324 = vld [vmem:[%s1 + $0x8] sm:$0xf]
      %v1325 = vld [vmem:[%s1 + $0xc] sm:$0xf]
      %v1326 = vld [vmem:[%s1 + $0x10] sm:$0xf]
      %v1327 = vld [vmem:[%s1 + $0x14] sm:$0xf]
      %v1328 = vld [vmem:[%s1 + $0x18] sm:$0xf]
      %v1329 = vld [vmem:[%s1 + $0x1c] sm:$0xf]
      %v1330 = vld [vmem:[%s1 + $0x20] sm:$0xf]
      %v1331 = vld [vmem:[%s1 + $0x24] sm:$0xf]
      %v1332 = vld [vmem:[%s1 + $0x28] sm:$0xf]
      %v1333 = vld [vmem:[%s1 + $0x2c] sm:$0xf]
      %v1334 = vld [vmem:[%s1 + $0x30] sm:$0xf]
      %v1335 = vld [vmem:[%s1 + $0x34] sm:$0xf]
      %v1336 = vld [vmem:[%s1 + $0x38] sm:$0xf]
      %v1337 = vld [vmem:[%s1 + $0x3c] sm:$0xf]
      %v1338 = vld [vmem:[%s1 + $0x40] sm:$0xf]
      %v1339 = vld [vmem:[%s1 + $0x44] sm:$0xf]
      %v1340 = vld [vmem:[%s1 + $0x48] sm:$0xf]
      %v1341 = vld [vmem:[%s1 + $0x4c] sm:$0xf]
      %v1342 = vld [vmem:[%s1 + $0x50] sm:$0xf]
      %v1343 = vld [vmem:[%s1 + $0x54] sm:$0xf]
      %v1344 = vld [vmem:[%s1 + $0x58] sm:$0xf]
      %v1345 = vld [vmem:[%s1 + $0x5c] sm:$0xf]
      %v1346 = vld [vmem:[%s1 + $0x60] sm:$0xf]
      %v1347 = vld [vmem:[%s1 + $0x64] sm:$0xf]
      %v1348 = vld [vmem:[%s1 + $0x68] sm:$0xf]
      %v1349 = vld [vmem:[%s1 + $0x6c] sm:$0xf]
      %v1350 = vld [vmem:[%s1 + $0x70] sm:$0xf]
      %v1351 = vld [vmem:[%s1 + $0x74] sm:$0xf]
      %v1352 = vld [vmem:[%s1 + $0x78] sm:$0xf]
      %v1353 = vld [vmem:[%s1 + $0x7c] sm:$0xf]
      %v1354 = vld [vmem:[%s1 + $0x80] sm:$0xf]
      %v1355 = vld [vmem:[%s1 + $0x84] sm:$0xf]
      %v1356 = vld [vmem:[%s1 + $0x88] sm:$0xf]
      %v1357 = vld [vmem:[%s1 + $0x8c] sm:$0xf]
      %v1358 = vld [vmem:[%s1 + $0x90] sm:$0xf]
      %v1359 = vld [vmem:[%s1 + $0x94] sm:$0xf]
      %v1360 = vld [vmem:[%s1 + $0x98] sm:$0xf]
      %v1361 = vld [vmem:[%s1 + $0x9c] sm:$0xf]
      %v1362 = vld [vmem:[%s1 + $0xa0] sm:$0xf]
      %v1363 = vld [vmem:[%s1 + $0xa4] sm:$0xf]
      %v1364 = vld [vmem:[%s1 + $0xa8] sm:$0xf]
      %v1365 = vld [vmem:[%s1 + $0xac] sm:$0xf]
      %v1366 = vld [vmem:[%s1 + $0xb0] sm:$0xf]
      %v1367 = vld [vmem:[%s1 + $0xb4] sm:$0xf]
      %v1368 = vld [vmem:[%s1 + $0xb8] sm:$0xf]
      %v1369 = vld [vmem:[%s1 + $0xbc] sm:$0xf]
      %v1370 = vld [vmem:[%s1 + $0xc0] sm:$0xf]
      %v1371 = vld [vmem:[%s1 + $0xc4] sm:$0xf]
      %v1372 = vld [vmem:[%s1 + $0xc8] sm:$0xf]
      %v1373 = vld [vmem:[%s1 + $0xcc] sm:$0xf]
      %v1374 = vld [vmem:[%s1 + $0xd0] sm:$0xf]
      %v1375 = vld [vmem:[%s1 + $0xd4] sm:$0xf]
      %v1376 = vld [vmem:[%s1 + $0xd8] sm:$0xf]
      %v1377 = vld [vmem:[%s1 + $0xdc] sm:$0xf]
      %v1378 = vld [vmem:[%s1 + $0xe0] sm:$0xf]
      %v1379 = vld [vmem:[%s1 + $0xe4] sm:$0xf]
      %v1380 = vld [vmem:[%s1 + $0xe8] sm:$0xf]
      %v1381 = vld [vmem:[%s1 + $0xec] sm:$0xf]
      %v1382 = vld [vmem:[%s1 + $0xf0] sm:$0xf]
      %v1383 = vld [vmem:[%s1 + $0xf4] sm:$0xf]
      %v1384 = vld [vmem:[%s1 + $0xf8] sm:$0xf]
      %v1385 = vld [vmem:[%s1 + $0xfc] sm:$0xf]
      %v1386 = vld [vmem:[%s1 + $0x100] sm:$0xf]
      %v1387 = vld [vmem:[%s1 + $0x104] sm:$0xf]
      %v1388 = vld [vmem:[%s1 + $0x108] sm:$0xf]
      %v1389 = vld [vmem:[%s1 + $0x10c] sm:$0xf]
      %v1390 = vld [vmem:[%s1 + $0x110] sm:$0xf]
      %v1391 = vld [vmem:[%s1 + $0x114] sm:$0xf]
      %v1392 = vld [vmem:[%s1 + $0x118] sm:$0xf]
      %v1393 = vld [vmem:[%s1 + $0x11c] sm:$0xf]
      %v1394 = vld [vmem:[%s1 + $0x120] sm:$0xf]
      %v1395 = vld [vmem:[%s1 + $0x124] sm:$0xf]
      %v1396 = vld [vmem:[%s1 + $0x128] sm:$0xf]
      %v1397 = vld [vmem:[%s1 + $0x12c] sm:$0xf]
      %v1398 = vld [vmem:[%s1 + $0x130] sm:$0xf]
      %v1399 = vld [vmem:[%s1 + $0x134] sm:$0xf]
      %v1400 = vld [vmem:[%s1 + $0x138] sm:$0xf]
      %v1401 = vld [vmem:[%s1 + $0x13c] sm:$0xf]
      %v1402 = vld [vmem:[%s1 + $0x140] sm:$0xf]
      %v1403 = vld [vmem:[%s1 + $0x144] sm:$0xf]
      %v1404 = vld [vmem:[%s1 + $0x148] sm:$0xf]
      %v1405 = vld [vmem:[%s1 + $0x14c] sm:$0xf]
      %v1406 = vld [vmem:[%s1 + $0x150] sm:$0xf]
      %v1407 = vld [vmem:[%s1 + $0x154] sm:$0xf]
      %v1408 = vld [vmem:[%s1 + $0x158] sm:$0xf]
      %v1409 = vld [vmem:[%s1 + $0x15c] sm:$0xf]
      %v1410 = vld [vmem:[%s1 + $0x160] sm:$0xf]
      %v1411 = vld [vmem:[%s1 + $0x164] sm:$0xf]
      %v1412 = vld [vmem:[%s1 + $0x168] sm:$0xf]
      %v1413 = vld [vmem:[%s1 + $0x16c] sm:$0xf]
      %v1414 = vld [vmem:[%s1 + $0x170] sm:$0xf]
      %v1415 = vld [vmem:[%s1 + $0x174] sm:$0xf]
      %v1416 = vld [vmem:[%s1 + $0x178] sm:$0xf]
      %v1417 = vld [vmem:[%s1 + $0x17c] sm:$0xf]
      %v1418 = vld [vmem:[%s1 + $0x180] sm:$0xf]
      %v1419 = vld [vmem:[%s1 + $0x184] sm:$0xf]
      %v1420 = vld [vmem:[%s1 + $0x188] sm:$0xf]
      %v1421 = vld [vmem:[%s1 + $0x18c] sm:$0xf]
      %v1422 = vld [vmem:[%s1 + $0x190] sm:$0xf]
      %v1423 = vld [vmem:[%s1 + $0x194] sm:$0xf]
      %v1424 = vld [vmem:[%s1 + $0x198] sm:$0xf]
      %v1425 = vld [vmem:[%s1 + $0x19c] sm:$0xf]
      %v1426 = vld [vmem:[%s1 + $0x1a0] sm:$0xf]
      %v1427 = vld [vmem:[%s1 + $0x1a4] sm:$0xf]
      %v1428 = vld [vmem:[%s1 + $0x1a8] sm:$0xf]
      %v1429 = vld [vmem:[%s1 + $0x1ac] sm:$0xf]
      %v1430 = vld [vmem:[%s1 + $0x1b0] sm:$0xf]
      %v1431 = vld [vmem:[%s1 + $0x1b4] sm:$0xf]
      %v1432 = vld [vmem:[%s1 + $0x1b8] sm:$0xf]
      %v1433 = vld [vmem:[%s1 + $0x1bc] sm:$0xf]
      %v1434 = vld [vmem:[%s1 + $0x1c0] sm:$0xf]
      %v1435 = vld [vmem:[%s1 + $0x1c4] sm:$0xf]
      %v1436 = vld [vmem:[%s1 + $0x1c8] sm:$0xf]
      %v1437 = vld [vmem:[%s1 + $0x1cc] sm:$0xf]
      %v1438 = vld [vmem:[%s1 + $0x1d0] sm:$0xf]
      %v1439 = vld [vmem:[%s1 + $0x1d4] sm:$0xf]
      %v1440 = vld [vmem:[%s1 + $0x1d8] sm:$0xf]
      %v1441 = vld [vmem:[%s1 + $0x1dc] sm:$0xf]
      %v1442 = vld [vmem:[%s1 + $0x1e0] sm:$0xf]
      %v1443 = vld [vmem:[%s1 + $0x1e4] sm:$0xf]
      %v1444 = vld [vmem:[%s1 + $0x1e8] sm:$0xf]
      %v1445 = vld [vmem:[%s1 + $0x1ec] sm:$0xf]
      %v1446 = vld [vmem:[%s1 + $0x1f0] sm:$0xf]
      %v1447 = vld [vmem:[%s1 + $0x1f4] sm:$0xf]
      %v1448 = vld [vmem:[%s1 + $0x1f8] sm:$0xf]
      %v1449 = vld [vmem:[%s1 + $0x1fc] sm:$0xf]
      %v1450 = vld [vmem:[%s1 + $0x200] sm:$0xf]
      %v1451 = vld [vmem:[%s1 + $0x204] sm:$0xf]
      %v1452 = vld [vmem:[%s1 + $0x208] sm:$0xf]
      %v1453 = vld [vmem:[%s1 + $0x20c] sm:$0xf]
      %v1454 = vld [vmem:[%s1 + $0x210] sm:$0xf]
      %v1455 = vld [vmem:[%s1 + $0x214] sm:$0xf]
      %v1456 = vld [vmem:[%s1 + $0x218] sm:$0xf]
      %v1457 = vld [vmem:[%s1 + $0x21c] sm:$0xf]
      %v1458 = vld [vmem:[%s1 + $0x220] sm:$0xf]
      %v1459 = vld [vmem:[%s1 + $0x224] sm:$0xf]
      %v1460 = vld [vmem:[%s1 + $0x228] sm:$0xf]
      %v1461 = vld [vmem:[%s1 + $0x22c] sm:$0xf]
      %v1462 = vld [vmem:[%s1 + $0x230] sm:$0xf]
      %v1463 = vld [vmem:[%s1 + $0x234] sm:$0xf]
      %v1464 = vld [vmem:[%s1 + $0x238] sm:$0xf]
      %v1465 = vld [vmem:[%s1 + $0x23c] sm:$0xf]
      %v1466 = vld [vmem:[%s2] sm:$0x1]
      %v1468 = vlaneseq
      %v1469 = vshrl.u32 %v1468, 7
      %v1470 = vsub.s32 0, %v1469
      %v1471 = vrot.slane %v1466, %v1470
      %v1513 = vunpack.c.l.b16 %v1282
      %v1514 = vunpack.c.h.b16 %v1282
      %v1515 = vunpack.c.l.b16 %v1283
      %v1516 = vunpack.c.h.b16 %v1283
      %v1517 = vunpack.c.l.b16 %v1284
      %v1518 = vunpack.c.h.b16 %v1284
      %v1519 = vunpack.c.l.b16 %v1285
      %v1520 = vunpack.c.h.b16 %v1285
      %v1521 = vunpack.c.l.b16 %v1286
      %v1522 = vunpack.c.l.b16 %v1287
      %v1523 = vunpack.c.h.b16 %v1287
      %v1524 = vunpack.c.l.b16 %v1288
      %v1525 = vunpack.c.h.b16 %v1288
      %v1526 = vunpack.c.l.b16 %v1289
      %v1527 = vunpack.c.h.b16 %v1289
      %v1528 = vunpack.c.l.b16 %v1290
      %v1529 = vunpack.c.h.b16 %v1290
      %v1530 = vunpack.c.l.b16 %v1291
      %v1531 = vunpack.c.l.b16 %v1292
      %v1532 = vunpack.c.h.b16 %v1292
      %v1533 = vunpack.c.l.b16 %v1293
      %v1534 = vunpack.c.h.b16 %v1293
      %v1535 = vunpack.c.l.b16 %v1294
      %v1536 = vunpack.c.h.b16 %v1294
      %v1537 = vunpack.c.l.b16 %v1295
      %v1538 = vunpack.c.h.b16 %v1295
      %v1539 = vunpack.c.l.b16 %v1296
      %v1540 = vunpack.c.l.b16 %v1297
      %v1541 = vunpack.c.h.b16 %v1297
      %v1542 = vunpack.c.l.b16 %v1298
      %v1543 = vunpack.c.h.b16 %v1298
      %v1544 = vunpack.c.l.b16 %v1299
      %v1545 = vunpack.c.h.b16 %v1299
      %v1546 = vunpack.c.l.b16 %v1300
      %v1547 = vunpack.c.h.b16 %v1300
      %v1548 = vunpack.c.l.b16 %v1301
      %v1549 = vunpack.c.l.b16 %v1302
      %v1550 = vunpack.c.h.b16 %v1302
      %v1551 = vunpack.c.l.b16 %v1303
      %v1552 = vunpack.c.h.b16 %v1303
      %v1553 = vunpack.c.l.b16 %v1304
      %v1554 = vunpack.c.h.b16 %v1304
      %v1555 = vunpack.c.l.b16 %v1305
      %v1556 = vunpack.c.h.b16 %v1305
      %v1557 = vunpack.c.l.b16 %v1306
      %v1558 = vunpack.c.l.b16 %v1307
      %v1559 = vunpack.c.h.b16 %v1307
      %v1560 = vunpack.c.l.b16 %v1308
      %v1561 = vunpack.c.h.b16 %v1308
      %v1562 = vunpack.c.l.b16 %v1309
      %v1563 = vunpack.c.h.b16 %v1309
      %v1564 = vunpack.c.l.b16 %v1310
      %v1565 = vunpack.c.h.b16 %v1310
      %v1566 = vunpack.c.l.b16 %v1311
      %v1567 = vunpack.c.l.b16 %v1312
      %v1568 = vunpack.c.h.b16 %v1312
      %v1569 = vunpack.c.l.b16 %v1313
      %v1570 = vunpack.c.h.b16 %v1313
      %v1571 = vunpack.c.l.b16 %v1314
      %v1572 = vunpack.c.h.b16 %v1314
      %v1573 = vunpack.c.l.b16 %v1315
      %v1574 = vunpack.c.h.b16 %v1315
      %v1575 = vunpack.c.l.b16 %v1316
      %v1576 = vunpack.c.l.b16 %v1317
      %v1577 = vunpack.c.h.b16 %v1317
      %v1578 = vunpack.c.l.b16 %v1318
      %v1579 = vunpack.c.h.b16 %v1318
      %v1580 = vunpack.c.l.b16 %v1319
      %v1581 = vunpack.c.h.b16 %v1319
      %v1582 = vunpack.c.l.b16 %v1320
      %v1583 = vunpack.c.h.b16 %v1320
      %v1584 = vunpack.c.l.b16 %v1321
      %v1585 = vpack.c.b16 %v1522, %v1513
      %v1586 = vpack.c.b16 %v1523, %v1514
      %v1587 = vpack.c.b16 %v1524, %v1515
      %v1588 = vpack.c.b16 %v1525, %v1516
      %v1589 = vpack.c.b16 %v1526, %v1517
      %v1590 = vpack.c.b16 %v1527, %v1518
      %v1591 = vpack.c.b16 %v1528, %v1519
      %v1592 = vpack.c.b16 %v1529, %v1520
      %v1593 = vpack.c.b16 %v1530, %v1521
      %v1594 = vpack.c.b16 %v1540, %v1531
      %v1595 = vpack.c.b16 %v1541, %v1532
      %v1596 = vpack.c.b16 %v1542, %v1533
      %v1597 = vpack.c.b16 %v1543, %v1534
      %v1598 = vpack.c.b16 %v1544, %v1535
      %v1599 = vpack.c.b16 %v1545, %v1536
      %v1600 = vpack.c.b16 %v1546, %v1537
      %v1601 = vpack.c.b16 %v1547, %v1538
      %v1602 = vpack.c.b16 %v1548, %v1539
      %v1603 = vpack.c.b16 %v1558, %v1549
      %v1604 = vpack.c.b16 %v1559, %v1550
      %v1605 = vpack.c.b16 %v1560, %v1551
      %v1606 = vpack.c.b16 %v1561, %v1552
      %v1607 = vpack.c.b16 %v1562, %v1553
      %v1608 = vpack.c.b16 %v1563, %v1554
      %v1609 = vpack.c.b16 %v1564, %v1555
      %v1610 = vpack.c.b16 %v1565, %v1556
      %v1611 = vpack.c.b16 %v1566, %v1557
      %v1612 = vpack.c.b16 %v1576, %v1567
      %v1613 = vpack.c.b16 %v1577, %v1568
      %v1614 = vpack.c.b16 %v1578, %v1569
      %v1615 = vpack.c.b16 %v1579, %v1570
      %v1616 = vpack.c.b16 %v1580, %v1571
      %v1617 = vpack.c.b16 %v1581, %v1572
      %v1618 = vpack.c.b16 %v1582, %v1573
      %v1619 = vpack.c.b16 %v1583, %v1574
      %v1620 = vpack.c.b16 %v1584, %v1575
      %v1801 = vunpack.c.l.b16 %v1322
      %v1802 = vunpack.c.l.b16 %v1323
      %v1803 = vunpack.c.l.b16 %v1324
      %v1804 = vunpack.c.l.b16 %v1325
      %v1805 = vunpack.c.l.b16 %v1326
      %v1806 = vunpack.c.l.b16 %v1327
      %v1807 = vunpack.c.l.b16 %v1328
      %v1808 = vunpack.c.l.b16 %v1329
      %v1809 = vunpack.c.l.b16 %v1330
      %v1810 = vunpack.c.l.b16 %v1331
      %v1811 = vunpack.c.l.b16 %v1332
      %v1812 = vunpack.c.l.b16 %v1333
      %v1813 = vunpack.c.l.b16 %v1334
      %v1814 = vunpack.c.l.b16 %v1335
      %v1815 = vunpack.c.l.b16 %v1336
      %v1816 = vunpack.c.l.b16 %v1337
      %v1817 = vunpack.c.l.b16 %v1338
      %v1818 = vunpack.c.l.b16 %v1339
      %v1819 = vunpack.c.l.b16 %v1340
      %v1820 = vunpack.c.l.b16 %v1341
      %v1821 = vunpack.c.l.b16 %v1342
      %v1822 = vunpack.c.l.b16 %v1343
      %v1823 = vunpack.c.l.b16 %v1344
      %v1824 = vunpack.c.l.b16 %v1345
      %v1825 = vunpack.c.l.b16 %v1346
      %v1826 = vunpack.c.l.b16 %v1347
      %v1827 = vunpack.c.l.b16 %v1348
      %v1828 = vunpack.c.l.b16 %v1349
      %v1829 = vunpack.c.l.b16 %v1350
      %v1830 = vunpack.c.l.b16 %v1351
      %v1831 = vunpack.c.l.b16 %v1352
      %v1832 = vunpack.c.l.b16 %v1353
      %v1833 = vunpack.c.l.b16 %v1354
      %v1834 = vunpack.c.l.b16 %v1355
      %v1835 = vunpack.c.l.b16 %v1356
      %v1836 = vunpack.c.l.b16 %v1357
      %v1837 = vunpack.c.l.b16 %v1358
      %v1838 = vunpack.c.l.b16 %v1359
      %v1839 = vunpack.c.l.b16 %v1360
      %v1840 = vunpack.c.l.b16 %v1361
      %v1841 = vunpack.c.l.b16 %v1362
      %v1842 = vunpack.c.l.b16 %v1363
      %v1843 = vunpack.c.l.b16 %v1364
      %v1844 = vunpack.c.l.b16 %v1365
      %v1845 = vunpack.c.l.b16 %v1366
      %v1846 = vunpack.c.l.b16 %v1367
      %v1847 = vunpack.c.l.b16 %v1368
      %v1848 = vunpack.c.l.b16 %v1369
      %v1849 = vunpack.c.l.b16 %v1370
      %v1850 = vunpack.c.l.b16 %v1371
      %v1851 = vunpack.c.l.b16 %v1372
      %v1852 = vunpack.c.l.b16 %v1373
      %v1853 = vunpack.c.l.b16 %v1374
      %v1854 = vunpack.c.l.b16 %v1375
      %v1855 = vunpack.c.l.b16 %v1376
      %v1856 = vunpack.c.l.b16 %v1377
      %v1857 = vunpack.c.l.b16 %v1378
      %v1858 = vunpack.c.l.b16 %v1379
      %v1859 = vunpack.c.l.b16 %v1380
      %v1860 = vunpack.c.l.b16 %v1381
      %v1861 = vunpack.c.l.b16 %v1382
      %v1862 = vunpack.c.l.b16 %v1383
      %v1863 = vunpack.c.l.b16 %v1384
      %v1864 = vunpack.c.l.b16 %v1385
      %v1865 = vunpack.c.l.b16 %v1386
      %v1866 = vunpack.c.l.b16 %v1387
      %v1867 = vunpack.c.l.b16 %v1388
      %v1868 = vunpack.c.l.b16 %v1389
      %v1869 = vunpack.c.l.b16 %v1390
      %v1870 = vunpack.c.l.b16 %v1391
      %v1871 = vunpack.c.l.b16 %v1392
      %v1872 = vunpack.c.l.b16 %v1393
      %v1873 = vunpack.c.l.b16 %v1394
      %v1874 = vunpack.c.l.b16 %v1395
      %v1875 = vunpack.c.l.b16 %v1396
      %v1876 = vunpack.c.l.b16 %v1397
      %v1877 = vunpack.c.l.b16 %v1398
      %v1878 = vunpack.c.l.b16 %v1399
      %v1879 = vunpack.c.l.b16 %v1400
      %v1880 = vunpack.c.l.b16 %v1401
      %v1881 = vunpack.c.l.b16 %v1402
      %v1882 = vunpack.c.l.b16 %v1403
      %v1883 = vunpack.c.l.b16 %v1404
      %v1884 = vunpack.c.l.b16 %v1405
      %v1885 = vunpack.c.l.b16 %v1406
      %v1886 = vunpack.c.l.b16 %v1407
      %v1887 = vunpack.c.l.b16 %v1408
      %v1888 = vunpack.c.l.b16 %v1409
      %v1889 = vunpack.c.l.b16 %v1410
      %v1890 = vunpack.c.l.b16 %v1411
      %v1891 = vunpack.c.l.b16 %v1412
      %v1892 = vunpack.c.l.b16 %v1413
      %v1893 = vunpack.c.l.b16 %v1414
      %v1894 = vunpack.c.l.b16 %v1415
      %v1895 = vunpack.c.l.b16 %v1416
      %v1896 = vunpack.c.l.b16 %v1417
      %v1897 = vunpack.c.l.b16 %v1418
      %v1898 = vunpack.c.l.b16 %v1419
      %v1899 = vunpack.c.l.b16 %v1420
      %v1900 = vunpack.c.l.b16 %v1421
      %v1901 = vunpack.c.l.b16 %v1422
      %v1902 = vunpack.c.l.b16 %v1423
      %v1903 = vunpack.c.l.b16 %v1424
      %v1904 = vunpack.c.l.b16 %v1425
      %v1905 = vunpack.c.l.b16 %v1426
      %v1906 = vunpack.c.l.b16 %v1427
      %v1907 = vunpack.c.l.b16 %v1428
      %v1908 = vunpack.c.l.b16 %v1429
      %v1909 = vunpack.c.l.b16 %v1430
      %v1910 = vunpack.c.l.b16 %v1431
      %v1911 = vunpack.c.l.b16 %v1432
      %v1912 = vunpack.c.l.b16 %v1433
      %v1913 = vunpack.c.l.b16 %v1434
      %v1914 = vunpack.c.l.b16 %v1435
      %v1915 = vunpack.c.l.b16 %v1436
      %v1916 = vunpack.c.l.b16 %v1437
      %v1917 = vunpack.c.l.b16 %v1438
      %v1918 = vunpack.c.l.b16 %v1439
      %v1919 = vunpack.c.l.b16 %v1440
      %v1920 = vunpack.c.l.b16 %v1441
      %v1921 = vunpack.c.l.b16 %v1442
      %v1922 = vunpack.c.l.b16 %v1443
      %v1923 = vunpack.c.l.b16 %v1444
      %v1924 = vunpack.c.l.b16 %v1445
      %v1925 = vunpack.c.l.b16 %v1446
      %v1926 = vunpack.c.l.b16 %v1447
      %v1927 = vunpack.c.l.b16 %v1448
      %v1928 = vunpack.c.l.b16 %v1449
      %v1929 = vunpack.c.l.b16 %v1450
      %v1930 = vunpack.c.l.b16 %v1451
      %v1931 = vunpack.c.l.b16 %v1452
      %v1932 = vunpack.c.l.b16 %v1453
      %v1933 = vunpack.c.l.b16 %v1454
      %v1934 = vunpack.c.l.b16 %v1455
      %v1935 = vunpack.c.l.b16 %v1456
      %v1936 = vunpack.c.l.b16 %v1457
      %v1937 = vunpack.c.l.b16 %v1458
      %v1938 = vunpack.c.l.b16 %v1459
      %v1939 = vunpack.c.l.b16 %v1460
      %v1940 = vunpack.c.l.b16 %v1461
      %v1941 = vunpack.c.l.b16 %v1462
      %v1942 = vunpack.c.l.b16 %v1463
      %v1943 = vunpack.c.l.b16 %v1464
      %v1944 = vunpack.c.l.b16 %v1465
      %v1945 = vpack.c.b16 %v1802, %v1801
      %v1946 = vpack.c.b16 %v1804, %v1803
      %v1947 = vpack.c.b16 %v1806, %v1805
      %v1948 = vpack.c.b16 %v1808, %v1807
      %v1949 = vpack.c.b16 %v1810, %v1809
      %v1950 = vpack.c.b16 %v1812, %v1811
      %v1951 = vpack.c.b16 %v1814, %v1813
      %v1952 = vpack.c.b16 %v1816, %v1815
      %v1953 = vpack.c.b16 %v1818, %v1817
      %v1954 = vpack.c.b16 %v1820, %v1819
      %v1955 = vpack.c.b16 %v1822, %v1821
      %v1956 = vpack.c.b16 %v1824, %v1823
      %v1957 = vpack.c.b16 %v1826, %v1825
      %v1958 = vpack.c.b16 %v1828, %v1827
      %v1959 = vpack.c.b16 %v1830, %v1829
      %v1960 = vpack.c.b16 %v1832, %v1831
      %v1961 = vpack.c.b16 %v1834, %v1833
      %v1962 = vpack.c.b16 %v1836, %v1835
      %v1963 = vpack.c.b16 %v1838, %v1837
      %v1964 = vpack.c.b16 %v1840, %v1839
      %v1965 = vpack.c.b16 %v1842, %v1841
      %v1966 = vpack.c.b16 %v1844, %v1843
      %v1967 = vpack.c.b16 %v1846, %v1845
      %v1968 = vpack.c.b16 %v1848, %v1847
      %v1969 = vpack.c.b16 %v1850, %v1849
      %v1970 = vpack.c.b16 %v1852, %v1851
      %v1971 = vpack.c.b16 %v1854, %v1853
      %v1972 = vpack.c.b16 %v1856, %v1855
      %v1973 = vpack.c.b16 %v1858, %v1857
      %v1974 = vpack.c.b16 %v1860, %v1859
      %v1975 = vpack.c.b16 %v1862, %v1861
      %v1976 = vpack.c.b16 %v1864, %v1863
      %v1977 = vpack.c.b16 %v1866, %v1865
      %v1978 = vpack.c.b16 %v1868, %v1867
      %v1979 = vpack.c.b16 %v1870, %v1869
      %v1980 = vpack.c.b16 %v1872, %v1871
      %v1981 = vpack.c.b16 %v1874, %v1873
      %v1982 = vpack.c.b16 %v1876, %v1875
      %v1983 = vpack.c.b16 %v1878, %v1877
      %v1984 = vpack.c.b16 %v1880, %v1879
      %v1985 = vpack.c.b16 %v1882, %v1881
      %v1986 = vpack.c.b16 %v1884, %v1883
      %v1987 = vpack.c.b16 %v1886, %v1885
      %v1988 = vpack.c.b16 %v1888, %v1887
      %v1989 = vpack.c.b16 %v1890, %v1889
      %v1990 = vpack.c.b16 %v1892, %v1891
      %v1991 = vpack.c.b16 %v1894, %v1893
      %v1992 = vpack.c.b16 %v1896, %v1895
      %v1993 = vpack.c.b16 %v1898, %v1897
      %v1994 = vpack.c.b16 %v1900, %v1899
      %v1995 = vpack.c.b16 %v1902, %v1901
      %v1996 = vpack.c.b16 %v1904, %v1903
      %v1997 = vpack.c.b16 %v1906, %v1905
      %v1998 = vpack.c.b16 %v1908, %v1907
      %v1999 = vpack.c.b16 %v1910, %v1909
      %v2000 = vpack.c.b16 %v1912, %v1911
      %v2001 = vpack.c.b16 %v1914, %v1913
      %v2002 = vpack.c.b16 %v1916, %v1915
      %v2003 = vpack.c.b16 %v1918, %v1917
      %v2004 = vpack.c.b16 %v1920, %v1919
      %v2005 = vpack.c.b16 %v1922, %v1921
      %v2006 = vpack.c.b16 %v1924, %v1923
      %v2007 = vpack.c.b16 %v1926, %v1925
      %v2008 = vpack.c.b16 %v1928, %v1927
      %v2009 = vpack.c.b16 %v1930, %v1929
      %v2010 = vpack.c.b16 %v1932, %v1931
      %v2011 = vpack.c.b16 %v1934, %v1933
      %v2012 = vpack.c.b16 %v1936, %v1935
      %v2013 = vpack.c.b16 %v1938, %v1937
      %v2014 = vpack.c.b16 %v1940, %v1939
      %v2015 = vpack.c.b16 %v1942, %v1941
      %v2016 = vpack.c.b16 %v1944, %v1943
      %2089 = vmatprep.subr.bf16.mxu0 0
      %2090 = vmatpush1.bf16.msra.mxu0 %v1952
      %2091 = vmatprep.subr.bf16.mxu0 0
      %2092 = vmatpush1.bf16.msra.mxu0 %v1951
      %2093 = vmatprep.subr.bf16.mxu0 0
      %2094 = vmatpush1.bf16.msra.mxu0 %v1950
      %2095 = vmatprep.subr.bf16.mxu0 0
      %2096 = vmatpush1.bf16.msra.mxu0 %v1949
      %2097 = vmatprep.subr.bf16.mxu0 0
      %2098 = vmatpush1.bf16.msra.mxu0 %v1948
      %2099 = vmatprep.subr.bf16.mxu0 0
      %2100 = vmatpush1.bf16.msra.mxu0 %v1947
      %2101 = vmatprep.subr.bf16.mxu0 0
      %2102 = vmatpush1.bf16.msra.mxu0 %v1946
      %2103 = vmatprep.subr.bf16.mxu0 0
      %2104 = vmatpush1.bf16.msra.mxu0 %v1945
      %2105 = vmatprep.subr.bf16.mxu0 0
      %2106 = vmatpush2.bf16.msra.mxu0 %v1960
      %2107 = vmatprep.subr.bf16.mxu0 0
      %2108 = vmatpush2.bf16.msra.mxu0 %v1959
      %2109 = vmatprep.subr.bf16.mxu0 0
      %2110 = vmatpush2.bf16.msra.mxu0 %v1958
      %2111 = vmatprep.subr.bf16.mxu0 0
      %2112 = vmatpush2.bf16.msra.mxu0 %v1957
      %2113 = vmatprep.subr.bf16.mxu0 0
      %2114 = vmatpush2.bf16.msra.mxu0 %v1956
      %2115 = vmatprep.subr.bf16.mxu0 0
      %2116 = vmatpush2.bf16.msra.mxu0 %v1955
      %2117 = vmatprep.subr.bf16.mxu0 0
      %2118 = vmatpush2.bf16.msra.mxu0 %v1954
      %2119 = vmatprep.subr.bf16.mxu0 0
      %2120 = vmatpush2.bf16.msra.mxu0 %v1953
      %2121 = vmatprep.mubr.bf16.mxu0 %v1586
      %2122 = vmatmul.mubr.bf16.gmra.mxu0 %v1585
      %v2123 = vpop.f32.mrf.mxu0
      %v2124 = vadd.f32 %v1471, %v2123
      %v2125 = vpop.f32.mrf.mxu0
      %v2126 = vpop.f32.mrf.mxu0
      %v2127 = vadd.f32 %v1471, %v2126
      %v2128 = vpop.f32.mrf.mxu0
      %2129 = vmatprep.mubr.bf16.mxu0 %v1595
      %2130 = vmatmul.mubr.bf16.gmra.mxu0 %v1594
      %v2131 = vpop.f32.mrf.mxu0
      %v2132 = vadd.f32 %v1471, %v2131
      %v2133 = vpop.f32.mrf.mxu0
      %v2134 = vpop.f32.mrf.mxu0
      %v2135 = vadd.f32 %v1471, %v2134
      %v2136 = vpop.f32.mrf.mxu0
      %2137 = vmatprep.mubr.bf16.mxu0 %v1604
      %2138 = vmatmul.mubr.bf16.gmra.mxu0 %v1603
      %v2139 = vpop.f32.mrf.mxu0
      %v2140 = vadd.f32 %v1471, %v2139
      %v2141 = vpop.f32.mrf.mxu0
      %v2142 = vpop.f32.mrf.mxu0
      %v2143 = vadd.f32 %v1471, %v2142
      %v2144 = vpop.f32.mrf.mxu0
      %2145 = vmatprep.mubr.bf16.mxu0 %v1613
      %2146 = vmatmul.mubr.bf16.gmra.mxu0 %v1612
      %v2147 = vpop.f32.mrf.mxu0
      %v2148 = vadd.f32 %v1471, %v2147
      %v2149 = vpop.f32.mrf.mxu0
      %v2150 = vpop.f32.mrf.mxu0
      %v2151 = vadd.f32 %v1471, %v2150
      %v2152 = vpop.f32.mrf.mxu0
      %2153 = vdwg.mxu0
      %2154 = vmatprep.subr.bf16.mxu0 0
      %2155 = vmatpush1.bf16.msra.mxu0 %v1968
      %2156 = vmatprep.subr.bf16.mxu0 0
      %2157 = vmatpush1.bf16.msra.mxu0 %v1967
      %2158 = vmatprep.subr.bf16.mxu0 0
      %2159 = vmatpush1.bf16.msra.mxu0 %v1966
      %2160 = vmatprep.subr.bf16.mxu0 0
      %2161 = vmatpush1.bf16.msra.mxu0 %v1965
      %2162 = vmatprep.subr.bf16.mxu0 0
      %2163 = vmatpush1.bf16.msra.mxu0 %v1964
      %2164 = vmatprep.subr.bf16.mxu0 0
      %2165 = vmatpush1.bf16.msra.mxu0 %v1963
      %2166 = vmatprep.subr.bf16.mxu0 0
      %2167 = vmatpush1.bf16.msra.mxu0 %v1962
      %2168 = vmatprep.subr.bf16.mxu0 0
      %2169 = vmatpush1.bf16.msra.mxu0 %v1961
      %2170 = vmatprep.subr.bf16.mxu0 0
      %2171 = vmatpush2.bf16.msra.mxu0 %v1976
      %2172 = vmatprep.subr.bf16.mxu0 0
      %2173 = vmatpush2.bf16.msra.mxu0 %v1975
      %2174 = vmatprep.subr.bf16.mxu0 0
      %2175 = vmatpush2.bf16.msra.mxu0 %v1974
      %2176 = vmatprep.subr.bf16.mxu0 0
      %2177 = vmatpush2.bf16.msra.mxu0 %v1973
      %2178 = vmatprep.subr.bf16.mxu0 0
      %2179 = vmatpush2.bf16.msra.mxu0 %v1972
      %2180 = vmatprep.subr.bf16.mxu0 0
      %2181 = vmatpush2.bf16.msra.mxu0 %v1971
      %2182 = vmatprep.subr.bf16.mxu0 0
      %2183 = vmatpush2.bf16.msra.mxu0 %v1970
      %2184 = vmatprep.subr.bf16.mxu0 0
      %2185 = vmatpush2.bf16.msra.mxu0 %v1969
      %2186 = vmatprep.mubr.bf16.mxu0 %v1588
      %2187 = vmatmul.mubr.bf16.gmra.mxu0 %v1587
      %v2188 = vpop.f32.mrf.mxu0
      %v2189 = vadd.f32 %v2124, %v2188
      %v2190 = vpop.f32.mrf.mxu0
      %v2191 = vpop.f32.mrf.mxu0
      %v2192 = vadd.f32 %v2127, %v2191
      %v2193 = vpop.f32.mrf.mxu0
      %2194 = vmatprep.mubr.bf16.mxu0 %v1597
      %2195 = vmatmul.mubr.bf16.gmra.mxu0 %v1596
      %v2196 = vpop.f32.mrf.mxu0
      %v2197 = vadd.f32 %v2132, %v2196
      %v2198 = vpop.f32.mrf.mxu0
      %v2199 = vpop.f32.mrf.mxu0
      %v2200 = vadd.f32 %v2135, %v2199
      %v2201 = vpop.f32.mrf.mxu0
      %2202 = vmatprep.mubr.bf16.mxu0 %v1606
      %2203 = vmatmul.mubr.bf16.gmra.mxu0 %v1605
      %v2204 = vpop.f32.mrf.mxu0
      %v2205 = vadd.f32 %v2140, %v2204
      %v2206 = vpop.f32.mrf.mxu0
      %v2207 = vpop.f32.mrf.mxu0
      %v2208 = vadd.f32 %v2143, %v2207
      %v2209 = vpop.f32.mrf.mxu0
      %2210 = vmatprep.mubr.bf16.mxu0 %v1615
      %2211 = vmatmul.mubr.bf16.gmra.mxu0 %v1614
      %v2212 = vpop.f32.mrf.mxu0
      %v2213 = vadd.f32 %v2148, %v2212
      %v2214 = vpop.f32.mrf.mxu0
      %v2215 = vpop.f32.mrf.mxu0
      %v2216 = vadd.f32 %v2151, %v2215
      %v2217 = vpop.f32.mrf.mxu0
      %2218 = vdwg.mxu0
      %2219 = vmatprep.subr.bf16.mxu0 0
      %2220 = vmatpush1.bf16.msra.mxu0 %v1984
      %2221 = vmatprep.subr.bf16.mxu0 0
      %2222 = vmatpush1.bf16.msra.mxu0 %v1983
      %2223 = vmatprep.subr.bf16.mxu0 0
      %2224 = vmatpush1.bf16.msra.mxu0 %v1982
      %2225 = vmatprep.subr.bf16.mxu0 0
      %2226 = vmatpush1.bf16.msra.mxu0 %v1981
      %2227 = vmatprep.subr.bf16.mxu0 0
      %2228 = vmatpush1.bf16.msra.mxu0 %v1980
      %2229 = vmatprep.subr.bf16.mxu0 0
      %2230 = vmatpush1.bf16.msra.mxu0 %v1979
      %2231 = vmatprep.subr.bf16.mxu0 0
      %2232 = vmatpush1.bf16.msra.mxu0 %v1978
      %2233 = vmatprep.subr.bf16.mxu0 0
      %2234 = vmatpush1.bf16.msra.mxu0 %v1977
      %2235 = vmatprep.subr.bf16.mxu0 0
      %2236 = vmatpush2.bf16.msra.mxu0 %v1992
      %2237 = vmatprep.subr.bf16.mxu0 0
      %2238 = vmatpush2.bf16.msra.mxu0 %v1991
      %2239 = vmatprep.subr.bf16.mxu0 0
      %2240 = vmatpush2.bf16.msra.mxu0 %v1990
      %2241 = vmatprep.subr.bf16.mxu0 0
      %2242 = vmatpush2.bf16.msra.mxu0 %v1989
      %2243 = vmatprep.subr.bf16.mxu0 0
      %2244 = vmatpush2.bf16.msra.mxu0 %v1988
      %2245 = vmatprep.subr.bf16.mxu0 0
      %2246 = vmatpush2.bf16.msra.mxu0 %v1987
      %2247 = vmatprep.subr.bf16.mxu0 0
      %2248 = vmatpush2.bf16.msra.mxu0 %v1986
      %2249 = vmatprep.subr.bf16.mxu0 0
      %2250 = vmatpush2.bf16.msra.mxu0 %v1985
      %2251 = vmatprep.mubr.bf16.mxu0 %v1590
      %2252 = vmatmul.mubr.bf16.gmra.mxu0 %v1589
      %v2253 = vpop.f32.mrf.mxu0
      %v2254 = vadd.f32 %v2189, %v2253
      %v2255 = vpop.f32.mrf.mxu0
      %v2256 = vpop.f32.mrf.mxu0
      %v2257 = vadd.f32 %v2192, %v2256
      %v2258 = vpop.f32.mrf.mxu0
      %2259 = vmatprep.mubr.bf16.mxu0 %v1599
      %2260 = vmatmul.mubr.bf16.gmra.mxu0 %v1598
      %v2261 = vpop.f32.mrf.mxu0
      %v2262 = vadd.f32 %v2197, %v2261
      %v2263 = vpop.f32.mrf.mxu0
      %v2264 = vpop.f32.mrf.mxu0
      %v2265 = vadd.f32 %v2200, %v2264
      %v2266 = vpop.f32.mrf.mxu0
      %2267 = vmatprep.mubr.bf16.mxu0 %v1608
      %2268 = vmatmul.mubr.bf16.gmra.mxu0 %v1607
      %v2269 = vpop.f32.mrf.mxu0
      %v2270 = vadd.f32 %v2205, %v2269
      %v2271 = vpop.f32.mrf.mxu0
      %v2272 = vpop.f32.mrf.mxu0
      %v2273 = vadd.f32 %v2208, %v2272
      %v2274 = vpop.f32.mrf.mxu0
      %2275 = vmatprep.mubr.bf16.mxu0 %v1617
      %2276 = vmatmul.mubr.bf16.gmra.mxu0 %v1616
      %v2277 = vpop.f32.mrf.mxu0
      %v2278 = vadd.f32 %v2213, %v2277
      %v2279 = vpop.f32.mrf.mxu0
      %v2280 = vpop.f32.mrf.mxu0
      %v2281 = vadd.f32 %v2216, %v2280
      %v2282 = vpop.f32.mrf.mxu0
      %2283 = vdwg.mxu0
      %2284 = vmatprep.subr.bf16.mxu0 0
      %2285 = vmatpush1.bf16.msra.mxu0 %v2000
      %2286 = vmatprep.subr.bf16.mxu0 0
      %2287 = vmatpush1.bf16.msra.mxu0 %v1999
      %2288 = vmatprep.subr.bf16.mxu0 0
      %2289 = vmatpush1.bf16.msra.mxu0 %v1998
      %2290 = vmatprep.subr.bf16.mxu0 0
      %2291 = vmatpush1.bf16.msra.mxu0 %v1997
      %2292 = vmatprep.subr.bf16.mxu0 0
      %2293 = vmatpush1.bf16.msra.mxu0 %v1996
      %2294 = vmatprep.subr.bf16.mxu0 0
      %2295 = vmatpush1.bf16.msra.mxu0 %v1995
      %2296 = vmatprep.subr.bf16.mxu0 0
      %2297 = vmatpush1.bf16.msra.mxu0 %v1994
      %2298 = vmatprep.subr.bf16.mxu0 0
      %2299 = vmatpush1.bf16.msra.mxu0 %v1993
      %2300 = vmatprep.subr.bf16.mxu0 0
      %2301 = vmatpush2.bf16.msra.mxu0 %v2008
      %2302 = vmatprep.subr.bf16.mxu0 0
      %2303 = vmatpush2.bf16.msra.mxu0 %v2007
      %2304 = vmatprep.subr.bf16.mxu0 0
      %2305 = vmatpush2.bf16.msra.mxu0 %v2006
      %2306 = vmatprep.subr.bf16.mxu0 0
      %2307 = vmatpush2.bf16.msra.mxu0 %v2005
      %2308 = vmatprep.subr.bf16.mxu0 0
      %2309 = vmatpush2.bf16.msra.mxu0 %v2004
      %2310 = vmatprep.subr.bf16.mxu0 0
      %2311 = vmatpush2.bf16.msra.mxu0 %v2003
      %2312 = vmatprep.subr.bf16.mxu0 0
      %2313 = vmatpush2.bf16.msra.mxu0 %v2002
      %2314 = vmatprep.subr.bf16.mxu0 0
      %2315 = vmatpush2.bf16.msra.mxu0 %v2001
      %2316 = vmatprep.mubr.bf16.mxu0 %v1592
      %2317 = vmatmul.mubr.bf16.gmra.mxu0 %v1591
      %v2318 = vpop.f32.mrf.mxu0
      %v2319 = vadd.f32 %v2254, %v2318
      %v2320 = vpop.f32.mrf.mxu0
      %v2321 = vpop.f32.mrf.mxu0
      %v2322 = vadd.f32 %v2257, %v2321
      %v2323 = vpop.f32.mrf.mxu0
      %2324 = vmatprep.mubr.bf16.mxu0 %v1601
      %2325 = vmatmul.mubr.bf16.gmra.mxu0 %v1600
      %v2326 = vpop.f32.mrf.mxu0
      %v2327 = vadd.f32 %v2262, %v2326
      %v2328 = vpop.f32.mrf.mxu0
      %v2329 = vpop.f32.mrf.mxu0
      %v2330 = vadd.f32 %v2265, %v2329
      %v2331 = vpop.f32.mrf.mxu0
      %2332 = vmatprep.mubr.bf16.mxu0 %v1610
      %2333 = vmatmul.mubr.bf16.gmra.mxu0 %v1609
      %v2334 = vpop.f32.mrf.mxu0
      %v2335 = vadd.f32 %v2270, %v2334
      %v2336 = vpop.f32.mrf.mxu0
      %v2337 = vpop.f32.mrf.mxu0
      %v2338 = vadd.f32 %v2273, %v2337
      %v2339 = vpop.f32.mrf.mxu0
      %2340 = vmatprep.mubr.bf16.mxu0 %v1619
      %2341 = vmatmul.mubr.bf16.gmra.mxu0 %v1618
      %v2342 = vpop.f32.mrf.mxu0
      %v2343 = vadd.f32 %v2278, %v2342
      %v2344 = vpop.f32.mrf.mxu0
      %v2345 = vpop.f32.mrf.mxu0
      %v2346 = vadd.f32 %v2281, %v2345
      %v2347 = vpop.f32.mrf.mxu0
      %2348 = vdwg.mxu0
      %2349 = vmatprep.subr.bf16.mxu0 0
      %2350 = vmatpush1.bf16.msra.mxu0 %v2016
      %2351 = vmatprep.subr.bf16.mxu0 0
      %2352 = vmatpush1.bf16.msra.mxu0 %v2015
      %2353 = vmatprep.subr.bf16.mxu0 0
      %2354 = vmatpush1.bf16.msra.mxu0 %v2014
      %2355 = vmatprep.subr.bf16.mxu0 0
      %2356 = vmatpush1.bf16.msra.mxu0 %v2013
      %2357 = vmatprep.subr.bf16.mxu0 0
      %2358 = vmatpush1.bf16.msra.mxu0 %v2012
      %2359 = vmatprep.subr.bf16.mxu0 0
      %2360 = vmatpush1.bf16.msra.mxu0 %v2011
      %2361 = vmatprep.subr.bf16.mxu0 0
      %2362 = vmatpush1.bf16.msra.mxu0 %v2010
      %2363 = vmatprep.subr.bf16.mxu0 0
      %2364 = vmatpush1.bf16.msra.mxu0 %v2009
      %2365 = vmatprep.subr.bf16.mxu0 0
      %2366 = vmatpush2.bf16.msra.mxu0 0
      %2367 = vmatprep.subr.bf16.mxu0 0
      %2368 = vmatpush2.bf16.msra.mxu0 0
      %2369 = vmatprep.subr.bf16.mxu0 0
      %2370 = vmatpush2.bf16.msra.mxu0 0
      %2371 = vmatprep.subr.bf16.mxu0 0
      %2372 = vmatpush2.bf16.msra.mxu0 0
      %2373 = vmatprep.subr.bf16.mxu0 0
      %2374 = vmatpush2.bf16.msra.mxu0 0
      %2375 = vmatprep.subr.bf16.mxu0 0
      %2376 = vmatpush2.bf16.msra.mxu0 0
      %2377 = vmatprep.subr.bf16.mxu0 0
      %2378 = vmatpush2.bf16.msra.mxu0 0
      %2379 = vmatprep.subr.bf16.mxu0 0
      %2380 = vmatpush2.bf16.msra.mxu0 0
      %2381 = vmatprep.mubr.bf16.mxu0 0
      %2382 = vmatmul.mubr.bf16.gmra.mxu0 %v1593
      %v2383 = vpop.f32.mrf.mxu0
      %v2384 = vadd.f32 %v2319, %v2383
      %v2385 = vpop.f32.mrf.mxu0
      %v2386 = vpop.f32.mrf.mxu0
      %v2387 = vadd.f32 %v2322, %v2386
      %v2388 = vpop.f32.mrf.mxu0
      %2389 = vmatprep.mubr.bf16.mxu0 0
      %2390 = vmatmul.mubr.bf16.gmra.mxu0 %v1602
      %v2391 = vpop.f32.mrf.mxu0
      %v2392 = vadd.f32 %v2327, %v2391
      %v2393 = vpop.f32.mrf.mxu0
      %v2394 = vpop.f32.mrf.mxu0
      %v2395 = vadd.f32 %v2330, %v2394
      %v2396 = vpop.f32.mrf.mxu0
      %2397 = vmatprep.mubr.bf16.mxu0 0
      %2398 = vmatmul.mubr.bf16.gmra.mxu0 %v1611
      %v2399 = vpop.f32.mrf.mxu0
      %v2400 = vadd.f32 %v2335, %v2399
      %v2401 = vpop.f32.mrf.mxu0
      %v2402 = vpop.f32.mrf.mxu0
      %v2403 = vadd.f32 %v2338, %v2402
      %v2404 = vpop.f32.mrf.mxu0
      %2405 = vmatprep.mubr.bf16.mxu0 0
      %2406 = vmatmul.mubr.bf16.gmra.mxu0 %v1620
      %v2407 = vpop.f32.mrf.mxu0
      %v2408 = vadd.f32 %v2343, %v2407
      %v2409 = vpop.f32.mrf.mxu0
      %v2410 = vpop.f32.mrf.mxu0
      %v2411 = vadd.f32 %v2346, %v2410
      %v2412 = vpop.f32.mrf.mxu0
      %2413 = vdwg.mxu0
      %v2414 = vmax.f32 %v2384, 0.0
      %v2415 = vmax.f32 %v2387, 0.0
      %v2416 = vmax.f32 %v2392, 0.0
      %v2417 = vmax.f32 %v2395, 0.0
      %v2418 = vmax.f32 %v2400, 0.0
      %v2419 = vmax.f32 %v2403, 0.0
      %v2420 = vmax.f32 %v2408, 0.0
      %v2421 = vmax.f32 %v2411, 0.0
      %v2422 = vpack.c.bf16 %v2415, %v2414
      %v2423 = vpack.c.bf16 %v2417, %v2416
      %v2424 = vpack.c.bf16 %v2419, %v2418
      %v2425 = vpack.c.bf16 %v2421, %v2420
      %v2430 = vunpack.c.l.b16 %v2422
      %v2431 = vunpack.c.h.b16 %v2422
      %v2432 = vunpack.c.l.b16 %v2423
      %v2433 = vunpack.c.h.b16 %v2423
      %v2434 = vunpack.c.l.b16 %v2424
      %v2435 = vunpack.c.h.b16 %v2424
      %v2436 = vunpack.c.l.b16 %v2425
      %v2437 = vunpack.c.h.b16 %v2425
      %v2438 = vpack.c.b16 %v2430, %v2430
      %v2439 = vpack.c.b16 %v2431, %v2431
      %v2440 = vpack.c.b16 %v2432, %v2432
      %v2441 = vpack.c.b16 %v2433, %v2433
      %v2442 = vpack.c.b16 %v2434, %v2434
      %v2443 = vpack.c.b16 %v2435, %v2435
      %v2444 = vpack.c.b16 %v2436, %v2436
      %v2445 = vpack.c.b16 %v2437, %v2437
      %v2447 = vshrl.u32 %v2438, 16
      %v2449 = vrot.slane %v2447, 7
      %v2450 = vshll.u32 %v2438, 16
      %v2452 = vor.u32 %v2449, %v2450
      %v2453 = vrot.slane %v2449, 4
      %v2455 = vshrl.u32 %v2439, 16
      %v2457 = vrot.slane %v2455, 7
      %v2458 = vshll.u32 %v2439, 16
      %v2460 = vor.u32 %v2457, %v2458
      %v2461 = vrot.slane %v2457, 4
      %v2463 = vshrl.u32 %v2440, 16
      %v2465 = vrot.slane %v2463, 7
      %v2466 = vshll.u32 %v2440, 16
      %v2468 = vor.u32 %v2465, %v2466
      %v2469 = vrot.slane %v2465, 4
      %v2471 = vshrl.u32 %v2441, 16
      %v2473 = vrot.slane %v2471, 7
      %v2474 = vshll.u32 %v2441, 16
      %v2476 = vor.u32 %v2473, %v2474
      %v2477 = vrot.slane %v2473, 4
      %v2479 = vshrl.u32 %v2442, 16
      %v2481 = vrot.slane %v2479, 7
      %v2482 = vshll.u32 %v2442, 16
      %v2484 = vor.u32 %v2481, %v2482
      %v2485 = vrot.slane %v2481, 4
      %v2487 = vshrl.u32 %v2443, 16
      %v2489 = vrot.slane %v2487, 7
      %v2490 = vshll.u32 %v2443, 16
      %v2492 = vor.u32 %v2489, %v2490
      %v2493 = vrot.slane %v2489, 4
      %v2495 = vshrl.u32 %v2444, 16
      %v2497 = vrot.slane %v2495, 7
      %v2498 = vshll.u32 %v2444, 16
      %v2500 = vor.u32 %v2497, %v2498
      %v2501 = vrot.slane %v2497, 4
      %v2503 = vshrl.u32 %v2445, 16
      %v2505 = vrot.slane %v2503, 7
      %v2506 = vshll.u32 %v2445, 16
      %v2508 = vor.u32 %v2505, %v2506
      %v2509 = vrot.slane %v2505, 4
      %v2526 = vld [vmem:[%s504] sm:$0xf]
      %v2527 = vsel %vm506, %v2452, %v2526
      %2528 = vst [vmem:[%s504] sm:$0xf] %v2527
      %v2529 = vld [vmem:[%s504 + $0x4] sm:$0x1]
      %v2530 = vsel %vm337, %v2453, %v2529
      %2531 = vst [vmem:[%s504 + $0x4] sm:$0x1] %v2530
      %v2532 = vld [vmem:[%s504 + $0x8] sm:$0xf]
      %v2533 = vsel %vm506, %v2460, %v2532
      %2534 = vst [vmem:[%s504 + $0x8] sm:$0xf] %v2533
      %v2535 = vld [vmem:[%s504 + $0xc] sm:$0x1]
      %v2536 = vsel %vm337, %v2461, %v2535
      %2537 = vst [vmem:[%s504 + $0xc] sm:$0x1] %v2536
      %v2538 = vld [vmem:[%s504 + $0x10] sm:$0xf]
      %v2539 = vsel %vm506, %v2468, %v2538
      %2540 = vst [vmem:[%s504 + $0x10] sm:$0xf] %v2539
      %v2541 = vld [vmem:[%s504 + $0x14] sm:$0x1]
      %v2542 = vsel %vm337, %v2469, %v2541
      %2543 = vst [vmem:[%s504 + $0x14] sm:$0x1] %v2542
      %v2544 = vld [vmem:[%s504 + $0x18] sm:$0xf]
      %v2545 = vsel %vm506, %v2476, %v2544
      %2546 = vst [vmem:[%s504 + $0x18] sm:$0xf] %v2545
      %v2547 = vld [vmem:[%s504 + $0x1c] sm:$0x1]
      %v2548 = vsel %vm337, %v2477, %v2547
      %2549 = vst [vmem:[%s504 + $0x1c] sm:$0x1] %v2548
      %v2550 = vld [vmem:[%s504 + $0x20] sm:$0xf]
      %v2551 = vsel %vm506, %v2484, %v2550
      %2552 = vst [vmem:[%s504 + $0x20] sm:$0xf] %v2551
      %v2553 = vld [vmem:[%s504 + $0x24] sm:$0x1]
      %v2554 = vsel %vm337, %v2485, %v2553
      %2555 = vst [vmem:[%s504 + $0x24] sm:$0x1] %v2554
      %v2556 = vld [vmem:[%s504 + $0x28] sm:$0xf]
      %v2557 = vsel %vm506, %v2492, %v2556
      %2558 = vst [vmem:[%s504 + $0x28] sm:$0xf] %v2557
      %v2559 = vld [vmem:[%s504 + $0x2c] sm:$0x1]
      %v2560 = vsel %vm337, %v2493, %v2559
      %2561 = vst [vmem:[%s504 + $0x2c] sm:$0x1] %v2560
      %v2562 = vld [vmem:[%s504 + $0x30] sm:$0xf]
      %v2563 = vsel %vm506, %v2500, %v2562
      %2564 = vst [vmem:[%s504 + $0x30] sm:$0xf] %v2563
      %v2565 = vld [vmem:[%s504 + $0x34] sm:$0x1]
      %v2566 = vsel %vm337, %v2501, %v2565
      %2567 = vst [vmem:[%s504 + $0x34] sm:$0x1] %v2566
      %v2568 = vld [vmem:[%s504 + $0x38] sm:$0xf]
      %v2569 = vsel %vm506, %v2508, %v2568
      %2570 = vst [vmem:[%s504 + $0x38] sm:$0xf] %v2569
      %v2571 = vld [vmem:[%s504 + $0x3c] sm:$0x1]
      %v2572 = vsel %vm337, %v2509, %v2571
      %2573 = vst [vmem:[%s504 + $0x3c] sm:$0x1] %v2572
      %v2574 = vld [vmem:[#allocation2] sm:$0xf]
      %v2575 = vld [vmem:[#allocation2 + $0x8] sm:$0xf]
      %v2576 = vld [vmem:[#allocation2 + $0x10] sm:$0xf]
      %v2577 = vld [vmem:[#allocation2 + $0x18] sm:$0xf]
      %v2578 = vld [vmem:[#allocation2 + $0x20] sm:$0xf]
      %v2579 = vld [vmem:[#allocation2 + $0x28] sm:$0xf]
      %v2580 = vld [vmem:[#allocation2 + $0x30] sm:$0xf]
      %v2581 = vld [vmem:[#allocation2 + $0x38] sm:$0xf]
      %2582 = vst [vmem:[#allocation3] sm:$0xf] %v2574
      %2583 = vst [vmem:[#allocation3 + $0x24] sm:$0xf] %v2575
      %2584 = vst [vmem:[#allocation3 + $0x48] sm:$0xf] %v2576
      %2585 = vst [vmem:[#allocation3 + $0x6c] sm:$0xf] %v2577
      %2586 = vst [vmem:[#allocation3 + $0x90] sm:$0xf] %v2578
      %2587 = vst [vmem:[#allocation3 + $0xb4] sm:$0xf] %v2579
      %2588 = vst [vmem:[#allocation3 + $0xd8] sm:$0xf] %v2580
      %2589 = vst [vmem:[#allocation3 + $0xfc] sm:$0xf] %v2581
      %v2590 = vld [vmem:[#allocation2] sm:$0xf]
      %v2591 = vld [vmem:[#allocation2 + $0x4] sm:$0x1]
      %v2592 = vld [vmem:[#allocation2 + $0x8] sm:$0xf]
      %v2593 = vld [vmem:[#allocation2 + $0xc] sm:$0x1]
      %v2594 = vld [vmem:[#allocation2 + $0x10] sm:$0xf]
      %v2595 = vld [vmem:[#allocation2 + $0x14] sm:$0x1]
      %v2596 = vld [vmem:[#allocation2 + $0x18] sm:$0xf]
      %v2597 = vld [vmem:[#allocation2 + $0x1c] sm:$0x1]
      %v2598 = vld [vmem:[#allocation2 + $0x20] sm:$0xf]
      %v2599 = vld [vmem:[#allocation2 + $0x24] sm:$0x1]
      %v2600 = vld [vmem:[#allocation2 + $0x28] sm:$0xf]
      %v2601 = vld [vmem:[#allocation2 + $0x2c] sm:$0x1]
      %v2602 = vld [vmem:[#allocation2 + $0x30] sm:$0xf]
      %v2603 = vld [vmem:[#allocation2 + $0x34] sm:$0x1]
      %v2604 = vld [vmem:[#allocation2 + $0x38] sm:$0xf]
      %v2605 = vld [vmem:[#allocation2 + $0x3c] sm:$0x1]
      %v2607 = vshrl.u32 %v2590, 16
      %v2609 = vrot.slane %v2607, 4
      %v2610 = vshll.u32 %v2590, 16
      %v2612 = vrot.slane %v2610, 5
      %v2613 = vor.u32 %v2609, %v2612
      %v2614 = vrot.slane %v2613, 4
      %v2616 = vshll.u32 %v2591, 16
      %v2618 = vrot.slane %v2616, 5
      %v2619 = vsel %vm589, %v2614, %v2618
      %v2621 = vshrl.u32 %v2592, 16
      %v2623 = vrot.slane %v2621, 4
      %v2624 = vshll.u32 %v2592, 16
      %v2626 = vrot.slane %v2624, 5
      %v2627 = vor.u32 %v2623, %v2626
      %v2628 = vrot.slane %v2627, 4
      %v2630 = vshll.u32 %v2593, 16
      %v2632 = vrot.slane %v2630, 5
      %v2633 = vsel %vm589, %v2628, %v2632
      %v2635 = vshrl.u32 %v2594, 16
      %v2637 = vrot.slane %v2635, 4
      %v2638 = vshll.u32 %v2594, 16
      %v2640 = vrot.slane %v2638, 5
      %v2641 = vor.u32 %v2637, %v2640
      %v2642 = vrot.slane %v2641, 4
      %v2644 = vshll.u32 %v2595, 16
      %v2646 = vrot.slane %v2644, 5
      %v2647 = vsel %vm589, %v2642, %v2646
      %v2649 = vshrl.u32 %v2596, 16
      %v2651 = vrot.slane %v2649, 4
      %v2652 = vshll.u32 %v2596, 16
      %v2654 = vrot.slane %v2652, 5
      %v2655 = vor.u32 %v2651, %v2654
      %v2656 = vrot.slane %v2655, 4
      %v2658 = vshll.u32 %v2597, 16
      %v2660 = vrot.slane %v2658, 5
      %v2661 = vsel %vm589, %v2656, %v2660
      %v2663 = vshrl.u32 %v2598, 16
      %v2665 = vrot.slane %v2663, 4
      %v2666 = vshll.u32 %v2598, 16
      %v2668 = vrot.slane %v2666, 5
      %v2669 = vor.u32 %v2665, %v2668
      %v2670 = vrot.slane %v2669, 4
      %v2672 = vshll.u32 %v2599, 16
      %v2674 = vrot.slane %v2672, 5
      %v2675 = vsel %vm589, %v2670, %v2674
      %v2677 = vshrl.u32 %v2600, 16
      %v2679 = vrot.slane %v2677, 4
      %v2680 = vshll.u32 %v2600, 16
      %v2682 = vrot.slane %v2680, 5
      %v2683 = vor.u32 %v2679, %v2682
      %v2684 = vrot.slane %v2683, 4
      %v2686 = vshll.u32 %v2601, 16
      %v2688 = vrot.slane %v2686, 5
      %v2689 = vsel %vm589, %v2684, %v2688
      %v2691 = vshrl.u32 %v2602, 16
      %v2693 = vrot.slane %v2691, 4
      %v2694 = vshll.u32 %v2602, 16
      %v2696 = vrot.slane %v2694, 5
      %v2697 = vor.u32 %v2693, %v2696
      %v2698 = vrot.slane %v2697, 4
      %v2700 = vshll.u32 %v2603, 16
      %v2702 = vrot.slane %v2700, 5
      %v2703 = vsel %vm589, %v2698, %v2702
      %v2705 = vshrl.u32 %v2604, 16
      %v2707 = vrot.slane %v2705, 4
      %v2708 = vshll.u32 %v2604, 16
      %v2710 = vrot.slane %v2708, 5
      %v2711 = vor.u32 %v2707, %v2710
      %v2712 = vrot.slane %v2711, 4
      %v2714 = vshll.u32 %v2605, 16
      %v2716 = vrot.slane %v2714, 5
      %v2717 = vsel %vm589, %v2712, %v2716
      %2726 = vst [vmem:[#allocation3 + $0x4] sm:$0xf] %v2619
      %2727 = vst [vmem:[#allocation3 + $0x28] sm:$0xf] %v2633
      %2728 = vst [vmem:[#allocation3 + $0x4c] sm:$0xf] %v2647
      %2729 = vst [vmem:[#allocation3 + $0x70] sm:$0xf] %v2661
      %2730 = vst [vmem:[#allocation3 + $0x94] sm:$0xf] %v2675
      %2731 = vst [vmem:[#allocation3 + $0xb8] sm:$0xf] %v2689
      %2732 = vst [vmem:[#allocation3 + $0xdc] sm:$0xf] %v2703
      %2733 = vst [vmem:[#allocation3 + $0x100] sm:$0xf] %v2717
      %v2734 = vld [vmem:[#allocation2] sm:$0xe]
      %v2735 = vld [vmem:[#allocation2 + $0x4] sm:$0x1]
      %v2736 = vld [vmem:[#allocation2 + $0x8] sm:$0xe]
      %v2737 = vld [vmem:[#allocation2 + $0xc] sm:$0x1]
      %v2738 = vld [vmem:[#allocation2 + $0x10] sm:$0xe]
      %v2739 = vld [vmem:[#allocation2 + $0x14] sm:$0x1]
      %v2740 = vld [vmem:[#allocation2 + $0x18] sm:$0xe]
      %v2741 = vld [vmem:[#allocation2 + $0x1c] sm:$0x1]
      %v2742 = vld [vmem:[#allocation2 + $0x20] sm:$0xe]
      %v2743 = vld [vmem:[#allocation2 + $0x24] sm:$0x1]
      %v2744 = vld [vmem:[#allocation2 + $0x28] sm:$0xe]
      %v2745 = vld [vmem:[#allocation2 + $0x2c] sm:$0x1]
      %v2746 = vld [vmem:[#allocation2 + $0x30] sm:$0xe]
      %v2747 = vld [vmem:[#allocation2 + $0x34] sm:$0x1]
      %v2748 = vld [vmem:[#allocation2 + $0x38] sm:$0xe]
      %v2749 = vld [vmem:[#allocation2 + $0x3c] sm:$0x1]
      %v2766 = vrot.slane %v2734, 5
      %v2767 = vrot.slane %v2766, 4
      %v2768 = vrot.slane %v2735, 5
      %v2769 = vsel %vm752, %v2767, %v2768
      %v2770 = vrot.slane %v2736, 5
      %v2771 = vrot.slane %v2770, 4
      %v2772 = vrot.slane %v2737, 5
      %v2773 = vsel %vm752, %v2771, %v2772
      %v2774 = vrot.slane %v2738, 5
      %v2775 = vrot.slane %v2774, 4
      %v2776 = vrot.slane %v2739, 5
      %v2777 = vsel %vm752, %v2775, %v2776
      %v2778 = vrot.slane %v2740, 5
      %v2779 = vrot.slane %v2778, 4
      %v2780 = vrot.slane %v2741, 5
      %v2781 = vsel %vm752, %v2779, %v2780
      %v2782 = vrot.slane %v2742, 5
      %v2783 = vrot.slane %v2782, 4
      %v2784 = vrot.slane %v2743, 5
      %v2785 = vsel %vm752, %v2783, %v2784
      %v2786 = vrot.slane %v2744, 5
      %v2787 = vrot.slane %v2786, 4
      %v2788 = vrot.slane %v2745, 5
      %v2789 = vsel %vm752, %v2787, %v2788
      %v2790 = vrot.slane %v2746, 5
      %v2791 = vrot.slane %v2790, 4
      %v2792 = vrot.slane %v2747, 5
      %v2793 = vsel %vm752, %v2791, %v2792
      %v2794 = vrot.slane %v2748, 5
      %v2795 = vrot.slane %v2794, 4
      %v2796 = vrot.slane %v2749, 5
      %v2797 = vsel %vm752, %v2795, %v2796
      %2806 = vst [vmem:[#allocation3 + $0x8] sm:$0xf] %v2769
      %2807 = vst [vmem:[#allocation3 + $0x2c] sm:$0xf] %v2773
      %2808 = vst [vmem:[#allocation3 + $0x50] sm:$0xf] %v2777
      %2809 = vst [vmem:[#allocation3 + $0x74] sm:$0xf] %v2781
      %2810 = vst [vmem:[#allocation3 + $0x98] sm:$0xf] %v2785
      %2811 = vst [vmem:[#allocation3 + $0xbc] sm:$0xf] %v2789
      %2812 = vst [vmem:[#allocation3 + $0xe0] sm:$0xf] %v2793
      %2813 = vst [vmem:[#allocation3 + $0x104] sm:$0xf] %v2797
      %v2814 = vld [vmem:[%s504] sm:$0xf]
      %v2815 = vld [vmem:[%s504 + $0x8] sm:$0xf]
      %v2816 = vld [vmem:[%s504 + $0x10] sm:$0xf]
      %v2817 = vld [vmem:[%s504 + $0x18] sm:$0xf]
      %v2818 = vld [vmem:[%s504 + $0x20] sm:$0xf]
      %v2819 = vld [vmem:[%s504 + $0x28] sm:$0xf]
      %v2820 = vld [vmem:[%s504 + $0x30] sm:$0xf]
      %v2821 = vld [vmem:[%s504 + $0x38] sm:$0xf]
      %2822 = vst [vmem:[#allocation3 + $0xc] sm:$0xf] %v2814
      %2823 = vst [vmem:[#allocation3 + $0x30] sm:$0xf] %v2815
      %2824 = vst [vmem:[#allocation3 + $0x54] sm:$0xf] %v2816
      %2825 = vst [vmem:[#allocation3 + $0x78] sm:$0xf] %v2817
      %2826 = vst [vmem:[#allocation3 + $0x9c] sm:$0xf] %v2818
      %2827 = vst [vmem:[#allocation3 + $0xc0] sm:$0xf] %v2819
      %2828 = vst [vmem:[#allocation3 + $0xe4] sm:$0xf] %v2820
      %2829 = vst [vmem:[#allocation3 + $0x108] sm:$0xf] %v2821
      %v2830 = vld [vmem:[%s504] sm:$0xf]
      %v2831 = vld [vmem:[%s504 + $0x4] sm:$0x1]
      %v2832 = vld [vmem:[%s504 + $0x8] sm:$0xf]
      %v2833 = vld [vmem:[%s504 + $0xc] sm:$0x1]
      %v2834 = vld [vmem:[%s504 + $0x10] sm:$0xf]
      %v2835 = vld [vmem:[%s504 + $0x14] sm:$0x1]
      %v2836 = vld [vmem:[%s504 + $0x18] sm:$0xf]
      %v2837 = vld [vmem:[%s504 + $0x1c] sm:$0x1]
      %v2838 = vld [vmem:[%s504 + $0x20] sm:$0xf]
      %v2839 = vld [vmem:[%s504 + $0x24] sm:$0x1]
      %v2840 = vld [vmem:[%s504 + $0x28] sm:$0xf]
      %v2841 = vld [vmem:[%s504 + $0x2c] sm:$0x1]
      %v2842 = vld [vmem:[%s504 + $0x30] sm:$0xf]
      %v2843 = vld [vmem:[%s504 + $0x34] sm:$0x1]
      %v2844 = vld [vmem:[%s504 + $0x38] sm:$0xf]
      %v2845 = vld [vmem:[%s504 + $0x3c] sm:$0x1]
      %v2847 = vshrl.u32 %v2830, 16
      %v2849 = vrot.slane %v2847, 4
      %v2850 = vshll.u32 %v2830, 16
      %v2852 = vrot.slane %v2850, 5
      %v2853 = vor.u32 %v2849, %v2852
      %v2854 = vrot.slane %v2853, 4
      %v2856 = vshll.u32 %v2831, 16
      %v2858 = vrot.slane %v2856, 5
      %v2859 = vsel %vm589, %v2854, %v2858
      %v2861 = vshrl.u32 %v2832, 16
      %v2863 = vrot.slane %v2861, 4
      %v2864 = vshll.u32 %v2832, 16
      %v2866 = vrot.slane %v2864, 5
      %v2867 = vor.u32 %v2863, %v2866
      %v2868 = vrot.slane %v2867, 4
      %v2870 = vshll.u32 %v2833, 16
      %v2872 = vrot.slane %v2870, 5
      %v2873 = vsel %vm589, %v2868, %v2872
      %v2875 = vshrl.u32 %v2834, 16
      %v2877 = vrot.slane %v2875, 4
      %v2878 = vshll.u32 %v2834, 16
      %v2880 = vrot.slane %v2878, 5
      %v2881 = vor.u32 %v2877, %v2880
      %v2882 = vrot.slane %v2881, 4
      %v2884 = vshll.u32 %v2835, 16
      %v2886 = vrot.slane %v2884, 5
      %v2887 = vsel %vm589, %v2882, %v2886
      %v2889 = vshrl.u32 %v2836, 16
      %v2891 = vrot.slane %v2889, 4
      %v2892 = vshll.u32 %v2836, 16
      %v2894 = vrot.slane %v2892, 5
      %v2895 = vor.u32 %v2891, %v2894
      %v2896 = vrot.slane %v2895, 4
      %v2898 = vshll.u32 %v2837, 16
      %v2900 = vrot.slane %v2898, 5
      %v2901 = vsel %vm589, %v2896, %v2900
      %v2903 = vshrl.u32 %v2838, 16
      %v2905 = vrot.slane %v2903, 4
      %v2906 = vshll.u32 %v2838, 16
      %v2908 = vrot.slane %v2906, 5
      %v2909 = vor.u32 %v2905, %v2908
      %v2910 = vrot.slane %v2909, 4
      %v2912 = vshll.u32 %v2839, 16
      %v2914 = vrot.slane %v2912, 5
      %v2915 = vsel %vm589, %v2910, %v2914
      %v2917 = vshrl.u32 %v2840, 16
      %v2919 = vrot.slane %v2917, 4
      %v2920 = vshll.u32 %v2840, 16
      %v2922 = vrot.slane %v2920, 5
      %v2923 = vor.u32 %v2919, %v2922
      %v2924 = vrot.slane %v2923, 4
      %v2926 = vshll.u32 %v2841, 16
      %v2928 = vrot.slane %v2926, 5
      %v2929 = vsel %vm589, %v2924, %v2928
      %v2931 = vshrl.u32 %v2842, 16
      %v2933 = vrot.slane %v2931, 4
      %v2934 = vshll.u32 %v2842, 16
      %v2936 = vrot.slane %v2934, 5
      %v2937 = vor.u32 %v2933, %v2936
      %v2938 = vrot.slane %v2937, 4
      %v2940 = vshll.u32 %v2843, 16
      %v2942 = vrot.slane %v2940, 5
      %v2943 = vsel %vm589, %v2938, %v2942
      %v2945 = vshrl.u32 %v2844, 16
      %v2947 = vrot.slane %v2945, 4
      %v2948 = vshll.u32 %v2844, 16
      %v2950 = vrot.slane %v2948, 5
      %v2951 = vor.u32 %v2947, %v2950
      %v2952 = vrot.slane %v2951, 4
      %v2954 = vshll.u32 %v2845, 16
      %v2956 = vrot.slane %v2954, 5
      %v2957 = vsel %vm589, %v2952, %v2956
      %2966 = vst [vmem:[#allocation3 + $0x10] sm:$0xf] %v2859
      %2967 = vst [vmem:[#allocation3 + $0x34] sm:$0xf] %v2873
      %2968 = vst [vmem:[#allocation3 + $0x58] sm:$0xf] %v2887
      %2969 = vst [vmem:[#allocation3 + $0x7c] sm:$0xf] %v2901
      %2970 = vst [vmem:[#allocation3 + $0xa0] sm:$0xf] %v2915
      %2971 = vst [vmem:[#allocation3 + $0xc4] sm:$0xf] %v2929
      %2972 = vst [vmem:[#allocation3 + $0xe8] sm:$0xf] %v2943
      %2973 = vst [vmem:[#allocation3 + $0x10c] sm:$0xf] %v2957
      %v2974 = vld [vmem:[%s504] sm:$0xe]
      %v2975 = vld [vmem:[%s504 + $0x4] sm:$0x1]
      %v2976 = vld [vmem:[%s504 + $0x8] sm:$0xe]
      %v2977 = vld [vmem:[%s504 + $0xc] sm:$0x1]
      %v2978 = vld [vmem:[%s504 + $0x10] sm:$0xe]
      %v2979 = vld [vmem:[%s504 + $0x14] sm:$0x1]
      %v2980 = vld [vmem:[%s504 + $0x18] sm:$0xe]
      %v2981 = vld [vmem:[%s504 + $0x1c] sm:$0x1]
      %v2982 = vld [vmem:[%s504 + $0x20] sm:$0xe]
      %v2983 = vld [vmem:[%s504 + $0x24] sm:$0x1]
      %v2984 = vld [vmem:[%s504 + $0x28] sm:$0xe]
      %v2985 = vld [vmem:[%s504 + $0x2c] sm:$0x1]
      %v2986 = vld [vmem:[%s504 + $0x30] sm:$0xe]
      %v2987 = vld [vmem:[%s504 + $0x34] sm:$0x1]
      %v2988 = vld [vmem:[%s504 + $0x38] sm:$0xe]
      %v2989 = vld [vmem:[%s504 + $0x3c] sm:$0x1]
      %v3006 = vrot.slane %v2974, 5
      %v3007 = vrot.slane %v3006, 4
      %v3008 = vrot.slane %v2975, 5
      %v3009 = vsel %vm752, %v3007, %v3008
      %v3010 = vrot.slane %v2976, 5
      %v3011 = vrot.slane %v3010, 4
      %v3012 = vrot.slane %v2977, 5
      %v3013 = vsel %vm752, %v3011, %v3012
      %v3014 = vrot.slane %v2978, 5
      %v3015 = vrot.slane %v3014, 4
      %v3016 = vrot.slane %v2979, 5
      %v3017 = vsel %vm752, %v3015, %v3016
      %v3018 = vrot.slane %v2980, 5
      %v3019 = vrot.slane %v3018, 4
      %v3020 = vrot.slane %v2981, 5
      %v3021 = vsel %vm752, %v3019, %v3020
      %v3022 = vrot.slane %v2982, 5
      %v3023 = vrot.slane %v3022, 4
      %v3024 = vrot.slane %v2983, 5
      %v3025 = vsel %vm752, %v3023, %v3024
      %v3026 = vrot.slane %v2984, 5
      %v3027 = vrot.slane %v3026, 4
      %v3028 = vrot.slane %v2985, 5
      %v3029 = vsel %vm752, %v3027, %v3028
      %v3030 = vrot.slane %v2986, 5
      %v3031 = vrot.slane %v3030, 4
      %v3032 = vrot.slane %v2987, 5
      %v3033 = vsel %vm752, %v3031, %v3032
      %v3034 = vrot.slane %v2988, 5
      %v3035 = vrot.slane %v3034, 4
      %v3036 = vrot.slane %v2989, 5
      %v3037 = vsel %vm752, %v3035, %v3036
      %3046 = vst [vmem:[#allocation3 + $0x14] sm:$0xf] %v3009
      %3047 = vst [vmem:[#allocation3 + $0x38] sm:$0xf] %v3013
      %3048 = vst [vmem:[#allocation3 + $0x5c] sm:$0xf] %v3017
      %3049 = vst [vmem:[#allocation3 + $0x80] sm:$0xf] %v3021
      %3050 = vst [vmem:[#allocation3 + $0xa4] sm:$0xf] %v3025
      %3051 = vst [vmem:[#allocation3 + $0xc8] sm:$0xf] %v3029
      %3052 = vst [vmem:[#allocation3 + $0xec] sm:$0xf] %v3033
      %3053 = vst [vmem:[#allocation3 + $0x110] sm:$0xf] %v3037
      %v3054 = vld [vmem:[%s1041] sm:$0xf]
      %v3055 = vld [vmem:[%s1041 + $0x8] sm:$0xf]
      %v3056 = vld [vmem:[%s1041 + $0x10] sm:$0xf]
      %v3057 = vld [vmem:[%s1041 + $0x18] sm:$0xf]
      %v3058 = vld [vmem:[%s1041 + $0x20] sm:$0xf]
      %v3059 = vld [vmem:[%s1041 + $0x28] sm:$0xf]
      %v3060 = vld [vmem:[%s1041 + $0x30] sm:$0xf]
      %v3061 = vld [vmem:[%s1041 + $0x38] sm:$0xf]
      %3062 = vst [vmem:[#allocation3 + $0x18] sm:$0xf] %v3054
      %3063 = vst [vmem:[#allocation3 + $0x3c] sm:$0xf] %v3055
      %3064 = vst [vmem:[#allocation3 + $0x60] sm:$0xf] %v3056
      %3065 = vst [vmem:[#allocation3 + $0x84] sm:$0xf] %v3057
      %3066 = vst [vmem:[#allocation3 + $0xa8] sm:$0xf] %v3058
      %3067 = vst [vmem:[#allocation3 + $0xcc] sm:$0xf] %v3059
      %3068 = vst [vmem:[#allocation3 + $0xf0] sm:$0xf] %v3060
      %3069 = vst [vmem:[#allocation3 + $0x114] sm:$0xf] %v3061
      %v3070 = vld [vmem:[%s1041] sm:$0xf]
      %v3071 = vld [vmem:[%s1041 + $0x4] sm:$0x1]
      %v3072 = vld [vmem:[%s1041 + $0x8] sm:$0xf]
      %v3073 = vld [vmem:[%s1041 + $0xc] sm:$0x1]
      %v3074 = vld [vmem:[%s1041 + $0x10] sm:$0xf]
      %v3075 = vld [vmem:[%s1041 + $0x14] sm:$0x1]
      %v3076 = vld [vmem:[%s1041 + $0x18] sm:$0xf]
      %v3077 = vld [vmem:[%s1041 + $0x1c] sm:$0x1]
      %v3078 = vld [vmem:[%s1041 + $0x20] sm:$0xf]
      %v3079 = vld [vmem:[%s1041 + $0x24] sm:$0x1]
      %v3080 = vld [vmem:[%s1041 + $0x28] sm:$0xf]
      %v3081 = vld [vmem:[%s1041 + $0x2c] sm:$0x1]
      %v3082 = vld [vmem:[%s1041 + $0x30] sm:$0xf]
      %v3083 = vld [vmem:[%s1041 + $0x34] sm:$0x1]
      %v3084 = vld [vmem:[%s1041 + $0x38] sm:$0xf]
      %v3085 = vld [vmem:[%s1041 + $0x3c] sm:$0x1]
      %v3087 = vshrl.u32 %v3070, 16
      %v3089 = vrot.slane %v3087, 4
      %v3090 = vshll.u32 %v3070, 16
      %v3092 = vrot.slane %v3090, 5
      %v3093 = vor.u32 %v3089, %v3092
      %v3094 = vrot.slane %v3093, 4
      %v3096 = vshll.u32 %v3071, 16
      %v3098 = vrot.slane %v3096, 5
      %v3099 = vsel %vm589, %v3094, %v3098
      %v3101 = vshrl.u32 %v3072, 16
      %v3103 = vrot.slane %v3101, 4
      %v3104 = vshll.u32 %v3072, 16
      %v3106 = vrot.slane %v3104, 5
      %v3107 = vor.u32 %v3103, %v3106
      %v3108 = vrot.slane %v3107, 4
      %v3110 = vshll.u32 %v3073, 16
      %v3112 = vrot.slane %v3110, 5
      %v3113 = vsel %vm589, %v3108, %v3112
      %v3115 = vshrl.u32 %v3074, 16
      %v3117 = vrot.slane %v3115, 4
      %v3118 = vshll.u32 %v3074, 16
      %v3120 = vrot.slane %v3118, 5
      %v3121 = vor.u32 %v3117, %v3120
      %v3122 = vrot.slane %v3121, 4
      %v3124 = vshll.u32 %v3075, 16
      %v3126 = vrot.slane %v3124, 5
      %v3127 = vsel %vm589, %v3122, %v3126
      %v3129 = vshrl.u32 %v3076, 16
      %v3131 = vrot.slane %v3129, 4
      %v3132 = vshll.u32 %v3076, 16
      %v3134 = vrot.slane %v3132, 5
      %v3135 = vor.u32 %v3131, %v3134
      %v3136 = vrot.slane %v3135, 4
      %v3138 = vshll.u32 %v3077, 16
      %v3140 = vrot.slane %v3138, 5
      %v3141 = vsel %vm589, %v3136, %v3140
      %v3143 = vshrl.u32 %v3078, 16
      %v3145 = vrot.slane %v3143, 4
      %v3146 = vshll.u32 %v3078, 16
      %v3148 = vrot.slane %v3146, 5
      %v3149 = vor.u32 %v3145, %v3148
      %v3150 = vrot.slane %v3149, 4
      %v3152 = vshll.u32 %v3079, 16
      %v3154 = vrot.slane %v3152, 5
      %v3155 = vsel %vm589, %v3150, %v3154
      %v3157 = vshrl.u32 %v3080, 16
      %v3159 = vrot.slane %v3157, 4
      %v3160 = vshll.u32 %v3080, 16
      %v3162 = vrot.slane %v3160, 5
      %v3163 = vor.u32 %v3159, %v3162
      %v3164 = vrot.slane %v3163, 4
      %v3166 = vshll.u32 %v3081, 16
      %v3168 = vrot.slane %v3166, 5
      %v3169 = vsel %vm589, %v3164, %v3168
      %v3171 = vshrl.u32 %v3082, 16
      %v3173 = vrot.slane %v3171, 4
      %v3174 = vshll.u32 %v3082, 16
      %v3176 = vrot.slane %v3174, 5
      %v3177 = vor.u32 %v3173, %v3176
      %v3178 = vrot.slane %v3177, 4
      %v3180 = vshll.u32 %v3083, 16
      %v3182 = vrot.slane %v3180, 5
      %v3183 = vsel %vm589, %v3178, %v3182
      %v3185 = vshrl.u32 %v3084, 16
      %v3187 = vrot.slane %v3185, 4
      %v3188 = vshll.u32 %v3084, 16
      %v3190 = vrot.slane %v3188, 5
      %v3191 = vor.u32 %v3187, %v3190
      %v3192 = vrot.slane %v3191, 4
      %v3194 = vshll.u32 %v3085, 16
      %v3196 = vrot.slane %v3194, 5
      %v3197 = vsel %vm589, %v3192, %v3196
      %3206 = vst [vmem:[#allocation3 + $0x1c] sm:$0xf] %v3099
      %3207 = vst [vmem:[#allocation3 + $0x40] sm:$0xf] %v3113
      %3208 = vst [vmem:[#allocation3 + $0x64] sm:$0xf] %v3127
      %3209 = vst [vmem:[#allocation3 + $0x88] sm:$0xf] %v3141
      %3210 = vst [vmem:[#allocation3 + $0xac] sm:$0xf] %v3155
      %3211 = vst [vmem:[#allocation3 + $0xd0] sm:$0xf] %v3169
      %3212 = vst [vmem:[#allocation3 + $0xf4] sm:$0xf] %v3183
      %3213 = vst [vmem:[#allocation3 + $0x118] sm:$0xf] %v3197
      %v3214 = vld [vmem:[%s1041] sm:$0xe]
      %v3215 = vld [vmem:[%s1041 + $0x4] sm:$0x1]
      %v3216 = vld [vmem:[%s1041 + $0x8] sm:$0xe]
      %v3217 = vld [vmem:[%s1041 + $0xc] sm:$0x1]
      %v3218 = vld [vmem:[%s1041 + $0x10] sm:$0xe]
      %v3219 = vld [vmem:[%s1041 + $0x14] sm:$0x1]
      %v3220 = vld [vmem:[%s1041 + $0x18] sm:$0xe]
      %v3221 = vld [vmem:[%s1041 + $0x1c] sm:$0x1]
      %v3222 = vld [vmem:[%s1041 + $0x20] sm:$0xe]
      %v3223 = vld [vmem:[%s1041 + $0x24] sm:$0x1]
      %v3224 = vld [vmem:[%s1041 + $0x28] sm:$0xe]
      %v3225 = vld [vmem:[%s1041 + $0x2c] sm:$0x1]
      %v3226 = vld [vmem:[%s1041 + $0x30] sm:$0xe]
      %v3227 = vld [vmem:[%s1041 + $0x34] sm:$0x1]
      %v3228 = vld [vmem:[%s1041 + $0x38] sm:$0xe]
      %v3229 = vld [vmem:[%s1041 + $0x3c] sm:$0x1]
      %v3246 = vrot.slane %v3214, 5
      %v3247 = vrot.slane %v3246, 4
      %v3248 = vrot.slane %v3215, 5
      %v3249 = vsel %vm752, %v3247, %v3248
      %v3250 = vrot.slane %v3216, 5
      %v3251 = vrot.slane %v3250, 4
      %v3252 = vrot.slane %v3217, 5
      %v3253 = vsel %vm752, %v3251, %v3252
      %v3254 = vrot.slane %v3218, 5
      %v3255 = vrot.slane %v3254, 4
      %v3256 = vrot.slane %v3219, 5
      %v3257 = vsel %vm752, %v3255, %v3256
      %v3258 = vrot.slane %v3220, 5
      %v3259 = vrot.slane %v3258, 4
      %v3260 = vrot.slane %v3221, 5
      %v3261 = vsel %vm752, %v3259, %v3260
      %v3262 = vrot.slane %v3222, 5
      %v3263 = vrot.slane %v3262, 4
      %v3264 = vrot.slane %v3223, 5
      %v3265 = vsel %vm752, %v3263, %v3264
      %v3266 = vrot.slane %v3224, 5
      %v3267 = vrot.slane %v3266, 4
      %v3268 = vrot.slane %v3225, 5
      %v3269 = vsel %vm752, %v3267, %v3268
      %v3270 = vrot.slane %v3226, 5
      %v3271 = vrot.slane %v3270, 4
      %v3272 = vrot.slane %v3227, 5
      %v3273 = vsel %vm752, %v3271, %v3272
      %v3274 = vrot.slane %v3228, 5
      %v3275 = vrot.slane %v3274, 4
      %v3276 = vrot.slane %v3229, 5
      %v3277 = vsel %vm752, %v3275, %v3276
      %3286 = vst [vmem:[#allocation3 + $0x20] sm:$0xf] %v3249
      %3287 = vst [vmem:[#allocation3 + $0x44] sm:$0xf] %v3253
      %3288 = vst [vmem:[#allocation3 + $0x68] sm:$0xf] %v3257
      %3289 = vst [vmem:[#allocation3 + $0x8c] sm:$0xf] %v3261
      %3290 = vst [vmem:[#allocation3 + $0xb0] sm:$0xf] %v3265
      %3291 = vst [vmem:[#allocation3 + $0xd4] sm:$0xf] %v3269
      %3292 = vst [vmem:[#allocation3 + $0xf8] sm:$0xf] %v3273
      %3293 = vst [vmem:[#allocation3 + $0x11c] sm:$0xf] %v3277
      %v3294 = vld [vmem:[#allocation3] sm:$0xff]
      %v3295 = vld [vmem:[#allocation3 + $0x8] sm:$0xff]
      %v3296 = vld [vmem:[#allocation3 + $0x10] sm:$0xff]
      %v3297 = vld [vmem:[#allocation3 + $0x18] sm:$0xff]
      %v3298 = vld [vmem:[#allocation3 + $0x20] sm:$0xf]
      %v3299 = vld [vmem:[#allocation3 + $0x24] sm:$0xff]
      %v3300 = vld [vmem:[#allocation3 + $0x2c] sm:$0xff]
      %v3301 = vld [vmem:[#allocation3 + $0x34] sm:$0xff]
      %v3302 = vld [vmem:[#allocation3 + $0x3c] sm:$0xff]
      %v3303 = vld [vmem:[#allocation3 + $0x44] sm:$0xf]
      %v3304 = vld [vmem:[#allocation3 + $0x48] sm:$0xff]
      %v3305 = vld [vmem:[#allocation3 + $0x50] sm:$0xff]
      %v3306 = vld [vmem:[#allocation3 + $0x58] sm:$0xff]
      %v3307 = vld [vmem:[#allocation3 + $0x60] sm:$0xff]
      %v3308 = vld [vmem:[#allocation3 + $0x68] sm:$0xf]
      %v3309 = vld [vmem:[#allocation3 + $0x6c] sm:$0xff]
      %v3310 = vld [vmem:[#allocation3 + $0x74] sm:$0xff]
      %v3311 = vld [vmem:[#allocation3 + $0x7c] sm:$0xff]
      %v3312 = vld [vmem:[#allocation3 + $0x84] sm:$0xff]
      %v3313 = vld [vmem:[#allocation3 + $0x8c] sm:$0xf]
      %v3314 = vld [vmem:[#allocation3 + $0x90] sm:$0xff]
      %v3315 = vld [vmem:[#allocation3 + $0x98] sm:$0xff]
      %v3316 = vld [vmem:[#allocation3 + $0xa0] sm:$0xff]
      %v3317 = vld [vmem:[#allocation3 + $0xa8] sm:$0xff]
      %v3318 = vld [vmem:[#allocation3 + $0xb0] sm:$0xf]
      %v3319 = vld [vmem:[#allocation3 + $0xb4] sm:$0xff]
      %v3320 = vld [vmem:[#allocation3 + $0xbc] sm:$0xff]
      %v3321 = vld [vmem:[#allocation3 + $0xc4] sm:$0xff]
      %v3322 = vld [vmem:[#allocation3 + $0xcc] sm:$0xff]
      %v3323 = vld [vmem:[#allocation3 + $0xd4] sm:$0xf]
      %v3324 = vld [vmem:[#allocation3 + $0xd8] sm:$0xff]
      %v3325 = vld [vmem:[#allocation3 + $0xe0] sm:$0xff]
      %v3326 = vld [vmem:[#allocation3 + $0xe8] sm:$0xff]
      %v3327 = vld [vmem:[#allocation3 + $0xf0] sm:$0xff]
      %v3328 = vld [vmem:[#allocation3 + $0xf8] sm:$0xf]
      %v3329 = vld [vmem:[#allocation3 + $0xfc] sm:$0xff]
      %v3330 = vld [vmem:[#allocation3 + $0x104] sm:$0xff]
      %v3331 = vld [vmem:[#allocation3 + $0x10c] sm:$0xff]
      %v3332 = vld [vmem:[#allocation3 + $0x114] sm:$0xff]
      %v3333 = vld [vmem:[#allocation3 + $0x11c] sm:$0xf]
      %v3334 = vld [vmem:[%s3] sm:$0xf]
      %v3335 = vld [vmem:[%s3 + $0x4] sm:$0xf]
      %v3336 = vld [vmem:[%s3 + $0x8] sm:$0xf]
      %v3337 = vld [vmem:[%s3 + $0xc] sm:$0xf]
      %v3338 = vld [vmem:[%s3 + $0x10] sm:$0xf]
      %v3339 = vld [vmem:[%s3 + $0x14] sm:$0xf]
      %v3340 = vld [vmem:[%s3 + $0x18] sm:$0xf]
      %v3341 = vld [vmem:[%s3 + $0x1c] sm:$0xf]
      %v3342 = vld [vmem:[%s3 + $0x20] sm:$0xf]
      %v3343 = vld [vmem:[%s3 + $0x24] sm:$0xf]
      %v3344 = vld [vmem:[%s3 + $0x28] sm:$0xf]
      %v3345 = vld [vmem:[%s3 + $0x2c] sm:$0xf]
      %v3346 = vld [vmem:[%s3 + $0x30] sm:$0xf]
      %v3347 = vld [vmem:[%s3 + $0x34] sm:$0xf]
      %v3348 = vld [vmem:[%s3 + $0x38] sm:$0xf]
      %v3349 = vld [vmem:[%s3 + $0x3c] sm:$0xf]
      %v3350 = vld [vmem:[%s3 + $0x40] sm:$0xf]
      %v3351 = vld [vmem:[%s3 + $0x44] sm:$0xf]
      %v3352 = vld [vmem:[%s3 + $0x48] sm:$0xf]
      %v3353 = vld [vmem:[%s3 + $0x4c] sm:$0xf]
      %v3354 = vld [vmem:[%s3 + $0x50] sm:$0xf]
      %v3355 = vld [vmem:[%s3 + $0x54] sm:$0xf]
      %v3356 = vld [vmem:[%s3 + $0x58] sm:$0xf]
      %v3357 = vld [vmem:[%s3 + $0x5c] sm:$0xf]
      %v3358 = vld [vmem:[%s3 + $0x60] sm:$0xf]
      %v3359 = vld [vmem:[%s3 + $0x64] sm:$0xf]
      %v3360 = vld [vmem:[%s3 + $0x68] sm:$0xf]
      %v3361 = vld [vmem:[%s3 + $0x6c] sm:$0xf]
      %v3362 = vld [vmem:[%s3 + $0x70] sm:$0xf]
      %v3363 = vld [vmem:[%s3 + $0x74] sm:$0xf]
      %v3364 = vld [vmem:[%s3 + $0x78] sm:$0xf]
      %v3365 = vld [vmem:[%s3 + $0x7c] sm:$0xf]
      %v3366 = vld [vmem:[%s3 + $0x80] sm:$0xf]
      %v3367 = vld [vmem:[%s3 + $0x84] sm:$0xf]
      %v3368 = vld [vmem:[%s3 + $0x88] sm:$0xf]
      %v3369 = vld [vmem:[%s3 + $0x8c] sm:$0xf]
      %v3370 = vld [vmem:[%s3 + $0x90] sm:$0xf]
      %v3371 = vld [vmem:[%s3 + $0x94] sm:$0xf]
      %v3372 = vld [vmem:[%s3 + $0x98] sm:$0xf]
      %v3373 = vld [vmem:[%s3 + $0x9c] sm:$0xf]
      %v3374 = vld [vmem:[%s3 + $0xa0] sm:$0xf]
      %v3375 = vld [vmem:[%s3 + $0xa4] sm:$0xf]
      %v3376 = vld [vmem:[%s3 + $0xa8] sm:$0xf]
      %v3377 = vld [vmem:[%s3 + $0xac] sm:$0xf]
      %v3378 = vld [vmem:[%s3 + $0xb0] sm:$0xf]
      %v3379 = vld [vmem:[%s3 + $0xb4] sm:$0xf]
      %v3380 = vld [vmem:[%s3 + $0xb8] sm:$0xf]
      %v3381 = vld [vmem:[%s3 + $0xbc] sm:$0xf]
      %v3382 = vld [vmem:[%s3 + $0xc0] sm:$0xf]
      %v3383 = vld [vmem:[%s3 + $0xc4] sm:$0xf]
      %v3384 = vld [vmem:[%s3 + $0xc8] sm:$0xf]
      %v3385 = vld [vmem:[%s3 + $0xcc] sm:$0xf]
      %v3386 = vld [vmem:[%s3 + $0xd0] sm:$0xf]
      %v3387 = vld [vmem:[%s3 + $0xd4] sm:$0xf]
      %v3388 = vld [vmem:[%s3 + $0xd8] sm:$0xf]
      %v3389 = vld [vmem:[%s3 + $0xdc] sm:$0xf]
      %v3390 = vld [vmem:[%s3 + $0xe0] sm:$0xf]
      %v3391 = vld [vmem:[%s3 + $0xe4] sm:$0xf]
      %v3392 = vld [vmem:[%s3 + $0xe8] sm:$0xf]
      %v3393 = vld [vmem:[%s3 + $0xec] sm:$0xf]
      %v3394 = vld [vmem:[%s3 + $0xf0] sm:$0xf]
      %v3395 = vld [vmem:[%s3 + $0xf4] sm:$0xf]
      %v3396 = vld [vmem:[%s3 + $0xf8] sm:$0xf]
      %v3397 = vld [vmem:[%s3 + $0xfc] sm:$0xf]
      %v3398 = vld [vmem:[%s3 + $0x100] sm:$0xf]
      %v3399 = vld [vmem:[%s3 + $0x104] sm:$0xf]
      %v3400 = vld [vmem:[%s3 + $0x108] sm:$0xf]
      %v3401 = vld [vmem:[%s3 + $0x10c] sm:$0xf]
      %v3402 = vld [vmem:[%s3 + $0x110] sm:$0xf]
      %v3403 = vld [vmem:[%s3 + $0x114] sm:$0xf]
      %v3404 = vld [vmem:[%s3 + $0x118] sm:$0xf]
      %v3405 = vld [vmem:[%s3 + $0x11c] sm:$0xf]
      %v3406 = vld [vmem:[%s3 + $0x120] sm:$0xf]
      %v3407 = vld [vmem:[%s3 + $0x124] sm:$0xf]
      %v3408 = vld [vmem:[%s3 + $0x128] sm:$0xf]
      %v3409 = vld [vmem:[%s3 + $0x12c] sm:$0xf]
      %v3410 = vld [vmem:[%s3 + $0x130] sm:$0xf]
      %v3411 = vld [vmem:[%s3 + $0x134] sm:$0xf]
      %v3412 = vld [vmem:[%s3 + $0x138] sm:$0xf]
      %v3413 = vld [vmem:[%s3 + $0x13c] sm:$0xf]
      %v3414 = vld [vmem:[%s3 + $0x140] sm:$0xf]
      %v3415 = vld [vmem:[%s3 + $0x144] sm:$0xf]
      %v3416 = vld [vmem:[%s3 + $0x148] sm:$0xf]
      %v3417 = vld [vmem:[%s3 + $0x14c] sm:$0xf]
      %v3418 = vld [vmem:[%s3 + $0x150] sm:$0xf]
      %v3419 = vld [vmem:[%s3 + $0x154] sm:$0xf]
      %v3420 = vld [vmem:[%s3 + $0x158] sm:$0xf]
      %v3421 = vld [vmem:[%s3 + $0x15c] sm:$0xf]
      %v3422 = vld [vmem:[%s3 + $0x160] sm:$0xf]
      %v3423 = vld [vmem:[%s3 + $0x164] sm:$0xf]
      %v3424 = vld [vmem:[%s3 + $0x168] sm:$0xf]
      %v3425 = vld [vmem:[%s3 + $0x16c] sm:$0xf]
      %v3426 = vld [vmem:[%s3 + $0x170] sm:$0xf]
      %v3427 = vld [vmem:[%s3 + $0x174] sm:$0xf]
      %v3428 = vld [vmem:[%s3 + $0x178] sm:$0xf]
      %v3429 = vld [vmem:[%s3 + $0x17c] sm:$0xf]
      %v3430 = vld [vmem:[%s3 + $0x180] sm:$0xf]
      %v3431 = vld [vmem:[%s3 + $0x184] sm:$0xf]
      %v3432 = vld [vmem:[%s3 + $0x188] sm:$0xf]
      %v3433 = vld [vmem:[%s3 + $0x18c] sm:$0xf]
      %v3434 = vld [vmem:[%s3 + $0x190] sm:$0xf]
      %v3435 = vld [vmem:[%s3 + $0x194] sm:$0xf]
      %v3436 = vld [vmem:[%s3 + $0x198] sm:$0xf]
      %v3437 = vld [vmem:[%s3 + $0x19c] sm:$0xf]
      %v3438 = vld [vmem:[%s3 + $0x1a0] sm:$0xf]
      %v3439 = vld [vmem:[%s3 + $0x1a4] sm:$0xf]
      %v3440 = vld [vmem:[%s3 + $0x1a8] sm:$0xf]
      %v3441 = vld [vmem:[%s3 + $0x1ac] sm:$0xf]
      %v3442 = vld [vmem:[%s3 + $0x1b0] sm:$0xf]
      %v3443 = vld [vmem:[%s3 + $0x1b4] sm:$0xf]
      %v3444 = vld [vmem:[%s3 + $0x1b8] sm:$0xf]
      %v3445 = vld [vmem:[%s3 + $0x1bc] sm:$0xf]
      %v3446 = vld [vmem:[%s3 + $0x1c0] sm:$0xf]
      %v3447 = vld [vmem:[%s3 + $0x1c4] sm:$0xf]
      %v3448 = vld [vmem:[%s3 + $0x1c8] sm:$0xf]
      %v3449 = vld [vmem:[%s3 + $0x1cc] sm:$0xf]
      %v3450 = vld [vmem:[%s3 + $0x1d0] sm:$0xf]
      %v3451 = vld [vmem:[%s3 + $0x1d4] sm:$0xf]
      %v3452 = vld [vmem:[%s3 + $0x1d8] sm:$0xf]
      %v3453 = vld [vmem:[%s3 + $0x1dc] sm:$0xf]
      %v3454 = vld [vmem:[%s3 + $0x1e0] sm:$0xf]
      %v3455 = vld [vmem:[%s3 + $0x1e4] sm:$0xf]
      %v3456 = vld [vmem:[%s3 + $0x1e8] sm:$0xf]
      %v3457 = vld [vmem:[%s3 + $0x1ec] sm:$0xf]
      %v3458 = vld [vmem:[%s3 + $0x1f0] sm:$0xf]
      %v3459 = vld [vmem:[%s3 + $0x1f4] sm:$0xf]
      %v3460 = vld [vmem:[%s3 + $0x1f8] sm:$0xf]
      %v3461 = vld [vmem:[%s3 + $0x1fc] sm:$0xf]
      %v3462 = vld [vmem:[%s3 + $0x200] sm:$0xf]
      %v3463 = vld [vmem:[%s3 + $0x204] sm:$0xf]
      %v3464 = vld [vmem:[%s3 + $0x208] sm:$0xf]
      %v3465 = vld [vmem:[%s3 + $0x20c] sm:$0xf]
      %v3466 = vld [vmem:[%s3 + $0x210] sm:$0xf]
      %v3467 = vld [vmem:[%s3 + $0x214] sm:$0xf]
      %v3468 = vld [vmem:[%s3 + $0x218] sm:$0xf]
      %v3469 = vld [vmem:[%s3 + $0x21c] sm:$0xf]
      %v3470 = vld [vmem:[%s3 + $0x220] sm:$0xf]
      %v3471 = vld [vmem:[%s3 + $0x224] sm:$0xf]
      %v3472 = vld [vmem:[%s3 + $0x228] sm:$0xf]
      %v3473 = vld [vmem:[%s3 + $0x22c] sm:$0xf]
      %v3474 = vld [vmem:[%s3 + $0x230] sm:$0xf]
      %v3475 = vld [vmem:[%s3 + $0x234] sm:$0xf]
      %v3476 = vld [vmem:[%s3 + $0x238] sm:$0xf]
      %v3477 = vld [vmem:[%s3 + $0x23c] sm:$0xf]
      %v3478 = vld [vmem:[%s4] sm:$0x1]
      %v3480 = vlaneseq
      %v3481 = vshrl.u32 %v3480, 7
      %v3482 = vsub.s32 0, %v3481
      %v3483 = vrot.slane %v3478, %v3482
      %v3525 = vunpack.c.l.b16 %v3294
      %v3526 = vunpack.c.h.b16 %v3294
      %v3527 = vunpack.c.l.b16 %v3295
      %v3528 = vunpack.c.h.b16 %v3295
      %v3529 = vunpack.c.l.b16 %v3296
      %v3530 = vunpack.c.h.b16 %v3296
      %v3531 = vunpack.c.l.b16 %v3297
      %v3532 = vunpack.c.h.b16 %v3297
      %v3533 = vunpack.c.l.b16 %v3298
      %v3534 = vunpack.c.l.b16 %v3299
      %v3535 = vunpack.c.h.b16 %v3299
      %v3536 = vunpack.c.l.b16 %v3300
      %v3537 = vunpack.c.h.b16 %v3300
      %v3538 = vunpack.c.l.b16 %v3301
      %v3539 = vunpack.c.h.b16 %v3301
      %v3540 = vunpack.c.l.b16 %v3302
      %v3541 = vunpack.c.h.b16 %v3302
      %v3542 = vunpack.c.l.b16 %v3303
      %v3543 = vunpack.c.l.b16 %v3304
      %v3544 = vunpack.c.h.b16 %v3304
      %v3545 = vunpack.c.l.b16 %v3305
      %v3546 = vunpack.c.h.b16 %v3305
      %v3547 = vunpack.c.l.b16 %v3306
      %v3548 = vunpack.c.h.b16 %v3306
      %v3549 = vunpack.c.l.b16 %v3307
      %v3550 = vunpack.c.h.b16 %v3307
      %v3551 = vunpack.c.l.b16 %v3308
      %v3552 = vunpack.c.l.b16 %v3309
      %v3553 = vunpack.c.h.b16 %v3309
      %v3554 = vunpack.c.l.b16 %v3310
      %v3555 = vunpack.c.h.b16 %v3310
      %v3556 = vunpack.c.l.b16 %v3311
      %v3557 = vunpack.c.h.b16 %v3311
      %v3558 = vunpack.c.l.b16 %v3312
      %v3559 = vunpack.c.h.b16 %v3312
      %v3560 = vunpack.c.l.b16 %v3313
      %v3561 = vunpack.c.l.b16 %v3314
      %v3562 = vunpack.c.h.b16 %v3314
      %v3563 = vunpack.c.l.b16 %v3315
      %v3564 = vunpack.c.h.b16 %v3315
      %v3565 = vunpack.c.l.b16 %v3316
      %v3566 = vunpack.c.h.b16 %v3316
      %v3567 = vunpack.c.l.b16 %v3317
      %v3568 = vunpack.c.h.b16 %v3317
      %v3569 = vunpack.c.l.b16 %v3318
      %v3570 = vunpack.c.l.b16 %v3319
      %v3571 = vunpack.c.h.b16 %v3319
      %v3572 = vunpack.c.l.b16 %v3320
      %v3573 = vunpack.c.h.b16 %v3320
      %v3574 = vunpack.c.l.b16 %v3321
      %v3575 = vunpack.c.h.b16 %v3321
      %v3576 = vunpack.c.l.b16 %v3322
      %v3577 = vunpack.c.h.b16 %v3322
      %v3578 = vunpack.c.l.b16 %v3323
      %v3579 = vunpack.c.l.b16 %v3324
      %v3580 = vunpack.c.h.b16 %v3324
      %v3581 = vunpack.c.l.b16 %v3325
      %v3582 = vunpack.c.h.b16 %v3325
      %v3583 = vunpack.c.l.b16 %v3326
      %v3584 = vunpack.c.h.b16 %v3326
      %v3585 = vunpack.c.l.b16 %v3327
      %v3586 = vunpack.c.h.b16 %v3327
      %v3587 = vunpack.c.l.b16 %v3328
      %v3588 = vunpack.c.l.b16 %v3329
      %v3589 = vunpack.c.h.b16 %v3329
      %v3590 = vunpack.c.l.b16 %v3330
      %v3591 = vunpack.c.h.b16 %v3330
      %v3592 = vunpack.c.l.b16 %v3331
      %v3593 = vunpack.c.h.b16 %v3331
      %v3594 = vunpack.c.l.b16 %v3332
      %v3595 = vunpack.c.h.b16 %v3332
      %v3596 = vunpack.c.l.b16 %v3333
      %v3597 = vpack.c.b16 %v3534, %v3525
      %v3598 = vpack.c.b16 %v3535, %v3526
      %v3599 = vpack.c.b16 %v3536, %v3527
      %v3600 = vpack.c.b16 %v3537, %v3528
      %v3601 = vpack.c.b16 %v3538, %v3529
      %v3602 = vpack.c.b16 %v3539, %v3530
      %v3603 = vpack.c.b16 %v3540, %v3531
      %v3604 = vpack.c.b16 %v3541, %v3532
      %v3605 = vpack.c.b16 %v3542, %v3533
      %v3606 = vpack.c.b16 %v3552, %v3543
      %v3607 = vpack.c.b16 %v3553, %v3544
      %v3608 = vpack.c.b16 %v3554, %v3545
      %v3609 = vpack.c.b16 %v3555, %v3546
      %v3610 = vpack.c.b16 %v3556, %v3547
      %v3611 = vpack.c.b16 %v3557, %v3548
      %v3612 = vpack.c.b16 %v3558, %v3549
      %v3613 = vpack.c.b16 %v3559, %v3550
      %v3614 = vpack.c.b16 %v3560, %v3551
      %v3615 = vpack.c.b16 %v3570, %v3561
      %v3616 = vpack.c.b16 %v3571, %v3562
      %v3617 = vpack.c.b16 %v3572, %v3563
      %v3618 = vpack.c.b16 %v3573, %v3564
      %v3619 = vpack.c.b16 %v3574, %v3565
      %v3620 = vpack.c.b16 %v3575, %v3566
      %v3621 = vpack.c.b16 %v3576, %v3567
      %v3622 = vpack.c.b16 %v3577, %v3568
      %v3623 = vpack.c.b16 %v3578, %v3569
      %v3624 = vpack.c.b16 %v3588, %v3579
      %v3625 = vpack.c.b16 %v3589, %v3580
      %v3626 = vpack.c.b16 %v3590, %v3581
      %v3627 = vpack.c.b16 %v3591, %v3582
      %v3628 = vpack.c.b16 %v3592, %v3583
      %v3629 = vpack.c.b16 %v3593, %v3584
      %v3630 = vpack.c.b16 %v3594, %v3585
      %v3631 = vpack.c.b16 %v3595, %v3586
      %v3632 = vpack.c.b16 %v3596, %v3587
      %v3813 = vunpack.c.l.b16 %v3334
      %v3814 = vunpack.c.l.b16 %v3335
      %v3815 = vunpack.c.l.b16 %v3336
      %v3816 = vunpack.c.l.b16 %v3337
      %v3817 = vunpack.c.l.b16 %v3338
      %v3818 = vunpack.c.l.b16 %v3339
      %v3819 = vunpack.c.l.b16 %v3340
      %v3820 = vunpack.c.l.b16 %v3341
      %v3821 = vunpack.c.l.b16 %v3342
      %v3822 = vunpack.c.l.b16 %v3343
      %v3823 = vunpack.c.l.b16 %v3344
      %v3824 = vunpack.c.l.b16 %v3345
      %v3825 = vunpack.c.l.b16 %v3346
      %v3826 = vunpack.c.l.b16 %v3347
      %v3827 = vunpack.c.l.b16 %v3348
      %v3828 = vunpack.c.l.b16 %v3349
      %v3829 = vunpack.c.l.b16 %v3350
      %v3830 = vunpack.c.l.b16 %v3351
      %v3831 = vunpack.c.l.b16 %v3352
      %v3832 = vunpack.c.l.b16 %v3353
      %v3833 = vunpack.c.l.b16 %v3354
      %v3834 = vunpack.c.l.b16 %v3355
      %v3835 = vunpack.c.l.b16 %v3356
      %v3836 = vunpack.c.l.b16 %v3357
      %v3837 = vunpack.c.l.b16 %v3358
      %v3838 = vunpack.c.l.b16 %v3359
      %v3839 = vunpack.c.l.b16 %v3360
      %v3840 = vunpack.c.l.b16 %v3361
      %v3841 = vunpack.c.l.b16 %v3362
      %v3842 = vunpack.c.l.b16 %v3363
      %v3843 = vunpack.c.l.b16 %v3364
      %v3844 = vunpack.c.l.b16 %v3365
      %v3845 = vunpack.c.l.b16 %v3366
      %v3846 = vunpack.c.l.b16 %v3367
      %v3847 = vunpack.c.l.b16 %v3368
      %v3848 = vunpack.c.l.b16 %v3369
      %v3849 = vunpack.c.l.b16 %v3370
      %v3850 = vunpack.c.l.b16 %v3371
      %v3851 = vunpack.c.l.b16 %v3372
      %v3852 = vunpack.c.l.b16 %v3373
      %v3853 = vunpack.c.l.b16 %v3374
      %v3854 = vunpack.c.l.b16 %v3375
      %v3855 = vunpack.c.l.b16 %v3376
      %v3856 = vunpack.c.l.b16 %v3377
      %v3857 = vunpack.c.l.b16 %v3378
      %v3858 = vunpack.c.l.b16 %v3379
      %v3859 = vunpack.c.l.b16 %v3380
      %v3860 = vunpack.c.l.b16 %v3381
      %v3861 = vunpack.c.l.b16 %v3382
      %v3862 = vunpack.c.l.b16 %v3383
      %v3863 = vunpack.c.l.b16 %v3384
      %v3864 = vunpack.c.l.b16 %v3385
      %v3865 = vunpack.c.l.b16 %v3386
      %v3866 = vunpack.c.l.b16 %v3387
      %v3867 = vunpack.c.l.b16 %v3388
      %v3868 = vunpack.c.l.b16 %v3389
      %v3869 = vunpack.c.l.b16 %v3390
      %v3870 = vunpack.c.l.b16 %v3391
      %v3871 = vunpack.c.l.b16 %v3392
      %v3872 = vunpack.c.l.b16 %v3393
      %v3873 = vunpack.c.l.b16 %v3394
      %v3874 = vunpack.c.l.b16 %v3395
      %v3875 = vunpack.c.l.b16 %v3396
      %v3876 = vunpack.c.l.b16 %v3397
      %v3877 = vunpack.c.l.b16 %v3398
      %v3878 = vunpack.c.l.b16 %v3399
      %v3879 = vunpack.c.l.b16 %v3400
      %v3880 = vunpack.c.l.b16 %v3401
      %v3881 = vunpack.c.l.b16 %v3402
      %v3882 = vunpack.c.l.b16 %v3403
      %v3883 = vunpack.c.l.b16 %v3404
      %v3884 = vunpack.c.l.b16 %v3405
      %v3885 = vunpack.c.l.b16 %v3406
      %v3886 = vunpack.c.l.b16 %v3407
      %v3887 = vunpack.c.l.b16 %v3408
      %v3888 = vunpack.c.l.b16 %v3409
      %v3889 = vunpack.c.l.b16 %v3410
      %v3890 = vunpack.c.l.b16 %v3411
      %v3891 = vunpack.c.l.b16 %v3412
      %v3892 = vunpack.c.l.b16 %v3413
      %v3893 = vunpack.c.l.b16 %v3414
      %v3894 = vunpack.c.l.b16 %v3415
      %v3895 = vunpack.c.l.b16 %v3416
      %v3896 = vunpack.c.l.b16 %v3417
      %v3897 = vunpack.c.l.b16 %v3418
      %v3898 = vunpack.c.l.b16 %v3419
      %v3899 = vunpack.c.l.b16 %v3420
      %v3900 = vunpack.c.l.b16 %v3421
      %v3901 = vunpack.c.l.b16 %v3422
      %v3902 = vunpack.c.l.b16 %v3423
      %v3903 = vunpack.c.l.b16 %v3424
      %v3904 = vunpack.c.l.b16 %v3425
      %v3905 = vunpack.c.l.b16 %v3426
      %v3906 = vunpack.c.l.b16 %v3427
      %v3907 = vunpack.c.l.b16 %v3428
      %v3908 = vunpack.c.l.b16 %v3429
      %v3909 = vunpack.c.l.b16 %v3430
      %v3910 = vunpack.c.l.b16 %v3431
      %v3911 = vunpack.c.l.b16 %v3432
      %v3912 = vunpack.c.l.b16 %v3433
      %v3913 = vunpack.c.l.b16 %v3434
      %v3914 = vunpack.c.l.b16 %v3435
      %v3915 = vunpack.c.l.b16 %v3436
      %v3916 = vunpack.c.l.b16 %v3437
      %v3917 = vunpack.c.l.b16 %v3438
      %v3918 = vunpack.c.l.b16 %v3439
      %v3919 = vunpack.c.l.b16 %v3440
      %v3920 = vunpack.c.l.b16 %v3441
      %v3921 = vunpack.c.l.b16 %v3442
      %v3922 = vunpack.c.l.b16 %v3443
      %v3923 = vunpack.c.l.b16 %v3444
      %v3924 = vunpack.c.l.b16 %v3445
      %v3925 = vunpack.c.l.b16 %v3446
      %v3926 = vunpack.c.l.b16 %v3447
      %v3927 = vunpack.c.l.b16 %v3448
      %v3928 = vunpack.c.l.b16 %v3449
      %v3929 = vunpack.c.l.b16 %v3450
      %v3930 = vunpack.c.l.b16 %v3451
      %v3931 = vunpack.c.l.b16 %v3452
      %v3932 = vunpack.c.l.b16 %v3453
      %v3933 = vunpack.c.l.b16 %v3454
      %v3934 = vunpack.c.l.b16 %v3455
      %v3935 = vunpack.c.l.b16 %v3456
      %v3936 = vunpack.c.l.b16 %v3457
      %v3937 = vunpack.c.l.b16 %v3458
      %v3938 = vunpack.c.l.b16 %v3459
      %v3939 = vunpack.c.l.b16 %v3460
      %v3940 = vunpack.c.l.b16 %v3461
      %v3941 = vunpack.c.l.b16 %v3462
      %v3942 = vunpack.c.l.b16 %v3463
      %v3943 = vunpack.c.l.b16 %v3464
      %v3944 = vunpack.c.l.b16 %v3465
      %v3945 = vunpack.c.l.b16 %v3466
      %v3946 = vunpack.c.l.b16 %v3467
      %v3947 = vunpack.c.l.b16 %v3468
      %v3948 = vunpack.c.l.b16 %v3469
      %v3949 = vunpack.c.l.b16 %v3470
      %v3950 = vunpack.c.l.b16 %v3471
      %v3951 = vunpack.c.l.b16 %v3472
      %v3952 = vunpack.c.l.b16 %v3473
      %v3953 = vunpack.c.l.b16 %v3474
      %v3954 = vunpack.c.l.b16 %v3475
      %v3955 = vunpack.c.l.b16 %v3476
      %v3956 = vunpack.c.l.b16 %v3477
      %v3957 = vpack.c.b16 %v3814, %v3813
      %v3958 = vpack.c.b16 %v3816, %v3815
      %v3959 = vpack.c.b16 %v3818, %v3817
      %v3960 = vpack.c.b16 %v3820, %v3819
      %v3961 = vpack.c.b16 %v3822, %v3821
      %v3962 = vpack.c.b16 %v3824, %v3823
      %v3963 = vpack.c.b16 %v3826, %v3825
      %v3964 = vpack.c.b16 %v3828, %v3827
      %v3965 = vpack.c.b16 %v3830, %v3829
      %v3966 = vpack.c.b16 %v3832, %v3831
      %v3967 = vpack.c.b16 %v3834, %v3833
      %v3968 = vpack.c.b16 %v3836, %v3835
      %v3969 = vpack.c.b16 %v3838, %v3837
      %v3970 = vpack.c.b16 %v3840, %v3839
      %v3971 = vpack.c.b16 %v3842, %v3841
      %v3972 = vpack.c.b16 %v3844, %v3843
      %v3973 = vpack.c.b16 %v3846, %v3845
      %v3974 = vpack.c.b16 %v3848, %v3847
      %v3975 = vpack.c.b16 %v3850, %v3849
      %v3976 = vpack.c.b16 %v3852, %v3851
      %v3977 = vpack.c.b16 %v3854, %v3853
      %v3978 = vpack.c.b16 %v3856, %v3855
      %v3979 = vpack.c.b16 %v3858, %v3857
      %v3980 = vpack.c.b16 %v3860, %v3859
      %v3981 = vpack.c.b16 %v3862, %v3861
      %v3982 = vpack.c.b16 %v3864, %v3863
      %v3983 = vpack.c.b16 %v3866, %v3865
      %v3984 = vpack.c.b16 %v3868, %v3867
      %v3985 = vpack.c.b16 %v3870, %v3869
      %v3986 = vpack.c.b16 %v3872, %v3871
      %v3987 = vpack.c.b16 %v3874, %v3873
      %v3988 = vpack.c.b16 %v3876, %v3875
      %v3989 = vpack.c.b16 %v3878, %v3877
      %v3990 = vpack.c.b16 %v3880, %v3879
      %v3991 = vpack.c.b16 %v3882, %v3881
      %v3992 = vpack.c.b16 %v3884, %v3883
      %v3993 = vpack.c.b16 %v3886, %v3885
      %v3994 = vpack.c.b16 %v3888, %v3887
      %v3995 = vpack.c.b16 %v3890, %v3889
      %v3996 = vpack.c.b16 %v3892, %v3891
      %v3997 = vpack.c.b16 %v3894, %v3893
      %v3998 = vpack.c.b16 %v3896, %v3895
      %v3999 = vpack.c.b16 %v3898, %v3897
      %v4000 = vpack.c.b16 %v3900, %v3899
      %v4001 = vpack.c.b16 %v3902, %v3901
      %v4002 = vpack.c.b16 %v3904, %v3903
      %v4003 = vpack.c.b16 %v3906, %v3905
      %v4004 = vpack.c.b16 %v3908, %v3907
      %v4005 = vpack.c.b16 %v3910, %v3909
      %v4006 = vpack.c.b16 %v3912, %v3911
      %v4007 = vpack.c.b16 %v3914, %v3913
      %v4008 = vpack.c.b16 %v3916, %v3915
      %v4009 = vpack.c.b16 %v3918, %v3917
      %v4010 = vpack.c.b16 %v3920, %v3919
      %v4011 = vpack.c.b16 %v3922, %v3921
      %v4012 = vpack.c.b16 %v3924, %v3923
      %v4013 = vpack.c.b16 %v3926, %v3925
      %v4014 = vpack.c.b16 %v3928, %v3927
      %v4015 = vpack.c.b16 %v3930, %v3929
      %v4016 = vpack.c.b16 %v3932, %v3931
      %v4017 = vpack.c.b16 %v3934, %v3933
      %v4018 = vpack.c.b16 %v3936, %v3935
      %v4019 = vpack.c.b16 %v3938, %v3937
      %v4020 = vpack.c.b16 %v3940, %v3939
      %v4021 = vpack.c.b16 %v3942, %v3941
      %v4022 = vpack.c.b16 %v3944, %v3943
      %v4023 = vpack.c.b16 %v3946, %v3945
      %v4024 = vpack.c.b16 %v3948, %v3947
      %v4025 = vpack.c.b16 %v3950, %v3949
      %v4026 = vpack.c.b16 %v3952, %v3951
      %v4027 = vpack.c.b16 %v3954, %v3953
      %v4028 = vpack.c.b16 %v3956, %v3955
      %4101 = vmatprep.subr.bf16.mxu0 0
      %4102 = vmatpush1.bf16.msra.mxu0 %v3964
      %4103 = vmatprep.subr.bf16.mxu0 0
      %4104 = vmatpush1.bf16.msra.mxu0 %v3963
      %4105 = vmatprep.subr.bf16.mxu0 0
      %4106 = vmatpush1.bf16.msra.mxu0 %v3962
      %4107 = vmatprep.subr.bf16.mxu0 0
      %4108 = vmatpush1.bf16.msra.mxu0 %v3961
      %4109 = vmatprep.subr.bf16.mxu0 0
      %4110 = vmatpush1.bf16.msra.mxu0 %v3960
      %4111 = vmatprep.subr.bf16.mxu0 0
      %4112 = vmatpush1.bf16.msra.mxu0 %v3959
      %4113 = vmatprep.subr.bf16.mxu0 0
      %4114 = vmatpush1.bf16.msra.mxu0 %v3958
      %4115 = vmatprep.subr.bf16.mxu0 0
      %4116 = vmatpush1.bf16.msra.mxu0 %v3957
      %4117 = vmatprep.subr.bf16.mxu0 0
      %4118 = vmatpush2.bf16.msra.mxu0 %v3972
      %4119 = vmatprep.subr.bf16.mxu0 0
      %4120 = vmatpush2.bf16.msra.mxu0 %v3971
      %4121 = vmatprep.subr.bf16.mxu0 0
      %4122 = vmatpush2.bf16.msra.mxu0 %v3970
      %4123 = vmatprep.subr.bf16.mxu0 0
      %4124 = vmatpush2.bf16.msra.mxu0 %v3969
      %4125 = vmatprep.subr.bf16.mxu0 0
      %4126 = vmatpush2.bf16.msra.mxu0 %v3968
      %4127 = vmatprep.subr.bf16.mxu0 0
      %4128 = vmatpush2.bf16.msra.mxu0 %v3967
      %4129 = vmatprep.subr.bf16.mxu0 0
      %4130 = vmatpush2.bf16.msra.mxu0 %v3966
      %4131 = vmatprep.subr.bf16.mxu0 0
      %4132 = vmatpush2.bf16.msra.mxu0 %v3965
      %4133 = vmatprep.mubr.bf16.mxu0 %v3598
      %4134 = vmatmul.mubr.bf16.gmra.mxu0 %v3597
      %v4135 = vpop.f32.mrf.mxu0
      %v4136 = vadd.f32 %v3483, %v4135
      %v4137 = vpop.f32.mrf.mxu0
      %v4138 = vpop.f32.mrf.mxu0
      %v4139 = vadd.f32 %v3483, %v4138
      %v4140 = vpop.f32.mrf.mxu0
      %4141 = vmatprep.mubr.bf16.mxu0 %v3607
      %4142 = vmatmul.mubr.bf16.gmra.mxu0 %v3606
      %v4143 = vpop.f32.mrf.mxu0
      %v4144 = vadd.f32 %v3483, %v4143
      %v4145 = vpop.f32.mrf.mxu0
      %v4146 = vpop.f32.mrf.mxu0
      %v4147 = vadd.f32 %v3483, %v4146
      %v4148 = vpop.f32.mrf.mxu0
      %4149 = vmatprep.mubr.bf16.mxu0 %v3616
      %4150 = vmatmul.mubr.bf16.gmra.mxu0 %v3615
      %v4151 = vpop.f32.mrf.mxu0
      %v4152 = vadd.f32 %v3483, %v4151
      %v4153 = vpop.f32.mrf.mxu0
      %v4154 = vpop.f32.mrf.mxu0
      %v4155 = vadd.f32 %v3483, %v4154
      %v4156 = vpop.f32.mrf.mxu0
      %4157 = vmatprep.mubr.bf16.mxu0 %v3625
      %4158 = vmatmul.mubr.bf16.gmra.mxu0 %v3624
      %v4159 = vpop.f32.mrf.mxu0
      %v4160 = vadd.f32 %v3483, %v4159
      %v4161 = vpop.f32.mrf.mxu0
      %v4162 = vpop.f32.mrf.mxu0
      %v4163 = vadd.f32 %v3483, %v4162
      %v4164 = vpop.f32.mrf.mxu0
      %4165 = vdwg.mxu0
      %4166 = vmatprep.subr.bf16.mxu0 0
      %4167 = vmatpush1.bf16.msra.mxu0 %v3980
      %4168 = vmatprep.subr.bf16.mxu0 0
      %4169 = vmatpush1.bf16.msra.mxu0 %v3979
      %4170 = vmatprep.subr.bf16.mxu0 0
      %4171 = vmatpush1.bf16.msra.mxu0 %v3978
      %4172 = vmatprep.subr.bf16.mxu0 0
      %4173 = vmatpush1.bf16.msra.mxu0 %v3977
      %4174 = vmatprep.subr.bf16.mxu0 0
      %4175 = vmatpush1.bf16.msra.mxu0 %v3976
      %4176 = vmatprep.subr.bf16.mxu0 0
      %4177 = vmatpush1.bf16.msra.mxu0 %v3975
      %4178 = vmatprep.subr.bf16.mxu0 0
      %4179 = vmatpush1.bf16.msra.mxu0 %v3974
      %4180 = vmatprep.subr.bf16.mxu0 0
      %4181 = vmatpush1.bf16.msra.mxu0 %v3973
      %4182 = vmatprep.subr.bf16.mxu0 0
      %4183 = vmatpush2.bf16.msra.mxu0 %v3988
      %4184 = vmatprep.subr.bf16.mxu0 0
      %4185 = vmatpush2.bf16.msra.mxu0 %v3987
      %4186 = vmatprep.subr.bf16.mxu0 0
      %4187 = vmatpush2.bf16.msra.mxu0 %v3986
      %4188 = vmatprep.subr.bf16.mxu0 0
      %4189 = vmatpush2.bf16.msra.mxu0 %v3985
      %4190 = vmatprep.subr.bf16.mxu0 0
      %4191 = vmatpush2.bf16.msra.mxu0 %v3984
      %4192 = vmatprep.subr.bf16.mxu0 0
      %4193 = vmatpush2.bf16.msra.mxu0 %v3983
      %4194 = vmatprep.subr.bf16.mxu0 0
      %4195 = vmatpush2.bf16.msra.mxu0 %v3982
      %4196 = vmatprep.subr.bf16.mxu0 0
      %4197 = vmatpush2.bf16.msra.mxu0 %v3981
      %4198 = vmatprep.mubr.bf16.mxu0 %v3600
      %4199 = vmatmul.mubr.bf16.gmra.mxu0 %v3599
      %v4200 = vpop.f32.mrf.mxu0
      %v4201 = vadd.f32 %v4136, %v4200
      %v4202 = vpop.f32.mrf.mxu0
      %v4203 = vpop.f32.mrf.mxu0
      %v4204 = vadd.f32 %v4139, %v4203
      %v4205 = vpop.f32.mrf.mxu0
      %4206 = vmatprep.mubr.bf16.mxu0 %v3609
      %4207 = vmatmul.mubr.bf16.gmra.mxu0 %v3608
      %v4208 = vpop.f32.mrf.mxu0
      %v4209 = vadd.f32 %v4144, %v4208
      %v4210 = vpop.f32.mrf.mxu0
      %v4211 = vpop.f32.mrf.mxu0
      %v4212 = vadd.f32 %v4147, %v4211
      %v4213 = vpop.f32.mrf.mxu0
      %4214 = vmatprep.mubr.bf16.mxu0 %v3618
      %4215 = vmatmul.mubr.bf16.gmra.mxu0 %v3617
      %v4216 = vpop.f32.mrf.mxu0
      %v4217 = vadd.f32 %v4152, %v4216
      %v4218 = vpop.f32.mrf.mxu0
      %v4219 = vpop.f32.mrf.mxu0
      %v4220 = vadd.f32 %v4155, %v4219
      %v4221 = vpop.f32.mrf.mxu0
      %4222 = vmatprep.mubr.bf16.mxu0 %v3627
      %4223 = vmatmul.mubr.bf16.gmra.mxu0 %v3626
      %v4224 = vpop.f32.mrf.mxu0
      %v4225 = vadd.f32 %v4160, %v4224
      %v4226 = vpop.f32.mrf.mxu0
      %v4227 = vpop.f32.mrf.mxu0
      %v4228 = vadd.f32 %v4163, %v4227
      %v4229 = vpop.f32.mrf.mxu0
      %4230 = vdwg.mxu0
      %4231 = vmatprep.subr.bf16.mxu0 0
      %4232 = vmatpush1.bf16.msra.mxu0 %v3996
      %4233 = vmatprep.subr.bf16.mxu0 0
      %4234 = vmatpush1.bf16.msra.mxu0 %v3995
      %4235 = vmatprep.subr.bf16.mxu0 0
      %4236 = vmatpush1.bf16.msra.mxu0 %v3994
      %4237 = vmatprep.subr.bf16.mxu0 0
      %4238 = vmatpush1.bf16.msra.mxu0 %v3993
      %4239 = vmatprep.subr.bf16.mxu0 0
      %4240 = vmatpush1.bf16.msra.mxu0 %v3992
      %4241 = vmatprep.subr.bf16.mxu0 0
      %4242 = vmatpush1.bf16.msra.mxu0 %v3991
      %4243 = vmatprep.subr.bf16.mxu0 0
      %4244 = vmatpush1.bf16.msra.mxu0 %v3990
      %4245 = vmatprep.subr.bf16.mxu0 0
      %4246 = vmatpush1.bf16.msra.mxu0 %v3989
      %4247 = vmatprep.subr.bf16.mxu0 0
      %4248 = vmatpush2.bf16.msra.mxu0 %v4004
      %4249 = vmatprep.subr.bf16.mxu0 0
      %4250 = vmatpush2.bf16.msra.mxu0 %v4003
      %4251 = vmatprep.subr.bf16.mxu0 0
      %4252 = vmatpush2.bf16.msra.mxu0 %v4002
      %4253 = vmatprep.subr.bf16.mxu0 0
      %4254 = vmatpush2.bf16.msra.mxu0 %v4001
      %4255 = vmatprep.subr.bf16.mxu0 0
      %4256 = vmatpush2.bf16.msra.mxu0 %v4000
      %4257 = vmatprep.subr.bf16.mxu0 0
      %4258 = vmatpush2.bf16.msra.mxu0 %v3999
      %4259 = vmatprep.subr.bf16.mxu0 0
      %4260 = vmatpush2.bf16.msra.mxu0 %v3998
      %4261 = vmatprep.subr.bf16.mxu0 0
      %4262 = vmatpush2.bf16.msra.mxu0 %v3997
      %4263 = vmatprep.mubr.bf16.mxu0 %v3602
      %4264 = vmatmul.mubr.bf16.gmra.mxu0 %v3601
      %v4265 = vpop.f32.mrf.mxu0
      %v4266 = vadd.f32 %v4201, %v4265
      %v4267 = vpop.f32.mrf.mxu0
      %v4268 = vpop.f32.mrf.mxu0
      %v4269 = vadd.f32 %v4204, %v4268
      %v4270 = vpop.f32.mrf.mxu0
      %4271 = vmatprep.mubr.bf16.mxu0 %v3611
      %4272 = vmatmul.mubr.bf16.gmra.mxu0 %v3610
      %v4273 = vpop.f32.mrf.mxu0
      %v4274 = vadd.f32 %v4209, %v4273
      %v4275 = vpop.f32.mrf.mxu0
      %v4276 = vpop.f32.mrf.mxu0
      %v4277 = vadd.f32 %v4212, %v4276
      %v4278 = vpop.f32.mrf.mxu0
      %4279 = vmatprep.mubr.bf16.mxu0 %v3620
      %4280 = vmatmul.mubr.bf16.gmra.mxu0 %v3619
      %v4281 = vpop.f32.mrf.mxu0
      %v4282 = vadd.f32 %v4217, %v4281
      %v4283 = vpop.f32.mrf.mxu0
      %v4284 = vpop.f32.mrf.mxu0
      %v4285 = vadd.f32 %v4220, %v4284
      %v4286 = vpop.f32.mrf.mxu0
      %4287 = vmatprep.mubr.bf16.mxu0 %v3629
      %4288 = vmatmul.mubr.bf16.gmra.mxu0 %v3628
      %v4289 = vpop.f32.mrf.mxu0
      %v4290 = vadd.f32 %v4225, %v4289
      %v4291 = vpop.f32.mrf.mxu0
      %v4292 = vpop.f32.mrf.mxu0
      %v4293 = vadd.f32 %v4228, %v4292
      %v4294 = vpop.f32.mrf.mxu0
      %4295 = vdwg.mxu0
      %4296 = vmatprep.subr.bf16.mxu0 0
      %4297 = vmatpush1.bf16.msra.mxu0 %v4012
      %4298 = vmatprep.subr.bf16.mxu0 0
      %4299 = vmatpush1.bf16.msra.mxu0 %v4011
      %4300 = vmatprep.subr.bf16.mxu0 0
      %4301 = vmatpush1.bf16.msra.mxu0 %v4010
      %4302 = vmatprep.subr.bf16.mxu0 0
      %4303 = vmatpush1.bf16.msra.mxu0 %v4009
      %4304 = vmatprep.subr.bf16.mxu0 0
      %4305 = vmatpush1.bf16.msra.mxu0 %v4008
      %4306 = vmatprep.subr.bf16.mxu0 0
      %4307 = vmatpush1.bf16.msra.mxu0 %v4007
      %4308 = vmatprep.subr.bf16.mxu0 0
      %4309 = vmatpush1.bf16.msra.mxu0 %v4006
      %4310 = vmatprep.subr.bf16.mxu0 0
      %4311 = vmatpush1.bf16.msra.mxu0 %v4005
      %4312 = vmatprep.subr.bf16.mxu0 0
      %4313 = vmatpush2.bf16.msra.mxu0 %v4020
      %4314 = vmatprep.subr.bf16.mxu0 0
      %4315 = vmatpush2.bf16.msra.mxu0 %v4019
      %4316 = vmatprep.subr.bf16.mxu0 0
      %4317 = vmatpush2.bf16.msra.mxu0 %v4018
      %4318 = vmatprep.subr.bf16.mxu0 0
      %4319 = vmatpush2.bf16.msra.mxu0 %v4017
      %4320 = vmatprep.subr.bf16.mxu0 0
      %4321 = vmatpush2.bf16.msra.mxu0 %v4016
      %4322 = vmatprep.subr.bf16.mxu0 0
      %4323 = vmatpush2.bf16.msra.mxu0 %v4015
      %4324 = vmatprep.subr.bf16.mxu0 0
      %4325 = vmatpush2.bf16.msra.mxu0 %v4014
      %4326 = vmatprep.subr.bf16.mxu0 0
      %4327 = vmatpush2.bf16.msra.mxu0 %v4013
      %4328 = vmatprep.mubr.bf16.mxu0 %v3604
      %4329 = vmatmul.mubr.bf16.gmra.mxu0 %v3603
      %v4330 = vpop.f32.mrf.mxu0
      %v4331 = vadd.f32 %v4266, %v4330
      %v4332 = vpop.f32.mrf.mxu0
      %v4333 = vpop.f32.mrf.mxu0
      %v4334 = vadd.f32 %v4269, %v4333
      %v4335 = vpop.f32.mrf.mxu0
      %4336 = vmatprep.mubr.bf16.mxu0 %v3613
      %4337 = vmatmul.mubr.bf16.gmra.mxu0 %v3612
      %v4338 = vpop.f32.mrf.mxu0
      %v4339 = vadd.f32 %v4274, %v4338
      %v4340 = vpop.f32.mrf.mxu0
      %v4341 = vpop.f32.mrf.mxu0
      %v4342 = vadd.f32 %v4277, %v4341
      %v4343 = vpop.f32.mrf.mxu0
      %4344 = vmatprep.mubr.bf16.mxu0 %v3622
      %4345 = vmatmul.mubr.bf16.gmra.mxu0 %v3621
      %v4346 = vpop.f32.mrf.mxu0
      %v4347 = vadd.f32 %v4282, %v4346
      %v4348 = vpop.f32.mrf.mxu0
      %v4349 = vpop.f32.mrf.mxu0
      %v4350 = vadd.f32 %v4285, %v4349
      %v4351 = vpop.f32.mrf.mxu0
      %4352 = vmatprep.mubr.bf16.mxu0 %v3631
      %4353 = vmatmul.mubr.bf16.gmra.mxu0 %v3630
      %v4354 = vpop.f32.mrf.mxu0
      %v4355 = vadd.f32 %v4290, %v4354
      %v4356 = vpop.f32.mrf.mxu0
      %v4357 = vpop.f32.mrf.mxu0
      %v4358 = vadd.f32 %v4293, %v4357
      %v4359 = vpop.f32.mrf.mxu0
      %4360 = vdwg.mxu0
      %4361 = vmatprep.subr.bf16.mxu0 0
      %4362 = vmatpush1.bf16.msra.mxu0 %v4028
      %4363 = vmatprep.subr.bf16.mxu0 0
      %4364 = vmatpush1.bf16.msra.mxu0 %v4027
      %4365 = vmatprep.subr.bf16.mxu0 0
      %4366 = vmatpush1.bf16.msra.mxu0 %v4026
      %4367 = vmatprep.subr.bf16.mxu0 0
      %4368 = vmatpush1.bf16.msra.mxu0 %v4025
      %4369 = vmatprep.subr.bf16.mxu0 0
      %4370 = vmatpush1.bf16.msra.mxu0 %v4024
      %4371 = vmatprep.subr.bf16.mxu0 0
      %4372 = vmatpush1.bf16.msra.mxu0 %v4023
      %4373 = vmatprep.subr.bf16.mxu0 0
      %4374 = vmatpush1.bf16.msra.mxu0 %v4022
      %4375 = vmatprep.subr.bf16.mxu0 0
      %4376 = vmatpush1.bf16.msra.mxu0 %v4021
      %4377 = vmatprep.subr.bf16.mxu0 0
      %4378 = vmatpush2.bf16.msra.mxu0 0
      %4379 = vmatprep.subr.bf16.mxu0 0
      %4380 = vmatpush2.bf16.msra.mxu0 0
      %4381 = vmatprep.subr.bf16.mxu0 0
      %4382 = vmatpush2.bf16.msra.mxu0 0
      %4383 = vmatprep.subr.bf16.mxu0 0
      %4384 = vmatpush2.bf16.msra.mxu0 0
      %4385 = vmatprep.subr.bf16.mxu0 0
      %4386 = vmatpush2.bf16.msra.mxu0 0
      %4387 = vmatprep.subr.bf16.mxu0 0
      %4388 = vmatpush2.bf16.msra.mxu0 0
      %4389 = vmatprep.subr.bf16.mxu0 0
      %4390 = vmatpush2.bf16.msra.mxu0 0
      %4391 = vmatprep.subr.bf16.mxu0 0
      %4392 = vmatpush2.bf16.msra.mxu0 0
      %4393 = vmatprep.mubr.bf16.mxu0 0
      %4394 = vmatmul.mubr.bf16.gmra.mxu0 %v3605
      %v4395 = vpop.f32.mrf.mxu0
      %v4396 = vadd.f32 %v4331, %v4395
      %v4397 = vpop.f32.mrf.mxu0
      %v4398 = vpop.f32.mrf.mxu0
      %v4399 = vadd.f32 %v4334, %v4398
      %v4400 = vpop.f32.mrf.mxu0
      %4401 = vmatprep.mubr.bf16.mxu0 0
      %4402 = vmatmul.mubr.bf16.gmra.mxu0 %v3614
      %v4403 = vpop.f32.mrf.mxu0
      %v4404 = vadd.f32 %v4339, %v4403
      %v4405 = vpop.f32.mrf.mxu0
      %v4406 = vpop.f32.mrf.mxu0
      %v4407 = vadd.f32 %v4342, %v4406
      %v4408 = vpop.f32.mrf.mxu0
      %4409 = vmatprep.mubr.bf16.mxu0 0
      %4410 = vmatmul.mubr.bf16.gmra.mxu0 %v3623
      %v4411 = vpop.f32.mrf.mxu0
      %v4412 = vadd.f32 %v4347, %v4411
      %v4413 = vpop.f32.mrf.mxu0
      %v4414 = vpop.f32.mrf.mxu0
      %v4415 = vadd.f32 %v4350, %v4414
      %v4416 = vpop.f32.mrf.mxu0
      %4417 = vmatprep.mubr.bf16.mxu0 0
      %4418 = vmatmul.mubr.bf16.gmra.mxu0 %v3632
      %v4419 = vpop.f32.mrf.mxu0
      %v4420 = vadd.f32 %v4355, %v4419
      %v4421 = vpop.f32.mrf.mxu0
      %v4422 = vpop.f32.mrf.mxu0
      %v4423 = vadd.f32 %v4358, %v4422
      %v4424 = vpop.f32.mrf.mxu0
      %4425 = vdwg.mxu0
      %v4426 = vmax.f32 %v4396, 0.0
      %v4427 = vmax.f32 %v4399, 0.0
      %v4428 = vmax.f32 %v4404, 0.0
      %v4429 = vmax.f32 %v4407, 0.0
      %v4430 = vmax.f32 %v4412, 0.0
      %v4431 = vmax.f32 %v4415, 0.0
      %v4432 = vmax.f32 %v4420, 0.0
      %v4433 = vmax.f32 %v4423, 0.0
      %v4434 = vld [vmem:[#allocation4] sm:$0xff]
      %v4435 = vld [vmem:[#allocation4 + $0x8] sm:$0xff]
      %v4436 = vld [vmem:[#allocation4 + $0x10] sm:$0xff]
      %v4437 = vld [vmem:[#allocation4 + $0x18] sm:$0xff]
      %v4438 = vld [vmem:[#allocation4 + $0x20] sm:$0xff]
      %v4439 = vld [vmem:[#allocation4 + $0x28] sm:$0xff]
      %v4440 = vld [vmem:[#allocation4 + $0x30] sm:$0xff]
      %v4441 = vld [vmem:[#allocation4 + $0x38] sm:$0xff]
      %v4442 = vadd.f32 %v4426, %v4434
      %v4443 = vadd.f32 %v4427, %v4435
      %v4444 = vadd.f32 %v4428, %v4436
      %v4445 = vadd.f32 %v4429, %v4437
      %v4446 = vadd.f32 %v4430, %v4438
      %v4447 = vadd.f32 %v4431, %v4439
      %v4448 = vadd.f32 %v4432, %v4440
      %v4449 = vadd.f32 %v4433, %v4441
      %v4450 = vmax.f32 %v4442, 0.0
      %v4451 = vmax.f32 %v4443, 0.0
      %v4452 = vmax.f32 %v4444, 0.0
      %v4453 = vmax.f32 %v4445, 0.0
      %v4454 = vmax.f32 %v4446, 0.0
      %v4455 = vmax.f32 %v4447, 0.0
      %v4456 = vmax.f32 %v4448, 0.0
      %v4457 = vmax.f32 %v4449, 0.0
      %4458 = vst [vmem:[%s224] sm:$0xff] %v4450
      %4459 = vst [vmem:[%s224 + $0x8] sm:$0xff] %v4451
      %4460 = vst [vmem:[%s224 + $0x10] sm:$0xff] %v4452
      %4461 = vst [vmem:[%s224 + $0x18] sm:$0xff] %v4453
      %4462 = vst [vmem:[%s224 + $0x20] sm:$0xff] %v4454
      %4463 = vst [vmem:[%s224 + $0x28] sm:$0xff] %v4455
      %4464 = vst [vmem:[%s224 + $0x30] sm:$0xff] %v4456
      %4465 = vst [vmem:[%s224 + $0x38] sm:$0xff] %v4457
      %p4466 = scmp.lt.s32.totalorder %s16, 1
      %s4467 = scalar_select %p4466, %s16, 1
      %s4468 = smul.addr %s4467, 8
      %s4469 = smul.addr %s4468, 8
      %s4470 = scalar_lea.vmem %s5, %s4469
      // Predicated region
      $region41: #{unet_left_with_res_forward.1} parent=39 // pred_check
        %p4471 = pneg %p144
      $region42: #{unet_left_with_res_forward.1} parent=39 // pred_check_branch
        %4473 = sbr.rel (%p4471) target = $region44
      $region43: #{unet_left_with_res_forward.1} parent=39 // pred_region
        _
      $region44: #{unet_left_with_res_forward.1} parent=39 // pred_fallthru
        _
    $region40: #{unet_left_with_res_forward.1} parent=5 // pred_fallthru
      _
    %p4474 = scmp.le.s32.totalorder 2, %s11
    // Predicated region
    $region45: #{unet_left_with_res_forward.1} parent=5 // pred_check
      %p4475 = pneg %p4474
    $region46: #{unet_left_with_res_forward.1} parent=5 // pred_check_branch
      %4477 = sbr.rel (%p4475) target = $region48
    $region47: #{unet_left_with_res_forward.1} parent=5 // pred_region
      %s4478 = ssub.s32 %s11, 2
      // Predicated region
      $region49: #{unet_left_with_res_forward.1} parent=47 // pred_check
        %p4479 = pneg %p150
      $region50: #{unet_left_with_res_forward.1} parent=47 // pred_check_branch
        %4481 = sbr.rel (%p4479) target = $region52
      $region51: #{unet_left_with_res_forward.1} parent=47 // pred_region
        %p4482 = scmp.lt.s32.totalorder %s17, 1
        %s4483 = scalar_select %p4482, %s17, 1
        %s4484 = smul.addr %s4483, 8
        %s4485 = smul.addr %s4484, 8
        %s4486 = scalar_lea.vmem %s5, %s4485
      $region52: #{unet_left_with_res_forward.1} parent=47 // pred_fallthru
        _
    $region48: #{unet_left_with_res_forward.1} parent=5 // pred_fallthru
      _
  $region6: #{unet_left_with_res_forward.1} parent=0 // loop_footer
    %s15 = sadd.s32 1, %s11
  $region7: #{unet_left_with_res_forward.1} parent=0 // loop_footer_branch
    %10 = sbr.rel target = $region3
  $region8: #{unet_left_with_res_forward.1} parent=0 // loop_exit
    _

</llo_original>
